<compile_context>
chip_gen: v6e
topology: v6e:2x2x1
jax: 0.10.0
libtpu: 0.0.40
codegen_flags: <defaults>
</compile_context>

<pallas_src>
import math

import jax
import jax.numpy as jnp
from jax.experimental import pallas as pl
from jax.experimental.pallas import tpu as pltpu

EPS = 1e-5
HID = 128   # hidden width of all dense layers
BOT = 8     # bottleneck width


def _autoencoder_kernel(x_ref, w_ref, v_ref, o_ref):
  """Full encode/decode forward for GP mini-batch groups in one grid step.

  x_ref: (GP, B, D) bf16     w_ref: (10, 128, 128) bf16
  v_ref: (4, 128) f32        o_ref: (GP, B, 128) f32
  """
  GP, B, D = x_ref.shape
  M = GP * B
  inv_b = 1.0 / B

  gamma = v_ref[0:1, :]   # batch1 weight (reused for every BN, as in the module)
  beta = v_ref[1:2, :]    # batch1 bias
  bb = v_ref[2:3, :]      # bottleneck bias (zero-padded past BOT)
  bo = v_ref[3:4, :]      # output bias (zero-padded past D)

  def matmul(h_bf, i):
    # bf16 MXU matmul, f32 accumulation.  h_bf is already bf16.
    k = h_bf.shape[1]
    w = w_ref[i]
    if k != HID:
      w = w[:k, :]        # first layer: contract over the natural feature dim
    return jnp.dot(h_bf, w, preferred_element_type=jnp.float32)

  def bn_relu(h):
    # Training-mode BatchNorm1d per group: single-pass batch stats in f32,
    # mean folded into the affine, ReLU, then one cast to bf16 for the next MXU.
    hg = h.reshape(GP, B, HID)
    mu = jnp.sum(hg, axis=1, keepdims=True) * inv_b
    ex2 = jnp.sum(hg * hg, axis=1, keepdims=True) * inv_b
    var = jnp.maximum(ex2 - mu * mu, 0.0)             # clamp cancellation noise
    scale = gamma * jax.lax.rsqrt(var + EPS)          # (GP, 1, HID)
    shift = beta - mu * scale
    out = jnp.maximum(hg * scale + shift, 0.0)
    return out.reshape(M, HID).astype(jnp.bfloat16)

  h = x_ref[...].reshape(M, D)                        # bf16 activations

  # ---- encode ----  (dense1..4 biases dropped: exactly cancelled by BN mean-sub)
  h = bn_relu(matmul(h, 0))
  h = bn_relu(matmul(h, 1))
  h = bn_relu(matmul(h, 2))
  h = bn_relu(matmul(h, 3))
  # bottleneck: padded lanes stay exactly 0 (zero weight cols + zero bias + relu)
  z = jnp.maximum(matmul(h, 4) + bb, 0.0).astype(jnp.bfloat16)

  # ---- decode ----  (dense5..8 biases dropped likewise)
  h = bn_relu(matmul(z, 5))
  h = bn_relu(matmul(h, 6))
  h = bn_relu(matmul(h, 7))
  h = bn_relu(matmul(h, 8))
  out = jnp.maximum(matmul(h, 9) + bo, 0.0)           # output layer, ReLU, no BN
  o_ref[...] = out.reshape(GP, B, HID)


def make_params(key, input_size, input_num_chanels):
  """PyTorch-equivalent parameters (nn.Linear default init; BN weight=1, bias=0)."""
  d = input_size * input_num_chanels
  layers = [
      ("w1", "b1", d, HID), ("w2", "b2", HID, HID), ("w3", "b3", HID, HID),
      ("w4", "b4", HID, HID), ("wb", "bb", HID, BOT), ("w5", "b5", BOT, HID),
      ("w6", "b6", HID, HID), ("w7", "b7", HID, HID), ("w8", "b8", HID, HID),
      ("wo", "bo", HID, d),
  ]
  params = {
      "g1": jnp.ones((1, HID), jnp.float32),
      "be1": jnp.zeros((1, HID), jnp.float32),
  }
  keys = jax.random.split(key, 2 * len(layers))
  for idx, (wn, bn, fi, fo) in enumerate(layers):
    bound = 1.0 / math.sqrt(fi)
    params[wn] = jax.random.uniform(
        keys[2 * idx], (fi, fo), jnp.float32, minval=-bound, maxval=bound)
    params[bn] = jax.random.uniform(
        keys[2 * idx + 1], (1, fo), jnp.float32, minval=-bound, maxval=bound)
  return params


def pack_params(params, d):
  """Pack all weights into one bf16 slab and all per-feature vectors into one f32 slab."""
  assert d <= HID, "feature dim must fit one 128-lane tile"
  # TODO(synk): tile w1 / wo over the feature dimension when input_size*channels > 128.

  def pad_rows(w):   # (r, HID) -> (HID, HID), extra rows zero
    return jnp.zeros((HID, HID), jnp.float32).at[: w.shape[0], :].set(w)

  def pad_cols(w):   # (HID, c) -> (HID, HID), extra cols zero
    return jnp.zeros((HID, HID), jnp.float32).at[:, : w.shape[1]].set(w)

  w_stack = jnp.stack([
      pad_rows(params["w1"]),           # 0: dense1 (rows d..127 zero; kernel only reads :d)
      params["w2"], params["w3"], params["w4"],
      pad_cols(params["wb"]),           # 4: bottleneck (cols 8..127 zero)
      pad_rows(params["w5"]),           # 5: dense5 (rows 8..127 zero)
      params["w6"], params["w7"], params["w8"],
      pad_cols(params["wo"]),           # 9: output (cols d..127 zero)
  ]).astype(jnp.bfloat16)

  def pad_vec(v):
    return jnp.zeros((HID,), jnp.float32).at[: v.shape[-1]].set(v.reshape(-1))

  vec_stack = jnp.stack([
      pad_vec(params["g1"]), pad_vec(params["be1"]),
      pad_vec(params["bb"]), pad_vec(params["bo"]),
  ])  # (4, HID) f32
  return w_stack, vec_stack


@jax.jit
def autoencoder_forward(x, w_stack, vec_stack):
  """x: (G, B, C, L) — G independent mini-batches; BN statistics per mini-batch."""
  G, B, C, L = x.shape
  d = C * L
  assert d <= HID, "feature dim must fit one 128-lane tile"
  assert B % 16 == 0, "batch rows must be sublane-aligned for bf16/f32 tiling"

  # Two groups per kernel step when possible: M = 2*B fills v6e/v7x MXU rows and
  # lets one group's BN overlap the other group's matmul on the scheduler.
  gp = 2 if G % 2 == 0 else 1

  if d % 16 == 0:
    # Natural feature width straight into the kernel (no wrapper pad op).
    x_in = x.reshape(G, B, d).astype(jnp.bfloat16)
    dk = d
  else:
    # Fallback: lane-pad so the bf16 weight slice stays sublane-aligned.
    x_in = jnp.zeros((G, B, HID), jnp.bfloat16).at[:, :, :d].set(
        x.reshape(G, B, d).astype(jnp.bfloat16))
    dk = HID

  out_pad = pl.pallas_call(
      _autoencoder_kernel,
      out_shape=jax.ShapeDtypeStruct((G, B, HID), jnp.float32),
      grid=(G // gp,),
      in_specs=[
          pl.BlockSpec((gp, B, dk), lambda g: (g, 0, 0)),
          # Constant index_map: the 320 KiB weight slab is not re-fetched per step.
          pl.BlockSpec((10, HID, HID), lambda g: (0, 0, 0)),
          pl.BlockSpec((4, HID), lambda g: (0, 0)),
      ],
      out_specs=pl.BlockSpec((gp, B, HID), lambda g: (g, 0, 0)),
      compiler_params=pltpu.CompilerParams(
          dimension_semantics=("parallel",)),
  )(x_in, w_stack, vec_stack)

  return out_pad[:, :, :d].reshape(x.shape)


def reference_forward(x, params):
  """Plain-JAX f32 reference mirroring the PyTorch module (with all biases)."""
  G, B = x.shape[0], x.shape[1]
  h = x.reshape(G, B, -1).astype(jnp.float32)

  def bn_relu(h):
    mu = jnp.mean(h, axis=1, keepdims=True)
    var = jnp.mean((h - mu) ** 2, axis=1, keepdims=True)
    return jnp.maximum(
        (h - mu) / jnp.sqrt(var + EPS) * params["g1"] + params["be1"], 0.0)

  h = bn_relu(h @ params["w1"] + params["b1"])
  h = bn_relu(h @ params["w2"] + params["b2"])
  h = bn_relu(h @ params["w3"] + params["b3"])
  h = bn_relu(h @ params["w4"] + params["b4"])
  z = jnp.maximum(h @ params["wb"] + params["bb"], 0.0)
  h = bn_relu(z @ params["w5"] + params["b5"])
  h = bn_relu(h @ params["w6"] + params["b6"])
  h = bn_relu(h @ params["w7"] + params["b7"])
  h = bn_relu(h @ params["w8"] + params["b8"])
  out = jnp.maximum(h @ params["wo"] + params["bo"], 0.0)
  return out.reshape(x.shape)


if __name__ == "__main__":
  # 2 independent mini-batches of 128 samples each, 4 channels x 16 samples (D = 64).
  G, B, C, L = 2, 128, 4, 16
  input_size, input_num_chanels = L, C

  key = jax.random.PRNGKey(0)
  kx, kp = jax.random.split(key)
  x = jax.random.normal(kx, (G, B, C, L), jnp.float32)
  params = make_params(kp, input_size, input_num_chanels)
  w_stack, vec_stack = pack_params(params, input_size * input_num_chanels)

  out = autoencoder_forward(x, w_stack, vec_stack)
  out = jax.block_until_ready(out)

  ref = reference_forward(x, params)
  assert out.shape == x.shape
  # bf16 weights/activations across 10 layers vs f32 reference -> loose tolerance.
  # TODO(synk): add an f32-weight sanity path with tight per-layer tolerances in tests.
  assert jnp.allclose(out, ref, atol=1e-1, rtol=1e-1), (
      "mismatch vs reference, max|delta|=%g" % float(jnp.max(jnp.abs(out - ref))))

  print("KERNEL_OK")
</pallas_src>

<mosaic_0001>
module attributes {stable_mosaic.version = 11 : i64} {
  func.func @_autoencoder_kernel(%arg0: i32, %arg1: memref<2x128x64xbf16, #tpu.memory_space<vmem>>, %arg2: memref<10x128x128xbf16, #tpu.memory_space<vmem>>, %arg3: memref<4x128xf32, #tpu.memory_space<vmem>>, %arg4: memref<2x128x128xf32, #tpu.memory_space<vmem>>) attributes {dimension_semantics = [#tpu.dimension_semantics<parallel>], iteration_bounds = array<i64: 1>, scalar_prefetch = 0 : i64, scratch_operands = 0 : i64, tpu.core_type = #tpu.core_type<tc>, window_params = [{transform_indices = @transform_0, window_bounds = array<i64: 2, 128, 64>}, {pipeline_mode = #tpu.pipeline_mode<synchronous>, transform_indices = @transform_1, window_bounds = array<i64: 10, 128, 128>}, {pipeline_mode = #tpu.pipeline_mode<synchronous>, transform_indices = @transform_2, window_bounds = array<i64: 4, 128>}, {transform_indices = @transform_3, window_bounds = array<i64: 2, 128, 128>}]} {
    %c0 = arith.constant 0 : index
    %c0_0 = arith.constant 0 : index
    %0 = vector.load %arg3[%c0, %c0_0] : memref<4x128xf32, #tpu.memory_space<vmem>>, vector<1x128xf32>
    %c1 = arith.constant 1 : index
    %c0_1 = arith.constant 0 : index
    %1 = vector.load %arg3[%c1, %c0_1] : memref<4x128xf32, #tpu.memory_space<vmem>>, vector<1x128xf32>
    %c2 = arith.constant 2 : index
    %c0_2 = arith.constant 0 : index
    %2 = vector.load %arg3[%c2, %c0_2] : memref<4x128xf32, #tpu.memory_space<vmem>>, vector<1x128xf32>
    %c3 = arith.constant 3 : index
    %c0_3 = arith.constant 0 : index
    %3 = vector.load %arg3[%c3, %c0_3] : memref<4x128xf32, #tpu.memory_space<vmem>>, vector<1x128xf32>
    %c0_4 = arith.constant 0 : index
    %c0_5 = arith.constant 0 : index
    %c0_6 = arith.constant 0 : index
    %4 = vector.load %arg1[%c0_4, %c0_5, %c0_6] : memref<2x128x64xbf16, #tpu.memory_space<vmem>>, vector<2x128x64xbf16>
    %5 = vector.shape_cast %4 : vector<2x128x64xbf16> to vector<256x64xbf16>
    %c0_7 = arith.constant 0 : index
    %c0_8 = arith.constant 0 : index
    %c0_9 = arith.constant 0 : index
    %6 = vector.load %arg2[%c0_7, %c0_8, %c0_9] : memref<10x128x128xbf16, #tpu.memory_space<vmem>>, vector<1x128x128xbf16>
    %7 = vector.shape_cast %6 : vector<1x128x128xbf16> to vector<128x128xbf16>
    %8 = vector.extract_strided_slice %7 {offsets = [0, 0], sizes = [64, 128], strides = [1, 1]} : vector<128x128xbf16> to vector<64x128xbf16>
    %cst = arith.constant dense<0.000000e+00> : vector<256x128xf32>
    %9 = tpu.matmul %5, %8, %cst {dimension_numbers = #tpu.dot_dimension_numbers<[1], [0], [0], [1], [0, 0, 1, 1], [], []>} : vector<256x64xbf16>, vector<64x128xbf16>, vector<256x128xf32> -> vector<256x128xf32>
    %10 = vector.shape_cast %9 : vector<256x128xf32> to vector<2x128x128xf32>
    %cst_10 = arith.constant dense<0.000000e+00> : vector<2x128xf32>
    %11 = vector.multi_reduction <add>, %10, %cst_10 [1] : vector<2x128x128xf32> to vector<2x128xf32>
    %12 = vector.shape_cast %11 : vector<2x128xf32> to vector<2x1x128xf32>
    %cst_11 = arith.constant 7.812500e-03 : f32
    %13 = vector.broadcast %cst_11 : f32 to vector<2x1x128xf32>
    %14 = arith.mulf %12, %13 : vector<2x1x128xf32>
    %15 = arith.mulf %10, %10 : vector<2x128x128xf32>
    %cst_12 = arith.constant dense<0.000000e+00> : vector<2x128xf32>
    %16 = vector.multi_reduction <add>, %15, %cst_12 [1] : vector<2x128x128xf32> to vector<2x128xf32>
    %17 = vector.shape_cast %16 : vector<2x128xf32> to vector<2x1x128xf32>
    %cst_13 = arith.constant 7.812500e-03 : f32
    %18 = vector.broadcast %cst_13 : f32 to vector<2x1x128xf32>
    %19 = arith.mulf %17, %18 : vector<2x1x128xf32>
    %20 = arith.mulf %14, %14 : vector<2x1x128xf32>
    %21 = arith.subf %19, %20 : vector<2x1x128xf32>
    %cst_14 = arith.constant 0.000000e+00 : f32
    %22 = vector.broadcast %cst_14 : f32 to vector<2x1x128xf32>
    %23 = arith.maximumf %21, %22 : vector<2x1x128xf32>
    %cst_15 = arith.constant 9.99999974E-6 : f32
    %24 = vector.broadcast %cst_15 : f32 to vector<2x1x128xf32>
    %25 = arith.addf %23, %24 : vector<2x1x128xf32>
    %26 = math.rsqrt %25 : vector<2x1x128xf32>
    %27 = vector.shape_cast %0 : vector<1x128xf32> to vector<1x1x128xf32>
    %28 = vector.broadcast %27 : vector<1x1x128xf32> to vector<2x1x128xf32>
    %29 = arith.mulf %28, %26 : vector<2x1x128xf32>
    %30 = arith.mulf %14, %29 : vector<2x1x128xf32>
    %31 = vector.shape_cast %1 : vector<1x128xf32> to vector<1x1x128xf32>
    %32 = vector.broadcast %31 : vector<1x1x128xf32> to vector<2x1x128xf32>
    %33 = arith.subf %32, %30 : vector<2x1x128xf32>
    %34 = vector.broadcast %29 : vector<2x1x128xf32> to vector<2x128x128xf32>
    %35 = arith.mulf %10, %34 : vector<2x128x128xf32>
    %36 = vector.broadcast %33 : vector<2x1x128xf32> to vector<2x128x128xf32>
    %37 = arith.addf %35, %36 : vector<2x128x128xf32>
    %cst_16 = arith.constant 0.000000e+00 : f32
    %38 = vector.broadcast %cst_16 : f32 to vector<2x128x128xf32>
    %39 = arith.maximumf %37, %38 : vector<2x128x128xf32>
    %40 = vector.shape_cast %39 : vector<2x128x128xf32> to vector<256x128xf32>
    %41 = arith.truncf %40 : vector<256x128xf32> to vector<256x128xbf16>
    %c1_17 = arith.constant 1 : index
    %c0_18 = arith.constant 0 : index
    %c0_19 = arith.constant 0 : index
    %42 = vector.load %arg2[%c1_17, %c0_18, %c0_19] : memref<10x128x128xbf16, #tpu.memory_space<vmem>>, vector<1x128x128xbf16>
    %43 = vector.shape_cast %42 : vector<1x128x128xbf16> to vector<128x128xbf16>
    %cst_20 = arith.constant dense<0.000000e+00> : vector<256x128xf32>
    %44 = tpu.matmul %41, %43, %cst_20 {dimension_numbers = #tpu.dot_dimension_numbers<[1], [0], [0], [1], [0, 0, 1, 1], [], []>} : vector<256x128xbf16>, vector<128x128xbf16>, vector<256x128xf32> -> vector<256x128xf32>
    %45 = vector.shape_cast %44 : vector<256x128xf32> to vector<2x128x128xf32>
    %cst_21 = arith.constant dense<0.000000e+00> : vector<2x128xf32>
    %46 = vector.multi_reduction <add>, %45, %cst_21 [1] : vector<2x128x128xf32> to vector<2x128xf32>
    %47 = vector.shape_cast %46 : vector<2x128xf32> to vector<2x1x128xf32>
    %cst_22 = arith.constant 7.812500e-03 : f32
    %48 = vector.broadcast %cst_22 : f32 to vector<2x1x128xf32>
    %49 = arith.mulf %47, %48 : vector<2x1x128xf32>
    %50 = arith.mulf %45, %45 : vector<2x128x128xf32>
    %cst_23 = arith.constant dense<0.000000e+00> : vector<2x128xf32>
    %51 = vector.multi_reduction <add>, %50, %cst_23 [1] : vector<2x128x128xf32> to vector<2x128xf32>
    %52 = vector.shape_cast %51 : vector<2x128xf32> to vector<2x1x128xf32>
    %cst_24 = arith.constant 7.812500e-03 : f32
    %53 = vector.broadcast %cst_24 : f32 to vector<2x1x128xf32>
    %54 = arith.mulf %52, %53 : vector<2x1x128xf32>
    %55 = arith.mulf %49, %49 : vector<2x1x128xf32>
    %56 = arith.subf %54, %55 : vector<2x1x128xf32>
    %cst_25 = arith.constant 0.000000e+00 : f32
    %57 = vector.broadcast %cst_25 : f32 to vector<2x1x128xf32>
    %58 = arith.maximumf %56, %57 : vector<2x1x128xf32>
    %cst_26 = arith.constant 9.99999974E-6 : f32
    %59 = vector.broadcast %cst_26 : f32 to vector<2x1x128xf32>
    %60 = arith.addf %58, %59 : vector<2x1x128xf32>
    %61 = math.rsqrt %60 : vector<2x1x128xf32>
    %62 = vector.shape_cast %0 : vector<1x128xf32> to vector<1x1x128xf32>
    %63 = vector.broadcast %62 : vector<1x1x128xf32> to vector<2x1x128xf32>
    %64 = arith.mulf %63, %61 : vector<2x1x128xf32>
    %65 = arith.mulf %49, %64 : vector<2x1x128xf32>
    %66 = vector.shape_cast %1 : vector<1x128xf32> to vector<1x1x128xf32>
    %67 = vector.broadcast %66 : vector<1x1x128xf32> to vector<2x1x128xf32>
    %68 = arith.subf %67, %65 : vector<2x1x128xf32>
    %69 = vector.broadcast %64 : vector<2x1x128xf32> to vector<2x128x128xf32>
    %70 = arith.mulf %45, %69 : vector<2x128x128xf32>
    %71 = vector.broadcast %68 : vector<2x1x128xf32> to vector<2x128x128xf32>
    %72 = arith.addf %70, %71 : vector<2x128x128xf32>
    %cst_27 = arith.constant 0.000000e+00 : f32
    %73 = vector.broadcast %cst_27 : f32 to vector<2x128x128xf32>
    %74 = arith.maximumf %72, %73 : vector<2x128x128xf32>
    %75 = vector.shape_cast %74 : vector<2x128x128xf32> to vector<256x128xf32>
    %76 = arith.truncf %75 : vector<256x128xf32> to vector<256x128xbf16>
    %c2_28 = arith.constant 2 : index
    %c0_29 = arith.constant 0 : index
    %c0_30 = arith.constant 0 : index
    %77 = vector.load %arg2[%c2_28, %c0_29, %c0_30] : memref<10x128x128xbf16, #tpu.memory_space<vmem>>, vector<1x128x128xbf16>
    %78 = vector.shape_cast %77 : vector<1x128x128xbf16> to vector<128x128xbf16>
    %cst_31 = arith.constant dense<0.000000e+00> : vector<256x128xf32>
    %79 = tpu.matmul %76, %78, %cst_31 {dimension_numbers = #tpu.dot_dimension_numbers<[1], [0], [0], [1], [0, 0, 1, 1], [], []>} : vector<256x128xbf16>, vector<128x128xbf16>, vector<256x128xf32> -> vector<256x128xf32>
    %80 = vector.shape_cast %79 : vector<256x128xf32> to vector<2x128x128xf32>
    %cst_32 = arith.constant dense<0.000000e+00> : vector<2x128xf32>
    %81 = vector.multi_reduction <add>, %80, %cst_32 [1] : vector<2x128x128xf32> to vector<2x128xf32>
    %82 = vector.shape_cast %81 : vector<2x128xf32> to vector<2x1x128xf32>
    %cst_33 = arith.constant 7.812500e-03 : f32
    %83 = vector.broadcast %cst_33 : f32 to vector<2x1x128xf32>
    %84 = arith.mulf %82, %83 : vector<2x1x128xf32>
    %85 = arith.mulf %80, %80 : vector<2x128x128xf32>
    %cst_34 = arith.constant dense<0.000000e+00> : vector<2x128xf32>
    %86 = vector.multi_reduction <add>, %85, %cst_34 [1] : vector<2x128x128xf32> to vector<2x128xf32>
    %87 = vector.shape_cast %86 : vector<2x128xf32> to vector<2x1x128xf32>
    %cst_35 = arith.constant 7.812500e-03 : f32
    %88 = vector.broadcast %cst_35 : f32 to vector<2x1x128xf32>
    %89 = arith.mulf %87, %88 : vector<2x1x128xf32>
    %90 = arith.mulf %84, %84 : vector<2x1x128xf32>
    %91 = arith.subf %89, %90 : vector<2x1x128xf32>
    %cst_36 = arith.constant 0.000000e+00 : f32
    %92 = vector.broadcast %cst_36 : f32 to vector<2x1x128xf32>
    %93 = arith.maximumf %91, %92 : vector<2x1x128xf32>
    %cst_37 = arith.constant 9.99999974E-6 : f32
    %94 = vector.broadcast %cst_37 : f32 to vector<2x1x128xf32>
    %95 = arith.addf %93, %94 : vector<2x1x128xf32>
    %96 = math.rsqrt %95 : vector<2x1x128xf32>
    %97 = vector.shape_cast %0 : vector<1x128xf32> to vector<1x1x128xf32>
    %98 = vector.broadcast %97 : vector<1x1x128xf32> to vector<2x1x128xf32>
    %99 = arith.mulf %98, %96 : vector<2x1x128xf32>
    %100 = arith.mulf %84, %99 : vector<2x1x128xf32>
    %101 = vector.shape_cast %1 : vector<1x128xf32> to vector<1x1x128xf32>
    %102 = vector.broadcast %101 : vector<1x1x128xf32> to vector<2x1x128xf32>
    %103 = arith.subf %102, %100 : vector<2x1x128xf32>
    %104 = vector.broadcast %99 : vector<2x1x128xf32> to vector<2x128x128xf32>
    %105 = arith.mulf %80, %104 : vector<2x128x128xf32>
    %106 = vector.broadcast %103 : vector<2x1x128xf32> to vector<2x128x128xf32>
    %107 = arith.addf %105, %106 : vector<2x128x128xf32>
    %cst_38 = arith.constant 0.000000e+00 : f32
    %108 = vector.broadcast %cst_38 : f32 to vector<2x128x128xf32>
    %109 = arith.maximumf %107, %108 : vector<2x128x128xf32>
    %110 = vector.shape_cast %109 : vector<2x128x128xf32> to vector<256x128xf32>
    %111 = arith.truncf %110 : vector<256x128xf32> to vector<256x128xbf16>
    %c3_39 = arith.constant 3 : index
    %c0_40 = arith.constant 0 : index
    %c0_41 = arith.constant 0 : index
    %112 = vector.load %arg2[%c3_39, %c0_40, %c0_41] : memref<10x128x128xbf16, #tpu.memory_space<vmem>>, vector<1x128x128xbf16>
    %113 = vector.shape_cast %112 : vector<1x128x128xbf16> to vector<128x128xbf16>
    %cst_42 = arith.constant dense<0.000000e+00> : vector<256x128xf32>
    %114 = tpu.matmul %111, %113, %cst_42 {dimension_numbers = #tpu.dot_dimension_numbers<[1], [0], [0], [1], [0, 0, 1, 1], [], []>} : vector<256x128xbf16>, vector<128x128xbf16>, vector<256x128xf32> -> vector<256x128xf32>
    %115 = vector.shape_cast %114 : vector<256x128xf32> to vector<2x128x128xf32>
    %cst_43 = arith.constant dense<0.000000e+00> : vector<2x128xf32>
    %116 = vector.multi_reduction <add>, %115, %cst_43 [1] : vector<2x128x128xf32> to vector<2x128xf32>
    %117 = vector.shape_cast %116 : vector<2x128xf32> to vector<2x1x128xf32>
    %cst_44 = arith.constant 7.812500e-03 : f32
    %118 = vector.broadcast %cst_44 : f32 to vector<2x1x128xf32>
    %119 = arith.mulf %117, %118 : vector<2x1x128xf32>
    %120 = arith.mulf %115, %115 : vector<2x128x128xf32>
    %cst_45 = arith.constant dense<0.000000e+00> : vector<2x128xf32>
    %121 = vector.multi_reduction <add>, %120, %cst_45 [1] : vector<2x128x128xf32> to vector<2x128xf32>
    %122 = vector.shape_cast %121 : vector<2x128xf32> to vector<2x1x128xf32>
    %cst_46 = arith.constant 7.812500e-03 : f32
    %123 = vector.broadcast %cst_46 : f32 to vector<2x1x128xf32>
    %124 = arith.mulf %122, %123 : vector<2x1x128xf32>
    %125 = arith.mulf %119, %119 : vector<2x1x128xf32>
    %126 = arith.subf %124, %125 : vector<2x1x128xf32>
    %cst_47 = arith.constant 0.000000e+00 : f32
    %127 = vector.broadcast %cst_47 : f32 to vector<2x1x128xf32>
    %128 = arith.maximumf %126, %127 : vector<2x1x128xf32>
    %cst_48 = arith.constant 9.99999974E-6 : f32
    %129 = vector.broadcast %cst_48 : f32 to vector<2x1x128xf32>
    %130 = arith.addf %128, %129 : vector<2x1x128xf32>
    %131 = math.rsqrt %130 : vector<2x1x128xf32>
    %132 = vector.shape_cast %0 : vector<1x128xf32> to vector<1x1x128xf32>
    %133 = vector.broadcast %132 : vector<1x1x128xf32> to vector<2x1x128xf32>
    %134 = arith.mulf %133, %131 : vector<2x1x128xf32>
    %135 = arith.mulf %119, %134 : vector<2x1x128xf32>
    %136 = vector.shape_cast %1 : vector<1x128xf32> to vector<1x1x128xf32>
    %137 = vector.broadcast %136 : vector<1x1x128xf32> to vector<2x1x128xf32>
    %138 = arith.subf %137, %135 : vector<2x1x128xf32>
    %139 = vector.broadcast %134 : vector<2x1x128xf32> to vector<2x128x128xf32>
    %140 = arith.mulf %115, %139 : vector<2x128x128xf32>
    %141 = vector.broadcast %138 : vector<2x1x128xf32> to vector<2x128x128xf32>
    %142 = arith.addf %140, %141 : vector<2x128x128xf32>
    %cst_49 = arith.constant 0.000000e+00 : f32
    %143 = vector.broadcast %cst_49 : f32 to vector<2x128x128xf32>
    %144 = arith.maximumf %142, %143 : vector<2x128x128xf32>
    %145 = vector.shape_cast %144 : vector<2x128x128xf32> to vector<256x128xf32>
    %146 = arith.truncf %145 : vector<256x128xf32> to vector<256x128xbf16>
    %c4 = arith.constant 4 : index
    %c0_50 = arith.constant 0 : index
    %c0_51 = arith.constant 0 : index
    %147 = vector.load %arg2[%c4, %c0_50, %c0_51] : memref<10x128x128xbf16, #tpu.memory_space<vmem>>, vector<1x128x128xbf16>
    %148 = vector.shape_cast %147 : vector<1x128x128xbf16> to vector<128x128xbf16>
    %cst_52 = arith.constant dense<0.000000e+00> : vector<256x128xf32>
    %149 = tpu.matmul %146, %148, %cst_52 {dimension_numbers = #tpu.dot_dimension_numbers<[1], [0], [0], [1], [0, 0, 1, 1], [], []>} : vector<256x128xbf16>, vector<128x128xbf16>, vector<256x128xf32> -> vector<256x128xf32>
    %150 = vector.broadcast %2 : vector<1x128xf32> to vector<256x128xf32>
    %151 = arith.addf %149, %150 : vector<256x128xf32>
    %cst_53 = arith.constant 0.000000e+00 : f32
    %152 = vector.broadcast %cst_53 : f32 to vector<256x128xf32>
    %153 = arith.maximumf %151, %152 : vector<256x128xf32>
    %154 = arith.truncf %153 : vector<256x128xf32> to vector<256x128xbf16>
    %c5 = arith.constant 5 : index
    %c0_54 = arith.constant 0 : index
    %c0_55 = arith.constant 0 : index
    %155 = vector.load %arg2[%c5, %c0_54, %c0_55] : memref<10x128x128xbf16, #tpu.memory_space<vmem>>, vector<1x128x128xbf16>
    %156 = vector.shape_cast %155 : vector<1x128x128xbf16> to vector<128x128xbf16>
    %cst_56 = arith.constant dense<0.000000e+00> : vector<256x128xf32>
    %157 = tpu.matmul %154, %156, %cst_56 {dimension_numbers = #tpu.dot_dimension_numbers<[1], [0], [0], [1], [0, 0, 1, 1], [], []>} : vector<256x128xbf16>, vector<128x128xbf16>, vector<256x128xf32> -> vector<256x128xf32>
    %158 = vector.shape_cast %157 : vector<256x128xf32> to vector<2x128x128xf32>
    %cst_57 = arith.constant dense<0.000000e+00> : vector<2x128xf32>
    %159 = vector.multi_reduction <add>, %158, %cst_57 [1] : vector<2x128x128xf32> to vector<2x128xf32>
    %160 = vector.shape_cast %159 : vector<2x128xf32> to vector<2x1x128xf32>
    %cst_58 = arith.constant 7.812500e-03 : f32
    %161 = vector.broadcast %cst_58 : f32 to vector<2x1x128xf32>
    %162 = arith.mulf %160, %161 : vector<2x1x128xf32>
    %163 = arith.mulf %158, %158 : vector<2x128x128xf32>
    %cst_59 = arith.constant dense<0.000000e+00> : vector<2x128xf32>
    %164 = vector.multi_reduction <add>, %163, %cst_59 [1] : vector<2x128x128xf32> to vector<2x128xf32>
    %165 = vector.shape_cast %164 : vector<2x128xf32> to vector<2x1x128xf32>
    %cst_60 = arith.constant 7.812500e-03 : f32
    %166 = vector.broadcast %cst_60 : f32 to vector<2x1x128xf32>
    %167 = arith.mulf %165, %166 : vector<2x1x128xf32>
    %168 = arith.mulf %162, %162 : vector<2x1x128xf32>
    %169 = arith.subf %167, %168 : vector<2x1x128xf32>
    %cst_61 = arith.constant 0.000000e+00 : f32
    %170 = vector.broadcast %cst_61 : f32 to vector<2x1x128xf32>
    %171 = arith.maximumf %169, %170 : vector<2x1x128xf32>
    %cst_62 = arith.constant 9.99999974E-6 : f32
    %172 = vector.broadcast %cst_62 : f32 to vector<2x1x128xf32>
    %173 = arith.addf %171, %172 : vector<2x1x128xf32>
    %174 = math.rsqrt %173 : vector<2x1x128xf32>
    %175 = vector.shape_cast %0 : vector<1x128xf32> to vector<1x1x128xf32>
    %176 = vector.broadcast %175 : vector<1x1x128xf32> to vector<2x1x128xf32>
    %177 = arith.mulf %176, %174 : vector<2x1x128xf32>
    %178 = arith.mulf %162, %177 : vector<2x1x128xf32>
    %179 = vector.shape_cast %1 : vector<1x128xf32> to vector<1x1x128xf32>
    %180 = vector.broadcast %179 : vector<1x1x128xf32> to vector<2x1x128xf32>
    %181 = arith.subf %180, %178 : vector<2x1x128xf32>
    %182 = vector.broadcast %177 : vector<2x1x128xf32> to vector<2x128x128xf32>
    %183 = arith.mulf %158, %182 : vector<2x128x128xf32>
    %184 = vector.broadcast %181 : vector<2x1x128xf32> to vector<2x128x128xf32>
    %185 = arith.addf %183, %184 : vector<2x128x128xf32>
    %cst_63 = arith.constant 0.000000e+00 : f32
    %186 = vector.broadcast %cst_63 : f32 to vector<2x128x128xf32>
    %187 = arith.maximumf %185, %186 : vector<2x128x128xf32>
    %188 = vector.shape_cast %187 : vector<2x128x128xf32> to vector<256x128xf32>
    %189 = arith.truncf %188 : vector<256x128xf32> to vector<256x128xbf16>
    %c6 = arith.constant 6 : index
    %c0_64 = arith.constant 0 : index
    %c0_65 = arith.constant 0 : index
    %190 = vector.load %arg2[%c6, %c0_64, %c0_65] : memref<10x128x128xbf16, #tpu.memory_space<vmem>>, vector<1x128x128xbf16>
    %191 = vector.shape_cast %190 : vector<1x128x128xbf16> to vector<128x128xbf16>
    %cst_66 = arith.constant dense<0.000000e+00> : vector<256x128xf32>
    %192 = tpu.matmul %189, %191, %cst_66 {dimension_numbers = #tpu.dot_dimension_numbers<[1], [0], [0], [1], [0, 0, 1, 1], [], []>} : vector<256x128xbf16>, vector<128x128xbf16>, vector<256x128xf32> -> vector<256x128xf32>
    %193 = vector.shape_cast %192 : vector<256x128xf32> to vector<2x128x128xf32>
    %cst_67 = arith.constant dense<0.000000e+00> : vector<2x128xf32>
    %194 = vector.multi_reduction <add>, %193, %cst_67 [1] : vector<2x128x128xf32> to vector<2x128xf32>
    %195 = vector.shape_cast %194 : vector<2x128xf32> to vector<2x1x128xf32>
    %cst_68 = arith.constant 7.812500e-03 : f32
    %196 = vector.broadcast %cst_68 : f32 to vector<2x1x128xf32>
    %197 = arith.mulf %195, %196 : vector<2x1x128xf32>
    %198 = arith.mulf %193, %193 : vector<2x128x128xf32>
    %cst_69 = arith.constant dense<0.000000e+00> : vector<2x128xf32>
    %199 = vector.multi_reduction <add>, %198, %cst_69 [1] : vector<2x128x128xf32> to vector<2x128xf32>
    %200 = vector.shape_cast %199 : vector<2x128xf32> to vector<2x1x128xf32>
    %cst_70 = arith.constant 7.812500e-03 : f32
    %201 = vector.broadcast %cst_70 : f32 to vector<2x1x128xf32>
    %202 = arith.mulf %200, %201 : vector<2x1x128xf32>
    %203 = arith.mulf %197, %197 : vector<2x1x128xf32>
    %204 = arith.subf %202, %203 : vector<2x1x128xf32>
    %cst_71 = arith.constant 0.000000e+00 : f32
    %205 = vector.broadcast %cst_71 : f32 to vector<2x1x128xf32>
    %206 = arith.maximumf %204, %205 : vector<2x1x128xf32>
    %cst_72 = arith.constant 9.99999974E-6 : f32
    %207 = vector.broadcast %cst_72 : f32 to vector<2x1x128xf32>
    %208 = arith.addf %206, %207 : vector<2x1x128xf32>
    %209 = math.rsqrt %208 : vector<2x1x128xf32>
    %210 = vector.shape_cast %0 : vector<1x128xf32> to vector<1x1x128xf32>
    %211 = vector.broadcast %210 : vector<1x1x128xf32> to vector<2x1x128xf32>
    %212 = arith.mulf %211, %209 : vector<2x1x128xf32>
    %213 = arith.mulf %197, %212 : vector<2x1x128xf32>
    %214 = vector.shape_cast %1 : vector<1x128xf32> to vector<1x1x128xf32>
    %215 = vector.broadcast %214 : vector<1x1x128xf32> to vector<2x1x128xf32>
    %216 = arith.subf %215, %213 : vector<2x1x128xf32>
    %217 = vector.broadcast %212 : vector<2x1x128xf32> to vector<2x128x128xf32>
    %218 = arith.mulf %193, %217 : vector<2x128x128xf32>
    %219 = vector.broadcast %216 : vector<2x1x128xf32> to vector<2x128x128xf32>
    %220 = arith.addf %218, %219 : vector<2x128x128xf32>
    %cst_73 = arith.constant 0.000000e+00 : f32
    %221 = vector.broadcast %cst_73 : f32 to vector<2x128x128xf32>
    %222 = arith.maximumf %220, %221 : vector<2x128x128xf32>
    %223 = vector.shape_cast %222 : vector<2x128x128xf32> to vector<256x128xf32>
    %224 = arith.truncf %223 : vector<256x128xf32> to vector<256x128xbf16>
    %c7 = arith.constant 7 : index
    %c0_74 = arith.constant 0 : index
    %c0_75 = arith.constant 0 : index
    %225 = vector.load %arg2[%c7, %c0_74, %c0_75] : memref<10x128x128xbf16, #tpu.memory_space<vmem>>, vector<1x128x128xbf16>
    %226 = vector.shape_cast %225 : vector<1x128x128xbf16> to vector<128x128xbf16>
    %cst_76 = arith.constant dense<0.000000e+00> : vector<256x128xf32>
    %227 = tpu.matmul %224, %226, %cst_76 {dimension_numbers = #tpu.dot_dimension_numbers<[1], [0], [0], [1], [0, 0, 1, 1], [], []>} : vector<256x128xbf16>, vector<128x128xbf16>, vector<256x128xf32> -> vector<256x128xf32>
    %228 = vector.shape_cast %227 : vector<256x128xf32> to vector<2x128x128xf32>
    %cst_77 = arith.constant dense<0.000000e+00> : vector<2x128xf32>
    %229 = vector.multi_reduction <add>, %228, %cst_77 [1] : vector<2x128x128xf32> to vector<2x128xf32>
    %230 = vector.shape_cast %229 : vector<2x128xf32> to vector<2x1x128xf32>
    %cst_78 = arith.constant 7.812500e-03 : f32
    %231 = vector.broadcast %cst_78 : f32 to vector<2x1x128xf32>
    %232 = arith.mulf %230, %231 : vector<2x1x128xf32>
    %233 = arith.mulf %228, %228 : vector<2x128x128xf32>
    %cst_79 = arith.constant dense<0.000000e+00> : vector<2x128xf32>
    %234 = vector.multi_reduction <add>, %233, %cst_79 [1] : vector<2x128x128xf32> to vector<2x128xf32>
    %235 = vector.shape_cast %234 : vector<2x128xf32> to vector<2x1x128xf32>
    %cst_80 = arith.constant 7.812500e-03 : f32
    %236 = vector.broadcast %cst_80 : f32 to vector<2x1x128xf32>
    %237 = arith.mulf %235, %236 : vector<2x1x128xf32>
    %238 = arith.mulf %232, %232 : vector<2x1x128xf32>
    %239 = arith.subf %237, %238 : vector<2x1x128xf32>
    %cst_81 = arith.constant 0.000000e+00 : f32
    %240 = vector.broadcast %cst_81 : f32 to vector<2x1x128xf32>
    %241 = arith.maximumf %239, %240 : vector<2x1x128xf32>
    %cst_82 = arith.constant 9.99999974E-6 : f32
    %242 = vector.broadcast %cst_82 : f32 to vector<2x1x128xf32>
    %243 = arith.addf %241, %242 : vector<2x1x128xf32>
    %244 = math.rsqrt %243 : vector<2x1x128xf32>
    %245 = vector.shape_cast %0 : vector<1x128xf32> to vector<1x1x128xf32>
    %246 = vector.broadcast %245 : vector<1x1x128xf32> to vector<2x1x128xf32>
    %247 = arith.mulf %246, %244 : vector<2x1x128xf32>
    %248 = arith.mulf %232, %247 : vector<2x1x128xf32>
    %249 = vector.shape_cast %1 : vector<1x128xf32> to vector<1x1x128xf32>
    %250 = vector.broadcast %249 : vector<1x1x128xf32> to vector<2x1x128xf32>
    %251 = arith.subf %250, %248 : vector<2x1x128xf32>
    %252 = vector.broadcast %247 : vector<2x1x128xf32> to vector<2x128x128xf32>
    %253 = arith.mulf %228, %252 : vector<2x128x128xf32>
    %254 = vector.broadcast %251 : vector<2x1x128xf32> to vector<2x128x128xf32>
    %255 = arith.addf %253, %254 : vector<2x128x128xf32>
    %cst_83 = arith.constant 0.000000e+00 : f32
    %256 = vector.broadcast %cst_83 : f32 to vector<2x128x128xf32>
    %257 = arith.maximumf %255, %256 : vector<2x128x128xf32>
    %258 = vector.shape_cast %257 : vector<2x128x128xf32> to vector<256x128xf32>
    %259 = arith.truncf %258 : vector<256x128xf32> to vector<256x128xbf16>
    %c8 = arith.constant 8 : index
    %c0_84 = arith.constant 0 : index
    %c0_85 = arith.constant 0 : index
    %260 = vector.load %arg2[%c8, %c0_84, %c0_85] : memref<10x128x128xbf16, #tpu.memory_space<vmem>>, vector<1x128x128xbf16>
    %261 = vector.shape_cast %260 : vector<1x128x128xbf16> to vector<128x128xbf16>
    %cst_86 = arith.constant dense<0.000000e+00> : vector<256x128xf32>
    %262 = tpu.matmul %259, %261, %cst_86 {dimension_numbers = #tpu.dot_dimension_numbers<[1], [0], [0], [1], [0, 0, 1, 1], [], []>} : vector<256x128xbf16>, vector<128x128xbf16>, vector<256x128xf32> -> vector<256x128xf32>
    %263 = vector.shape_cast %262 : vector<256x128xf32> to vector<2x128x128xf32>
    %cst_87 = arith.constant dense<0.000000e+00> : vector<2x128xf32>
    %264 = vector.multi_reduction <add>, %263, %cst_87 [1] : vector<2x128x128xf32> to vector<2x128xf32>
    %265 = vector.shape_cast %264 : vector<2x128xf32> to vector<2x1x128xf32>
    %cst_88 = arith.constant 7.812500e-03 : f32
    %266 = vector.broadcast %cst_88 : f32 to vector<2x1x128xf32>
    %267 = arith.mulf %265, %266 : vector<2x1x128xf32>
    %268 = arith.mulf %263, %263 : vector<2x128x128xf32>
    %cst_89 = arith.constant dense<0.000000e+00> : vector<2x128xf32>
    %269 = vector.multi_reduction <add>, %268, %cst_89 [1] : vector<2x128x128xf32> to vector<2x128xf32>
    %270 = vector.shape_cast %269 : vector<2x128xf32> to vector<2x1x128xf32>
    %cst_90 = arith.constant 7.812500e-03 : f32
    %271 = vector.broadcast %cst_90 : f32 to vector<2x1x128xf32>
    %272 = arith.mulf %270, %271 : vector<2x1x128xf32>
    %273 = arith.mulf %267, %267 : vector<2x1x128xf32>
    %274 = arith.subf %272, %273 : vector<2x1x128xf32>
    %cst_91 = arith.constant 0.000000e+00 : f32
    %275 = vector.broadcast %cst_91 : f32 to vector<2x1x128xf32>
    %276 = arith.maximumf %274, %275 : vector<2x1x128xf32>
    %cst_92 = arith.constant 9.99999974E-6 : f32
    %277 = vector.broadcast %cst_92 : f32 to vector<2x1x128xf32>
    %278 = arith.addf %276, %277 : vector<2x1x128xf32>
    %279 = math.rsqrt %278 : vector<2x1x128xf32>
    %280 = vector.shape_cast %0 : vector<1x128xf32> to vector<1x1x128xf32>
    %281 = vector.broadcast %280 : vector<1x1x128xf32> to vector<2x1x128xf32>
    %282 = arith.mulf %281, %279 : vector<2x1x128xf32>
    %283 = arith.mulf %267, %282 : vector<2x1x128xf32>
    %284 = vector.shape_cast %1 : vector<1x128xf32> to vector<1x1x128xf32>
    %285 = vector.broadcast %284 : vector<1x1x128xf32> to vector<2x1x128xf32>
    %286 = arith.subf %285, %283 : vector<2x1x128xf32>
    %287 = vector.broadcast %282 : vector<2x1x128xf32> to vector<2x128x128xf32>
    %288 = arith.mulf %263, %287 : vector<2x128x128xf32>
    %289 = vector.broadcast %286 : vector<2x1x128xf32> to vector<2x128x128xf32>
    %290 = arith.addf %288, %289 : vector<2x128x128xf32>
    %cst_93 = arith.constant 0.000000e+00 : f32
    %291 = vector.broadcast %cst_93 : f32 to vector<2x128x128xf32>
    %292 = arith.maximumf %290, %291 : vector<2x128x128xf32>
    %293 = vector.shape_cast %292 : vector<2x128x128xf32> to vector<256x128xf32>
    %294 = arith.truncf %293 : vector<256x128xf32> to vector<256x128xbf16>
    %c9 = arith.constant 9 : index
    %c0_94 = arith.constant 0 : index
    %c0_95 = arith.constant 0 : index
    %295 = vector.load %arg2[%c9, %c0_94, %c0_95] : memref<10x128x128xbf16, #tpu.memory_space<vmem>>, vector<1x128x128xbf16>
    %296 = vector.shape_cast %295 : vector<1x128x128xbf16> to vector<128x128xbf16>
    %cst_96 = arith.constant dense<0.000000e+00> : vector<256x128xf32>
    %297 = tpu.matmul %294, %296, %cst_96 {dimension_numbers = #tpu.dot_dimension_numbers<[1], [0], [0], [1], [0, 0, 1, 1], [], []>} : vector<256x128xbf16>, vector<128x128xbf16>, vector<256x128xf32> -> vector<256x128xf32>
    %298 = vector.broadcast %3 : vector<1x128xf32> to vector<256x128xf32>
    %299 = arith.addf %297, %298 : vector<256x128xf32>
    %cst_97 = arith.constant 0.000000e+00 : f32
    %300 = vector.broadcast %cst_97 : f32 to vector<256x128xf32>
    %301 = arith.maximumf %299, %300 : vector<256x128xf32>
    %302 = vector.shape_cast %301 : vector<256x128xf32> to vector<2x128x128xf32>
    %c0_98 = arith.constant 0 : index
    %c0_99 = arith.constant 0 : index
    %c0_100 = arith.constant 0 : index
    %303 = vector.load %arg4[%c0_98, %c0_99, %c0_100] : memref<2x128x128xf32, #tpu.memory_space<vmem>>, vector<2x128x128xf32>
    tpu.vector_store %arg4[%c0_98, %c0_99, %c0_100], %302 {strides = array<i32>} : memref<2x128x128xf32, #tpu.memory_space<vmem>>, vector<2x128x128xf32>,
    return
  }
  func.func @transform_0(%arg0: i32) -> (i32, i32, i32) {
    %c0_i32 = arith.constant 0 : i32
    %c0_i32_0 = arith.constant 0 : i32
    %c0_i32_1 = arith.constant 0 : i32
    return %arg0, %c0_i32, %c0_i32_0 : i32, i32, i32
  }
  func.func @transform_1(%arg0: i32) -> (i32, i32, i32) {
    %c0_i32 = arith.constant 0 : i32
    %c0_i32_0 = arith.constant 0 : i32
    %c0_i32_1 = arith.constant 0 : i32
    %c0_i32_2 = arith.constant 0 : i32
    return %c0_i32, %c0_i32_0, %c0_i32_1 : i32, i32, i32
  }
  func.func @transform_2(%arg0: i32) -> (i32, i32) {
    %c0_i32 = arith.constant 0 : i32
    %c0_i32_0 = arith.constant 0 : i32
    %c0_i32_1 = arith.constant 0 : i32
    return %c0_i32, %c0_i32_0 : i32, i32
  }
  func.func @transform_3(%arg0: i32) -> (i32, i32, i32) {
    %c0_i32 = arith.constant 0 : i32
    %c0_i32_0 = arith.constant 0 : i32
    %c0_i32_1 = arith.constant 0 : i32
    return %arg0, %c0_i32, %c0_i32_0 : i32, i32, i32
  }
}

</mosaic_0001>

<llo_original>
// kernel: autoencoder_forward.1
$region0: #{autoencoder_forward.1}
  #allocation0 [shape = 'u32[]', space=smem, size = 0x4, offset = 0x4, fixed_abs, tag = 'smem constant byte address 0x4 - core index']
  #allocation1 [shape = 'u32[144,128]{1,0:T(1,128)}', space=vmem, size = 0x12000, scoped, tag = 'internal scratch']
  %s0 = inlined_call_operand.vmem [shape: bf16[2,128,64], index: 0, kind: input, shape index: {}]
  %s1 = inlined_call_operand.hbm [shape: bf16[10,128,128], index: 1, kind: input, shape index: {}]
  %s2 = inlined_call_operand.vmem [shape: f32[4,128], index: 2, kind: input, shape index: {}]
  %s3 = inlined_call_operand.vmem [shape: f32[2,128,128], index: 3, kind: output, shape index: {}]
  %s4 = sld [smem:[#allocation0]]
  $region26: #{autoencoder_forward.1} parent=0
    _
  %s6 = ssub.s32 1, %s4
  %s7 = scalar_select 0, %s6, %s4
  $region1: #{autoencoder_forward.1} parent=0
    #allocation2 [shape = 'u8[327680]{0}', space=vmem, size = 0x50000, scoped, tag = 'input window, operand 1, single buffered']
    #allocation3 [shape = 's32[1]{0}', space=sflag, size = 0x4, scoped, tag = 'scoped memory for autoencoder_forward.1']
    %8 = vsyncpa [#allocation3], 0
    // Predicated region
    $region2: #{autoencoder_forward.1} parent=1 // pred_check
      _
    $region3: #{autoencoder_forward.1} parent=1 // pred_check_branch
      %10 = sbr.rel (0) target = $region5
    $region4: #{autoencoder_forward.1} parent=1 // pred_region
      _
    $region5: #{autoencoder_forward.1} parent=1 // pred_fallthru
      _
    // Predicated region
    $region6: #{autoencoder_forward.1} parent=1 // pred_check
      _
    $region7: #{autoencoder_forward.1} parent=1 // pred_check_branch
      %12 = sbr.rel (0) target = $region9
    $region8: #{autoencoder_forward.1} parent=1 // pred_region
      %s14 = ssub.s32 10240, 10240
      %15 = vsyncadd [#allocation3], %s14
      %s16 = sshll.u32 [#allocation2], 4
      %s17 = int_to_ptr.vmem [resolvable:$true] %s16
      %22 = dma.hbm_to_vmem [thread:$0]  %s1, 10240, %s17, [#allocation3], 64, 64, 4
    $region9: #{autoencoder_forward.1} parent=1 // pred_fallthru
      _
    // Predicated region
    $region10: #{autoencoder_forward.1} parent=1 // pred_check
      _
    $region11: #{autoencoder_forward.1} parent=1 // pred_check_branch
      %24 = sbr.rel (0) target = $region13
    $region12: #{autoencoder_forward.1} parent=1 // pred_region
      _
    $region13: #{autoencoder_forward.1} parent=1 // pred_fallthru
      _
    // Predicated region
    $region14: #{autoencoder_forward.1} parent=1 // pred_check
      _
    $region15: #{autoencoder_forward.1} parent=1 // pred_check_branch
      %26 = sbr.rel (0) target = $region17
    $region16: #{autoencoder_forward.1} parent=1 // pred_region
      %27 = dma.done [#allocation3], 10240
    $region17: #{autoencoder_forward.1} parent=1 // pred_fallthru
      _
    %v29 = vld [vmem:[%s2] sm:$0x1]
    %v30 = vld [vmem:[%s2 + $0x1] sm:$0x1]
    %v31 = vld [vmem:[%s2 + $0x2] sm:$0x1]
    %v32 = vld [vmem:[%s2 + $0x3] sm:$0x1]
    %v33 = vld [vmem:[%s0] sm:$0xf]
    %v34 = vld [vmem:[%s0 + $0x4] sm:$0xf]
    %v35 = vld [vmem:[%s0 + $0x8] sm:$0xf]
    %v36 = vld [vmem:[%s0 + $0xc] sm:$0xf]
    %v37 = vld [vmem:[%s0 + $0x10] sm:$0xf]
    %v38 = vld [vmem:[%s0 + $0x14] sm:$0xf]
    %v39 = vld [vmem:[%s0 + $0x18] sm:$0xf]
    %v40 = vld [vmem:[%s0 + $0x1c] sm:$0xf]
    %v41 = vld [vmem:[%s0 + $0x20] sm:$0xf]
    %v42 = vld [vmem:[%s0 + $0x24] sm:$0xf]
    %v43 = vld [vmem:[%s0 + $0x28] sm:$0xf]
    %v44 = vld [vmem:[%s0 + $0x2c] sm:$0xf]
    %v45 = vld [vmem:[%s0 + $0x30] sm:$0xf]
    %v46 = vld [vmem:[%s0 + $0x34] sm:$0xf]
    %v47 = vld [vmem:[%s0 + $0x38] sm:$0xf]
    %v48 = vld [vmem:[%s0 + $0x3c] sm:$0xf]
    %v49 = vld [vmem:[%s0 + $0x40] sm:$0xf]
    %v50 = vld [vmem:[%s0 + $0x44] sm:$0xf]
    %v51 = vld [vmem:[%s0 + $0x48] sm:$0xf]
    %v52 = vld [vmem:[%s0 + $0x4c] sm:$0xf]
    %v53 = vld [vmem:[%s0 + $0x50] sm:$0xf]
    %v54 = vld [vmem:[%s0 + $0x54] sm:$0xf]
    %v55 = vld [vmem:[%s0 + $0x58] sm:$0xf]
    %v56 = vld [vmem:[%s0 + $0x5c] sm:$0xf]
    %v57 = vld [vmem:[%s0 + $0x60] sm:$0xf]
    %v58 = vld [vmem:[%s0 + $0x64] sm:$0xf]
    %v59 = vld [vmem:[%s0 + $0x68] sm:$0xf]
    %v60 = vld [vmem:[%s0 + $0x6c] sm:$0xf]
    %v61 = vld [vmem:[%s0 + $0x70] sm:$0xf]
    %v62 = vld [vmem:[%s0 + $0x74] sm:$0xf]
    %v63 = vld [vmem:[%s0 + $0x78] sm:$0xf]
    %v64 = vld [vmem:[%s0 + $0x7c] sm:$0xf]
    %v65 = vld [vmem:[#allocation2] sm:$0xf]
    %v66 = vld [vmem:[#allocation2 + $0x4] sm:$0xf]
    %v67 = vld [vmem:[#allocation2 + $0x8] sm:$0xf]
    %v68 = vld [vmem:[#allocation2 + $0xc] sm:$0xf]
    %v69 = vld [vmem:[#allocation2 + $0x10] sm:$0xf]
    %v70 = vld [vmem:[#allocation2 + $0x14] sm:$0xf]
    %v71 = vld [vmem:[#allocation2 + $0x18] sm:$0xf]
    %v72 = vld [vmem:[#allocation2 + $0x1c] sm:$0xf]
    %v105 = vunpack.c.l.b16 %v33
    %v106 = vunpack.c.l.b16 %v34
    %v107 = vunpack.c.l.b16 %v35
    %v108 = vunpack.c.l.b16 %v36
    %v109 = vunpack.c.l.b16 %v37
    %v110 = vunpack.c.l.b16 %v38
    %v111 = vunpack.c.l.b16 %v39
    %v112 = vunpack.c.l.b16 %v40
    %v113 = vunpack.c.l.b16 %v41
    %v114 = vunpack.c.l.b16 %v42
    %v115 = vunpack.c.l.b16 %v43
    %v116 = vunpack.c.l.b16 %v44
    %v117 = vunpack.c.l.b16 %v45
    %v118 = vunpack.c.l.b16 %v46
    %v119 = vunpack.c.l.b16 %v47
    %v120 = vunpack.c.l.b16 %v48
    %v121 = vunpack.c.l.b16 %v49
    %v122 = vunpack.c.l.b16 %v50
    %v123 = vunpack.c.l.b16 %v51
    %v124 = vunpack.c.l.b16 %v52
    %v125 = vunpack.c.l.b16 %v53
    %v126 = vunpack.c.l.b16 %v54
    %v127 = vunpack.c.l.b16 %v55
    %v128 = vunpack.c.l.b16 %v56
    %v129 = vunpack.c.l.b16 %v57
    %v130 = vunpack.c.l.b16 %v58
    %v131 = vunpack.c.l.b16 %v59
    %v132 = vunpack.c.l.b16 %v60
    %v133 = vunpack.c.l.b16 %v61
    %v134 = vunpack.c.l.b16 %v62
    %v135 = vunpack.c.l.b16 %v63
    %v136 = vunpack.c.l.b16 %v64
    %v137 = vpack.c.b16 %v106, %v105
    %v138 = vpack.c.b16 %v108, %v107
    %v139 = vpack.c.b16 %v110, %v109
    %v140 = vpack.c.b16 %v112, %v111
    %v141 = vpack.c.b16 %v114, %v113
    %v142 = vpack.c.b16 %v116, %v115
    %v143 = vpack.c.b16 %v118, %v117
    %v144 = vpack.c.b16 %v120, %v119
    %v145 = vpack.c.b16 %v122, %v121
    %v146 = vpack.c.b16 %v124, %v123
    %v147 = vpack.c.b16 %v126, %v125
    %v148 = vpack.c.b16 %v128, %v127
    %v149 = vpack.c.b16 %v130, %v129
    %v150 = vpack.c.b16 %v132, %v131
    %v151 = vpack.c.b16 %v134, %v133
    %v152 = vpack.c.b16 %v136, %v135
    %v161 = vunpack.c.l.b16 %v65
    %v162 = vunpack.c.l.b16 %v66
    %v163 = vunpack.c.l.b16 %v67
    %v164 = vunpack.c.l.b16 %v68
    %v165 = vunpack.c.l.b16 %v69
    %v166 = vunpack.c.l.b16 %v70
    %v167 = vunpack.c.l.b16 %v71
    %v168 = vunpack.c.l.b16 %v72
    %v169 = vpack.c.b16 %v162, %v161
    %v170 = vpack.c.b16 %v164, %v163
    %v171 = vpack.c.b16 %v166, %v165
    %v172 = vpack.c.b16 %v168, %v167
    %vm177 = vcmask 523264
    %v179 = vsel %vm177, %v137, 0
    %v182 = vsel %vm177, %v138, 0
    %v185 = vsel %vm177, %v139, 0
    %v188 = vsel %vm177, %v140, 0
    %v191 = vsel %vm177, %v141, 0
    %v194 = vsel %vm177, %v142, 0
    %v197 = vsel %vm177, %v143, 0
    %v200 = vsel %vm177, %v144, 0
    %v203 = vsel %vm177, %v145, 0
    %v206 = vsel %vm177, %v146, 0
    %v209 = vsel %vm177, %v147, 0
    %v212 = vsel %vm177, %v148, 0
    %v215 = vsel %vm177, %v149, 0
    %v218 = vsel %vm177, %v150, 0
    %v221 = vsel %vm177, %v151, 0
    %v224 = vsel %vm177, %v152, 0
    %226 = vmatprep.subr.bf16.mxu0 0
    %227 = vmatpush1.bf16.msra.mxu0 0
    %228 = vmatprep.subr.bf16.mxu0 0
    %229 = vmatpush1.bf16.msra.mxu0 0
    %230 = vmatprep.subr.bf16.mxu0 0
    %231 = vmatpush1.bf16.msra.mxu0 0
    %232 = vmatprep.subr.bf16.mxu0 0
    %233 = vmatpush1.bf16.msra.mxu0 0
    %234 = vmatprep.subr.bf16.mxu0 0
    %235 = vmatpush1.bf16.msra.mxu0 %v172
    %236 = vmatprep.subr.bf16.mxu0 0
    %237 = vmatpush1.bf16.msra.mxu0 %v171
    %238 = vmatprep.subr.bf16.mxu0 0
    %239 = vmatpush1.bf16.msra.mxu0 %v170
    %240 = vmatprep.subr.bf16.mxu0 0
    %241 = vmatpush1.bf16.msra.mxu0 %v169
    %242 = vmatprep.subr.bf16.mxu0 0
    %243 = vmatpush2.bf16.msra.mxu0 0
    %244 = vmatprep.subr.bf16.mxu0 0
    %245 = vmatpush2.bf16.msra.mxu0 0
    %246 = vmatprep.subr.bf16.mxu0 0
    %247 = vmatpush2.bf16.msra.mxu0 0
    %248 = vmatprep.subr.bf16.mxu0 0
    %249 = vmatpush2.bf16.msra.mxu0 0
    %250 = vmatprep.subr.bf16.mxu0 0
    %251 = vmatpush2.bf16.msra.mxu0 0
    %252 = vmatprep.subr.bf16.mxu0 0
    %253 = vmatpush2.bf16.msra.mxu0 0
    %254 = vmatprep.subr.bf16.mxu0 0
    %255 = vmatpush2.bf16.msra.mxu0 0
    %256 = vmatprep.subr.bf16.mxu0 0
    %257 = vmatpush2.bf16.msra.mxu0 0
    %258 = vmatprep.mubr.bf16.mxu0 0
    %259 = vmatmul.mubr.bf16.gmra.mxu0 %v179
    %v260 = vpop.f32.mrf.mxu0
    %v261 = vadd.f32 0.0, %v260
    %v262 = vpop.f32.mrf.mxu0
    %v263 = vpop.f32.mrf.mxu0
    %v264 = vadd.f32 0.0, %v263
    %v265 = vpop.f32.mrf.mxu0
    %266 = vmatprep.mubr.bf16.mxu0 0
    %267 = vmatmul.mubr.bf16.gmra.mxu0 %v182
    %v268 = vpop.f32.mrf.mxu0
    %v269 = vadd.f32 0.0, %v268
    %v270 = vpop.f32.mrf.mxu0
    %v271 = vpop.f32.mrf.mxu0
    %v272 = vadd.f32 0.0, %v271
    %v273 = vpop.f32.mrf.mxu0
    %274 = vmatprep.mubr.bf16.mxu0 0
    %275 = vmatmul.mubr.bf16.gmra.mxu0 %v185
    %v276 = vpop.f32.mrf.mxu0
    %v277 = vadd.f32 0.0, %v276
    %v278 = vpop.f32.mrf.mxu0
    %v279 = vpop.f32.mrf.mxu0
    %v280 = vadd.f32 0.0, %v279
    %v281 = vpop.f32.mrf.mxu0
    %282 = vmatprep.mubr.bf16.mxu0 0
    %283 = vmatmul.mubr.bf16.gmra.mxu0 %v188
    %v284 = vpop.f32.mrf.mxu0
    %v285 = vadd.f32 0.0, %v284
    %v286 = vpop.f32.mrf.mxu0
    %v287 = vpop.f32.mrf.mxu0
    %v288 = vadd.f32 0.0, %v287
    %v289 = vpop.f32.mrf.mxu0
    %290 = vmatprep.mubr.bf16.mxu0 0
    %291 = vmatmul.mubr.bf16.gmra.mxu0 %v191
    %v292 = vpop.f32.mrf.mxu0
    %v293 = vadd.f32 0.0, %v292
    %v294 = vpop.f32.mrf.mxu0
    %v295 = vpop.f32.mrf.mxu0
    %v296 = vadd.f32 0.0, %v295
    %v297 = vpop.f32.mrf.mxu0
    %298 = vmatprep.mubr.bf16.mxu0 0
    %299 = vmatmul.mubr.bf16.gmra.mxu0 %v194
    %v300 = vpop.f32.mrf.mxu0
    %v301 = vadd.f32 0.0, %v300
    %v302 = vpop.f32.mrf.mxu0
    %v303 = vpop.f32.mrf.mxu0
    %v304 = vadd.f32 0.0, %v303
    %v305 = vpop.f32.mrf.mxu0
    %306 = vmatprep.mubr.bf16.mxu0 0
    %307 = vmatmul.mubr.bf16.gmra.mxu0 %v197
    %v308 = vpop.f32.mrf.mxu0
    %v309 = vadd.f32 0.0, %v308
    %v310 = vpop.f32.mrf.mxu0
    %v311 = vpop.f32.mrf.mxu0
    %v312 = vadd.f32 0.0, %v311
    %v313 = vpop.f32.mrf.mxu0
    %314 = vmatprep.mubr.bf16.mxu0 0
    %315 = vmatmul.mubr.bf16.gmra.mxu0 %v200
    %v316 = vpop.f32.mrf.mxu0
    %v317 = vadd.f32 0.0, %v316
    %v318 = vpop.f32.mrf.mxu0
    %v319 = vpop.f32.mrf.mxu0
    %v320 = vadd.f32 0.0, %v319
    %v321 = vpop.f32.mrf.mxu0
    %322 = vmatprep.mubr.bf16.mxu0 0
    %323 = vmatmul.mubr.bf16.gmra.mxu0 %v203
    %v324 = vpop.f32.mrf.mxu0
    %v325 = vadd.f32 0.0, %v324
    %v326 = vpop.f32.mrf.mxu0
    %v327 = vpop.f32.mrf.mxu0
    %v328 = vadd.f32 0.0, %v327
    %v329 = vpop.f32.mrf.mxu0
    %330 = vmatprep.mubr.bf16.mxu0 0
    %331 = vmatmul.mubr.bf16.gmra.mxu0 %v206
    %v332 = vpop.f32.mrf.mxu0
    %v333 = vadd.f32 0.0, %v332
    %v334 = vpop.f32.mrf.mxu0
    %v335 = vpop.f32.mrf.mxu0
    %v336 = vadd.f32 0.0, %v335
    %v337 = vpop.f32.mrf.mxu0
    %338 = vmatprep.mubr.bf16.mxu0 0
    %339 = vmatmul.mubr.bf16.gmra.mxu0 %v209
    %v340 = vpop.f32.mrf.mxu0
    %v341 = vadd.f32 0.0, %v340
    %v342 = vpop.f32.mrf.mxu0
    %v343 = vpop.f32.mrf.mxu0
    %v344 = vadd.f32 0.0, %v343
    %v345 = vpop.f32.mrf.mxu0
    %346 = vmatprep.mubr.bf16.mxu0 0
    %347 = vmatmul.mubr.bf16.gmra.mxu0 %v212
    %v348 = vpop.f32.mrf.mxu0
    %v349 = vadd.f32 0.0, %v348
    %v350 = vpop.f32.mrf.mxu0
    %v351 = vpop.f32.mrf.mxu0
    %v352 = vadd.f32 0.0, %v351
    %v353 = vpop.f32.mrf.mxu0
    %354 = vmatprep.mubr.bf16.mxu0 0
    %355 = vmatmul.mubr.bf16.gmra.mxu0 %v215
    %v356 = vpop.f32.mrf.mxu0
    %v357 = vadd.f32 0.0, %v356
    %v358 = vpop.f32.mrf.mxu0
    %v359 = vpop.f32.mrf.mxu0
    %v360 = vadd.f32 0.0, %v359
    %v361 = vpop.f32.mrf.mxu0
    %362 = vmatprep.mubr.bf16.mxu0 0
    %363 = vmatmul.mubr.bf16.gmra.mxu0 %v218
    %v364 = vpop.f32.mrf.mxu0
    %v365 = vadd.f32 0.0, %v364
    %v366 = vpop.f32.mrf.mxu0
    %v367 = vpop.f32.mrf.mxu0
    %v368 = vadd.f32 0.0, %v367
    %v369 = vpop.f32.mrf.mxu0
    %370 = vmatprep.mubr.bf16.mxu0 0
    %371 = vmatmul.mubr.bf16.gmra.mxu0 %v221
    %v372 = vpop.f32.mrf.mxu0
    %v373 = vadd.f32 0.0, %v372
    %v374 = vpop.f32.mrf.mxu0
    %v375 = vpop.f32.mrf.mxu0
    %v376 = vadd.f32 0.0, %v375
    %v377 = vpop.f32.mrf.mxu0
    %378 = vmatprep.mubr.bf16.mxu0 0
    %379 = vmatmul.mubr.bf16.gmra.mxu0 %v224
    %v380 = vpop.f32.mrf.mxu0
    %v381 = vadd.f32 0.0, %v380
    %v382 = vpop.f32.mrf.mxu0
    %v383 = vpop.f32.mrf.mxu0
    %v384 = vadd.f32 0.0, %v383
    %v385 = vpop.f32.mrf.mxu0
    %386 = vdwg.mxu0
    %v387 = vadd.f32 %v261, %v264
    %v388 = vadd.f32 %v387, %v269
    %v389 = vadd.f32 %v388, %v272
    %v390 = vadd.f32 %v389, %v277
    %v391 = vadd.f32 %v390, %v280
    %v392 = vadd.f32 %v391, %v285
    %v393 = vadd.f32 %v392, %v288
    %v394 = vadd.f32 %v393, %v293
    %v395 = vadd.f32 %v394, %v296
    %v396 = vadd.f32 %v395, %v301
    %v397 = vadd.f32 %v396, %v304
    %v398 = vadd.f32 %v397, %v309
    %v399 = vadd.f32 %v398, %v312
    %v400 = vadd.f32 %v399, %v317
    %v401 = vadd.f32 %v400, %v320
    %v402 = vrot.slane %v401, 4
    %v403 = vadd.f32 %v401, %v402
    %v404 = vrot.slane %v403, 2
    %v405 = vadd.f32 %v403, %v404
    %v406 = vrot.slane %v405, 1
    %v407 = vadd.f32 %v405, %v406
    %v408 = vadd.f32 %v325, %v328
    %v409 = vadd.f32 %v408, %v333
    %v410 = vadd.f32 %v409, %v336
    %v411 = vadd.f32 %v410, %v341
    %v412 = vadd.f32 %v411, %v344
    %v413 = vadd.f32 %v412, %v349
    %v414 = vadd.f32 %v413, %v352
    %v415 = vadd.f32 %v414, %v357
    %v416 = vadd.f32 %v415, %v360
    %v417 = vadd.f32 %v416, %v365
    %v418 = vadd.f32 %v417, %v368
    %v419 = vadd.f32 %v418, %v373
    %v420 = vadd.f32 %v419, %v376
    %v421 = vadd.f32 %v420, %v381
    %v422 = vadd.f32 %v421, %v384
    %v423 = vrot.slane %v422, 4
    %v424 = vadd.f32 %v422, %v423
    %v425 = vrot.slane %v424, 2
    %v426 = vadd.f32 %v424, %v425
    %v427 = vrot.slane %v426, 1
    %v428 = vadd.f32 %v426, %v427
    %v429 = vmul.f32 %v407, 0.0078125
    %v430 = vmul.f32 %v428, 0.0078125
    %v431 = vmul.f32 %v261, %v261
    %v432 = vmul.f32 %v264, %v264
    %v433 = vmul.f32 %v269, %v269
    %v434 = vmul.f32 %v272, %v272
    %v435 = vmul.f32 %v277, %v277
    %v436 = vmul.f32 %v280, %v280
    %v437 = vmul.f32 %v285, %v285
    %v438 = vmul.f32 %v288, %v288
    %v439 = vmul.f32 %v293, %v293
    %v440 = vmul.f32 %v296, %v296
    %v441 = vmul.f32 %v301, %v301
    %v442 = vmul.f32 %v304, %v304
    %v443 = vmul.f32 %v309, %v309
    %v444 = vmul.f32 %v312, %v312
    %v445 = vmul.f32 %v317, %v317
    %v446 = vmul.f32 %v320, %v320
    %v447 = vmul.f32 %v325, %v325
    %v448 = vmul.f32 %v328, %v328
    %v449 = vmul.f32 %v333, %v333
    %v450 = vmul.f32 %v336, %v336
    %v451 = vmul.f32 %v341, %v341
    %v452 = vmul.f32 %v344, %v344
    %v453 = vmul.f32 %v349, %v349
    %v454 = vmul.f32 %v352, %v352
    %v455 = vmul.f32 %v357, %v357
    %v456 = vmul.f32 %v360, %v360
    %v457 = vmul.f32 %v365, %v365
    %v458 = vmul.f32 %v368, %v368
    %v459 = vmul.f32 %v373, %v373
    %v460 = vmul.f32 %v376, %v376
    %v461 = vmul.f32 %v381, %v381
    %v462 = vmul.f32 %v384, %v384
    %v463 = vadd.f32 %v431, %v432
    %v464 = vadd.f32 %v463, %v433
    %v465 = vadd.f32 %v464, %v434
    %v466 = vadd.f32 %v465, %v435
    %v467 = vadd.f32 %v466, %v436
    %v468 = vadd.f32 %v467, %v437
    %v469 = vadd.f32 %v468, %v438
    %v470 = vadd.f32 %v469, %v439
    %v471 = vadd.f32 %v470, %v440
    %v472 = vadd.f32 %v471, %v441
    %v473 = vadd.f32 %v472, %v442
    %v474 = vadd.f32 %v473, %v443
    %v475 = vadd.f32 %v474, %v444
    %v476 = vadd.f32 %v475, %v445
    %v477 = vadd.f32 %v476, %v446
    %v478 = vrot.slane %v477, 4
    %v479 = vadd.f32 %v477, %v478
    %v480 = vrot.slane %v479, 2
    %v481 = vadd.f32 %v479, %v480
    %v482 = vrot.slane %v481, 1
    %v483 = vadd.f32 %v481, %v482
    %v484 = vadd.f32 %v447, %v448
    %v485 = vadd.f32 %v484, %v449
    %v486 = vadd.f32 %v485, %v450
    %v487 = vadd.f32 %v486, %v451
    %v488 = vadd.f32 %v487, %v452
    %v489 = vadd.f32 %v488, %v453
    %v490 = vadd.f32 %v489, %v454
    %v491 = vadd.f32 %v490, %v455
    %v492 = vadd.f32 %v491, %v456
    %v493 = vadd.f32 %v492, %v457
    %v494 = vadd.f32 %v493, %v458
    %v495 = vadd.f32 %v494, %v459
    %v496 = vadd.f32 %v495, %v460
    %v497 = vadd.f32 %v496, %v461
    %v498 = vadd.f32 %v497, %v462
    %v499 = vrot.slane %v498, 4
    %v500 = vadd.f32 %v498, %v499
    %v501 = vrot.slane %v500, 2
    %v502 = vadd.f32 %v500, %v501
    %v503 = vrot.slane %v502, 1
    %v504 = vadd.f32 %v502, %v503
    %v505 = vmul.f32 %v483, 0.0078125
    %v506 = vmul.f32 %v504, 0.0078125
    %v507 = vmul.f32 %v429, %v429
    %v508 = vmul.f32 %v430, %v430
    %v509 = vsub.f32 %v505, %v507
    %v510 = vsub.f32 %v506, %v508
    %v511 = vmax.f32 %v509, 0.0
    %v512 = vmax.f32 %v510, 0.0
    %v513 = vadd.f32 %v511, 1e-05
    %v514 = vadd.f32 %v512, 1e-05
    %v515 = vrsqrt.pop %v513
    %v516 = vrsqrt.pop %v514
    %v517 = vmul.f32 %v29, %v515
    %v518 = vmul.f32 %v29, %v516
    %v519 = vmul.f32 %v429, %v517
    %v520 = vmul.f32 %v430, %v518
    %v521 = vsub.f32 %v30, %v519
    %v522 = vsub.f32 %v30, %v520
    %v523 = vlaneseq
    %v524 = vshrl.u32 %v523, 7
    %v525 = vsub.s32 0, %v524
    %v526 = vrot.slane %v517, %v525
    %v527 = vlaneseq
    %v528 = vshrl.u32 %v527, 7
    %v529 = vsub.s32 0, %v528
    %v530 = vrot.slane %v518, %v529
    %v531 = vmul.f32 %v261, %v526
    %v532 = vmul.f32 %v264, %v526
    %v533 = vmul.f32 %v269, %v526
    %v534 = vmul.f32 %v272, %v526
    %v535 = vmul.f32 %v277, %v526
    %v536 = vmul.f32 %v280, %v526
    %v537 = vmul.f32 %v285, %v526
    %v538 = vmul.f32 %v288, %v526
    %v539 = vmul.f32 %v293, %v526
    %v540 = vmul.f32 %v296, %v526
    %v541 = vmul.f32 %v301, %v526
    %v542 = vmul.f32 %v304, %v526
    %v543 = vmul.f32 %v309, %v526
    %v544 = vmul.f32 %v312, %v526
    %v545 = vmul.f32 %v317, %v526
    %v546 = vmul.f32 %v320, %v526
    %v547 = vmul.f32 %v325, %v530
    %v548 = vmul.f32 %v328, %v530
    %v549 = vmul.f32 %v333, %v530
    %v550 = vmul.f32 %v336, %v530
    %v551 = vmul.f32 %v341, %v530
    %v552 = vmul.f32 %v344, %v530
    %v553 = vmul.f32 %v349, %v530
    %v554 = vmul.f32 %v352, %v530
    %v555 = vmul.f32 %v357, %v530
    %v556 = vmul.f32 %v360, %v530
    %v557 = vmul.f32 %v365, %v530
    %v558 = vmul.f32 %v368, %v530
    %v559 = vmul.f32 %v373, %v530
    %v560 = vmul.f32 %v376, %v530
    %v561 = vmul.f32 %v381, %v530
    %v562 = vmul.f32 %v384, %v530
    %v563 = vlaneseq
    %v564 = vshrl.u32 %v563, 7
    %v565 = vsub.s32 0, %v564
    %v566 = vrot.slane %v521, %v565
    %v567 = vlaneseq
    %v568 = vshrl.u32 %v567, 7
    %v569 = vsub.s32 0, %v568
    %v570 = vrot.slane %v522, %v569
    %v571 = vadd.f32 %v531, %v566
    %v572 = vadd.f32 %v532, %v566
    %v573 = vadd.f32 %v533, %v566
    %v574 = vadd.f32 %v534, %v566
    %v575 = vadd.f32 %v535, %v566
    %v576 = vadd.f32 %v536, %v566
    %v577 = vadd.f32 %v537, %v566
    %v578 = vadd.f32 %v538, %v566
    %v579 = vadd.f32 %v539, %v566
    %v580 = vadd.f32 %v540, %v566
    %v581 = vadd.f32 %v541, %v566
    %v582 = vadd.f32 %v542, %v566
    %v583 = vadd.f32 %v543, %v566
    %v584 = vadd.f32 %v544, %v566
    %v585 = vadd.f32 %v545, %v566
    %v586 = vadd.f32 %v546, %v566
    %v587 = vadd.f32 %v547, %v570
    %v588 = vadd.f32 %v548, %v570
    %v589 = vadd.f32 %v549, %v570
    %v590 = vadd.f32 %v550, %v570
    %v591 = vadd.f32 %v551, %v570
    %v592 = vadd.f32 %v552, %v570
    %v593 = vadd.f32 %v553, %v570
    %v594 = vadd.f32 %v554, %v570
    %v595 = vadd.f32 %v555, %v570
    %v596 = vadd.f32 %v556, %v570
    %v597 = vadd.f32 %v557, %v570
    %v598 = vadd.f32 %v558, %v570
    %v599 = vadd.f32 %v559, %v570
    %v600 = vadd.f32 %v560, %v570
    %v601 = vadd.f32 %v561, %v570
    %v602 = vadd.f32 %v562, %v570
    %v603 = vmax.f32 %v571, 0.0
    %v604 = vmax.f32 %v572, 0.0
    %v605 = vmax.f32 %v573, 0.0
    %v606 = vmax.f32 %v574, 0.0
    %v607 = vmax.f32 %v575, 0.0
    %v608 = vmax.f32 %v576, 0.0
    %v609 = vmax.f32 %v577, 0.0
    %v610 = vmax.f32 %v578, 0.0
    %v611 = vmax.f32 %v579, 0.0
    %v612 = vmax.f32 %v580, 0.0
    %v613 = vmax.f32 %v581, 0.0
    %v614 = vmax.f32 %v582, 0.0
    %v615 = vmax.f32 %v583, 0.0
    %v616 = vmax.f32 %v584, 0.0
    %v617 = vmax.f32 %v585, 0.0
    %v618 = vmax.f32 %v586, 0.0
    %v619 = vmax.f32 %v587, 0.0
    %v620 = vmax.f32 %v588, 0.0
    %v621 = vmax.f32 %v589, 0.0
    %v622 = vmax.f32 %v590, 0.0
    %v623 = vmax.f32 %v591, 0.0
    %v624 = vmax.f32 %v592, 0.0
    %v625 = vmax.f32 %v593, 0.0
    %v626 = vmax.f32 %v594, 0.0
    %v627 = vmax.f32 %v595, 0.0
    %v628 = vmax.f32 %v596, 0.0
    %v629 = vmax.f32 %v597, 0.0
    %v630 = vmax.f32 %v598, 0.0
    %v631 = vmax.f32 %v599, 0.0
    %v632 = vmax.f32 %v600, 0.0
    %v633 = vmax.f32 %v601, 0.0
    %v634 = vmax.f32 %v602, 0.0
    %v635 = vpack.c.bf16 %v604, %v603
    %v636 = vpack.c.bf16 %v606, %v605
    %v637 = vpack.c.bf16 %v608, %v607
    %v638 = vpack.c.bf16 %v610, %v609
    %v639 = vpack.c.bf16 %v612, %v611
    %v640 = vpack.c.bf16 %v614, %v613
    %v641 = vpack.c.bf16 %v616, %v615
    %v642 = vpack.c.bf16 %v618, %v617
    %v643 = vpack.c.bf16 %v620, %v619
    %v644 = vpack.c.bf16 %v622, %v621
    %v645 = vpack.c.bf16 %v624, %v623
    %v646 = vpack.c.bf16 %v626, %v625
    %v647 = vpack.c.bf16 %v628, %v627
    %v648 = vpack.c.bf16 %v630, %v629
    %v649 = vpack.c.bf16 %v632, %v631
    %v650 = vpack.c.bf16 %v634, %v633
    %s651 = scalar_lea.vmem [#allocation2], 64
    %v652 = vld [vmem:[%s651] sm:$0xf]
    %v653 = vld [vmem:[%s651 + $0x4] sm:$0xf]
    %v654 = vld [vmem:[%s651 + $0x8] sm:$0xf]
    %v655 = vld [vmem:[%s651 + $0xc] sm:$0xf]
    %v656 = vld [vmem:[%s651 + $0x10] sm:$0xf]
    %v657 = vld [vmem:[%s651 + $0x14] sm:$0xf]
    %v658 = vld [vmem:[%s651 + $0x18] sm:$0xf]
    %v659 = vld [vmem:[%s651 + $0x1c] sm:$0xf]
    %v660 = vld [vmem:[%s651 + $0x20] sm:$0xf]
    %v661 = vld [vmem:[%s651 + $0x24] sm:$0xf]
    %v662 = vld [vmem:[%s651 + $0x28] sm:$0xf]
    %v663 = vld [vmem:[%s651 + $0x2c] sm:$0xf]
    %v664 = vld [vmem:[%s651 + $0x30] sm:$0xf]
    %v665 = vld [vmem:[%s651 + $0x34] sm:$0xf]
    %v666 = vld [vmem:[%s651 + $0x38] sm:$0xf]
    %v667 = vld [vmem:[%s651 + $0x3c] sm:$0xf]
    %v684 = vunpack.c.l.b16 %v652
    %v685 = vunpack.c.l.b16 %v653
    %v686 = vunpack.c.l.b16 %v654
    %v687 = vunpack.c.l.b16 %v655
    %v688 = vunpack.c.l.b16 %v656
    %v689 = vunpack.c.l.b16 %v657
    %v690 = vunpack.c.l.b16 %v658
    %v691 = vunpack.c.l.b16 %v659
    %v692 = vunpack.c.l.b16 %v660
    %v693 = vunpack.c.l.b16 %v661
    %v694 = vunpack.c.l.b16 %v662
    %v695 = vunpack.c.l.b16 %v663
    %v696 = vunpack.c.l.b16 %v664
    %v697 = vunpack.c.l.b16 %v665
    %v698 = vunpack.c.l.b16 %v666
    %v699 = vunpack.c.l.b16 %v667
    %v700 = vpack.c.b16 %v685, %v684
    %v701 = vpack.c.b16 %v687, %v686
    %v702 = vpack.c.b16 %v689, %v688
    %v703 = vpack.c.b16 %v691, %v690
    %v704 = vpack.c.b16 %v693, %v692
    %v705 = vpack.c.b16 %v695, %v694
    %v706 = vpack.c.b16 %v697, %v696
    %v707 = vpack.c.b16 %v699, %v698
    %716 = vmatprep.subr.bf16.mxu0 0
    %717 = vmatpush1.bf16.msra.mxu0 %v707
    %718 = vmatprep.subr.bf16.mxu0 0
    %719 = vmatpush1.bf16.msra.mxu0 %v706
    %720 = vmatprep.subr.bf16.mxu0 0
    %721 = vmatpush1.bf16.msra.mxu0 %v705
    %722 = vmatprep.subr.bf16.mxu0 0
    %723 = vmatpush1.bf16.msra.mxu0 %v704
    %724 = vmatprep.subr.bf16.mxu0 0
    %725 = vmatpush1.bf16.msra.mxu0 %v703
    %726 = vmatprep.subr.bf16.mxu0 0
    %727 = vmatpush1.bf16.msra.mxu0 %v702
    %728 = vmatprep.subr.bf16.mxu0 0
    %729 = vmatpush1.bf16.msra.mxu0 %v701
    %730 = vmatprep.subr.bf16.mxu0 0
    %731 = vmatpush1.bf16.msra.mxu0 %v700
    %732 = vmatprep.subr.bf16.mxu0 0
    %733 = vmatpush2.bf16.msra.mxu0 0
    %734 = vmatprep.subr.bf16.mxu0 0
    %735 = vmatpush2.bf16.msra.mxu0 0
    %736 = vmatprep.subr.bf16.mxu0 0
    %737 = vmatpush2.bf16.msra.mxu0 0
    %738 = vmatprep.subr.bf16.mxu0 0
    %739 = vmatpush2.bf16.msra.mxu0 0
    %740 = vmatprep.subr.bf16.mxu0 0
    %741 = vmatpush2.bf16.msra.mxu0 0
    %742 = vmatprep.subr.bf16.mxu0 0
    %743 = vmatpush2.bf16.msra.mxu0 0
    %744 = vmatprep.subr.bf16.mxu0 0
    %745 = vmatpush2.bf16.msra.mxu0 0
    %746 = vmatprep.subr.bf16.mxu0 0
    %747 = vmatpush2.bf16.msra.mxu0 0
    %748 = vmatprep.mubr.bf16.mxu0 0
    %749 = vmatmul.mubr.bf16.gmra.mxu0 %v635
    %v750 = vpop.f32.mrf.mxu0
    %v751 = vadd.f32 0.0, %v750
    %v752 = vpop.f32.mrf.mxu0
    %v753 = vpop.f32.mrf.mxu0
    %v754 = vadd.f32 0.0, %v753
    %v755 = vpop.f32.mrf.mxu0
    %756 = vmatprep.mubr.bf16.mxu0 0
    %757 = vmatmul.mubr.bf16.gmra.mxu0 %v636
    %v758 = vpop.f32.mrf.mxu0
    %v759 = vadd.f32 0.0, %v758
    %v760 = vpop.f32.mrf.mxu0
    %v761 = vpop.f32.mrf.mxu0
    %v762 = vadd.f32 0.0, %v761
    %v763 = vpop.f32.mrf.mxu0
    %764 = vmatprep.mubr.bf16.mxu0 0
    %765 = vmatmul.mubr.bf16.gmra.mxu0 %v637
    %v766 = vpop.f32.mrf.mxu0
    %v767 = vadd.f32 0.0, %v766
    %v768 = vpop.f32.mrf.mxu0
    %v769 = vpop.f32.mrf.mxu0
    %v770 = vadd.f32 0.0, %v769
    %v771 = vpop.f32.mrf.mxu0
    %772 = vmatprep.mubr.bf16.mxu0 0
    %773 = vmatmul.mubr.bf16.gmra.mxu0 %v638
    %v774 = vpop.f32.mrf.mxu0
    %v775 = vadd.f32 0.0, %v774
    %v776 = vpop.f32.mrf.mxu0
    %v777 = vpop.f32.mrf.mxu0
    %v778 = vadd.f32 0.0, %v777
    %v779 = vpop.f32.mrf.mxu0
    %780 = vmatprep.mubr.bf16.mxu0 0
    %781 = vmatmul.mubr.bf16.gmra.mxu0 %v639
    %v782 = vpop.f32.mrf.mxu0
    %v783 = vadd.f32 0.0, %v782
    %v784 = vpop.f32.mrf.mxu0
    %v785 = vpop.f32.mrf.mxu0
    %v786 = vadd.f32 0.0, %v785
    %v787 = vpop.f32.mrf.mxu0
    %788 = vmatprep.mubr.bf16.mxu0 0
    %789 = vmatmul.mubr.bf16.gmra.mxu0 %v640
    %v790 = vpop.f32.mrf.mxu0
    %v791 = vadd.f32 0.0, %v790
    %v792 = vpop.f32.mrf.mxu0
    %v793 = vpop.f32.mrf.mxu0
    %v794 = vadd.f32 0.0, %v793
    %v795 = vpop.f32.mrf.mxu0
    %796 = vmatprep.mubr.bf16.mxu0 0
    %797 = vmatmul.mubr.bf16.gmra.mxu0 %v641
    %v798 = vpop.f32.mrf.mxu0
    %v799 = vadd.f32 0.0, %v798
    %v800 = vpop.f32.mrf.mxu0
    %v801 = vpop.f32.mrf.mxu0
    %v802 = vadd.f32 0.0, %v801
    %v803 = vpop.f32.mrf.mxu0
    %804 = vmatprep.mubr.bf16.mxu0 0
    %805 = vmatmul.mubr.bf16.gmra.mxu0 %v642
    %v806 = vpop.f32.mrf.mxu0
    %v807 = vadd.f32 0.0, %v806
    %v808 = vpop.f32.mrf.mxu0
    %v809 = vpop.f32.mrf.mxu0
    %v810 = vadd.f32 0.0, %v809
    %v811 = vpop.f32.mrf.mxu0
    %812 = vmatprep.mubr.bf16.mxu0 0
    %813 = vmatmul.mubr.bf16.gmra.mxu0 %v643
    %v814 = vpop.f32.mrf.mxu0
    %v815 = vadd.f32 0.0, %v814
    %v816 = vpop.f32.mrf.mxu0
    %v817 = vpop.f32.mrf.mxu0
    %v818 = vadd.f32 0.0, %v817
    %v819 = vpop.f32.mrf.mxu0
    %820 = vmatprep.mubr.bf16.mxu0 0
    %821 = vmatmul.mubr.bf16.gmra.mxu0 %v644
    %v822 = vpop.f32.mrf.mxu0
    %v823 = vadd.f32 0.0, %v822
    %v824 = vpop.f32.mrf.mxu0
    %v825 = vpop.f32.mrf.mxu0
    %v826 = vadd.f32 0.0, %v825
    %v827 = vpop.f32.mrf.mxu0
    %828 = vmatprep.mubr.bf16.mxu0 0
    %829 = vmatmul.mubr.bf16.gmra.mxu0 %v645
    %v830 = vpop.f32.mrf.mxu0
    %v831 = vadd.f32 0.0, %v830
    %v832 = vpop.f32.mrf.mxu0
    %v833 = vpop.f32.mrf.mxu0
    %v834 = vadd.f32 0.0, %v833
    %v835 = vpop.f32.mrf.mxu0
    %836 = vmatprep.mubr.bf16.mxu0 0
    %837 = vmatmul.mubr.bf16.gmra.mxu0 %v646
    %v838 = vpop.f32.mrf.mxu0
    %v839 = vadd.f32 0.0, %v838
    %v840 = vpop.f32.mrf.mxu0
    %v841 = vpop.f32.mrf.mxu0
    %v842 = vadd.f32 0.0, %v841
    %v843 = vpop.f32.mrf.mxu0
    %844 = vmatprep.mubr.bf16.mxu0 0
    %845 = vmatmul.mubr.bf16.gmra.mxu0 %v647
    %v846 = vpop.f32.mrf.mxu0
    %v847 = vadd.f32 0.0, %v846
    %v848 = vpop.f32.mrf.mxu0
    %v849 = vpop.f32.mrf.mxu0
    %v850 = vadd.f32 0.0, %v849
    %v851 = vpop.f32.mrf.mxu0
    %852 = vmatprep.mubr.bf16.mxu0 0
    %853 = vmatmul.mubr.bf16.gmra.mxu0 %v648
    %v854 = vpop.f32.mrf.mxu0
    %v855 = vadd.f32 0.0, %v854
    %v856 = vpop.f32.mrf.mxu0
    %v857 = vpop.f32.mrf.mxu0
    %v858 = vadd.f32 0.0, %v857
    %v859 = vpop.f32.mrf.mxu0
    %860 = vmatprep.mubr.bf16.mxu0 0
    %861 = vmatmul.mubr.bf16.gmra.mxu0 %v649
    %v862 = vpop.f32.mrf.mxu0
    %v863 = vadd.f32 0.0, %v862
    %v864 = vpop.f32.mrf.mxu0
    %v865 = vpop.f32.mrf.mxu0
    %v866 = vadd.f32 0.0, %v865
    %v867 = vpop.f32.mrf.mxu0
    %868 = vmatprep.mubr.bf16.mxu0 0
    %869 = vmatmul.mubr.bf16.gmra.mxu0 %v650
    %v870 = vpop.f32.mrf.mxu0
    %v871 = vadd.f32 0.0, %v870
    %v872 = vpop.f32.mrf.mxu0
    %v873 = vpop.f32.mrf.mxu0
    %v874 = vadd.f32 0.0, %v873
    %v875 = vpop.f32.mrf.mxu0
    %876 = vdwg.mxu0
    %v877 = vadd.f32 %v751, %v754
    %v878 = vadd.f32 %v877, %v759
    %v879 = vadd.f32 %v878, %v762
    %v880 = vadd.f32 %v879, %v767
    %v881 = vadd.f32 %v880, %v770
    %v882 = vadd.f32 %v881, %v775
    %v883 = vadd.f32 %v882, %v778
    %v884 = vadd.f32 %v883, %v783
    %v885 = vadd.f32 %v884, %v786
    %v886 = vadd.f32 %v885, %v791
    %v887 = vadd.f32 %v886, %v794
    %v888 = vadd.f32 %v887, %v799
    %v889 = vadd.f32 %v888, %v802
    %v890 = vadd.f32 %v889, %v807
    %v891 = vadd.f32 %v890, %v810
    %v892 = vrot.slane %v891, 4
    %v893 = vadd.f32 %v891, %v892
    %v894 = vrot.slane %v893, 2
    %v895 = vadd.f32 %v893, %v894
    %v896 = vrot.slane %v895, 1
    %v897 = vadd.f32 %v895, %v896
    %v898 = vadd.f32 %v815, %v818
    %v899 = vadd.f32 %v898, %v823
    %v900 = vadd.f32 %v899, %v826
    %v901 = vadd.f32 %v900, %v831
    %v902 = vadd.f32 %v901, %v834
    %v903 = vadd.f32 %v902, %v839
    %v904 = vadd.f32 %v903, %v842
    %v905 = vadd.f32 %v904, %v847
    %v906 = vadd.f32 %v905, %v850
    %v907 = vadd.f32 %v906, %v855
    %v908 = vadd.f32 %v907, %v858
    %v909 = vadd.f32 %v908, %v863
    %v910 = vadd.f32 %v909, %v866
    %v911 = vadd.f32 %v910, %v871
    %v912 = vadd.f32 %v911, %v874
    %v913 = vrot.slane %v912, 4
    %v914 = vadd.f32 %v912, %v913
    %v915 = vrot.slane %v914, 2
    %v916 = vadd.f32 %v914, %v915
    %v917 = vrot.slane %v916, 1
    %v918 = vadd.f32 %v916, %v917
    %v919 = vmul.f32 %v897, 0.0078125
    %v920 = vmul.f32 %v918, 0.0078125
    %v921 = vmul.f32 %v751, %v751
    %v922 = vmul.f32 %v754, %v754
    %v923 = vmul.f32 %v759, %v759
    %v924 = vmul.f32 %v762, %v762
    %v925 = vmul.f32 %v767, %v767
    %v926 = vmul.f32 %v770, %v770
    %v927 = vmul.f32 %v775, %v775
    %v928 = vmul.f32 %v778, %v778
    %v929 = vmul.f32 %v783, %v783
    %v930 = vmul.f32 %v786, %v786
    %v931 = vmul.f32 %v791, %v791
    %v932 = vmul.f32 %v794, %v794
    %v933 = vmul.f32 %v799, %v799
    %v934 = vmul.f32 %v802, %v802
    %v935 = vmul.f32 %v807, %v807
    %v936 = vmul.f32 %v810, %v810
    %v937 = vmul.f32 %v815, %v815
    %v938 = vmul.f32 %v818, %v818
    %v939 = vmul.f32 %v823, %v823
    %v940 = vmul.f32 %v826, %v826
    %v941 = vmul.f32 %v831, %v831
    %v942 = vmul.f32 %v834, %v834
    %v943 = vmul.f32 %v839, %v839
    %v944 = vmul.f32 %v842, %v842
    %v945 = vmul.f32 %v847, %v847
    %v946 = vmul.f32 %v850, %v850
    %v947 = vmul.f32 %v855, %v855
    %v948 = vmul.f32 %v858, %v858
    %v949 = vmul.f32 %v863, %v863
    %v950 = vmul.f32 %v866, %v866
    %v951 = vmul.f32 %v871, %v871
    %v952 = vmul.f32 %v874, %v874
    %v953 = vadd.f32 %v921, %v922
    %v954 = vadd.f32 %v953, %v923
    %v955 = vadd.f32 %v954, %v924
    %v956 = vadd.f32 %v955, %v925
    %v957 = vadd.f32 %v956, %v926
    %v958 = vadd.f32 %v957, %v927
    %v959 = vadd.f32 %v958, %v928
    %v960 = vadd.f32 %v959, %v929
    %v961 = vadd.f32 %v960, %v930
    %v962 = vadd.f32 %v961, %v931
    %v963 = vadd.f32 %v962, %v932
    %v964 = vadd.f32 %v963, %v933
    %v965 = vadd.f32 %v964, %v934
    %v966 = vadd.f32 %v965, %v935
    %v967 = vadd.f32 %v966, %v936
    %v968 = vrot.slane %v967, 4
    %v969 = vadd.f32 %v967, %v968
    %v970 = vrot.slane %v969, 2
    %v971 = vadd.f32 %v969, %v970
    %v972 = vrot.slane %v971, 1
    %v973 = vadd.f32 %v971, %v972
    %v974 = vadd.f32 %v937, %v938
    %v975 = vadd.f32 %v974, %v939
    %v976 = vadd.f32 %v975, %v940
    %v977 = vadd.f32 %v976, %v941
    %v978 = vadd.f32 %v977, %v942
    %v979 = vadd.f32 %v978, %v943
    %v980 = vadd.f32 %v979, %v944
    %v981 = vadd.f32 %v980, %v945
    %v982 = vadd.f32 %v981, %v946
    %v983 = vadd.f32 %v982, %v947
    %v984 = vadd.f32 %v983, %v948
    %v985 = vadd.f32 %v984, %v949
    %v986 = vadd.f32 %v985, %v950
    %v987 = vadd.f32 %v986, %v951
    %v988 = vadd.f32 %v987, %v952
    %v989 = vrot.slane %v988, 4
    %v990 = vadd.f32 %v988, %v989
    %v991 = vrot.slane %v990, 2
    %v992 = vadd.f32 %v990, %v991
    %v993 = vrot.slane %v992, 1
    %v994 = vadd.f32 %v992, %v993
    %v995 = vmul.f32 %v973, 0.0078125
    %v996 = vmul.f32 %v994, 0.0078125
    %v997 = vmul.f32 %v919, %v919
    %v998 = vmul.f32 %v920, %v920
    %v999 = vsub.f32 %v995, %v997
    %v1000 = vsub.f32 %v996, %v998
    %v1001 = vmax.f32 %v999, 0.0
    %v1002 = vmax.f32 %v1000, 0.0
    %v1003 = vadd.f32 %v1001, 1e-05
    %v1004 = vadd.f32 %v1002, 1e-05
    %v1005 = vrsqrt.pop %v1003
    %v1006 = vrsqrt.pop %v1004
    %v1007 = vmul.f32 %v29, %v1005
    %v1008 = vmul.f32 %v29, %v1006
    %v1009 = vmul.f32 %v919, %v1007
    %v1010 = vmul.f32 %v920, %v1008
    %v1011 = vsub.f32 %v30, %v1009
    %v1012 = vsub.f32 %v30, %v1010
    %v1013 = vlaneseq
    %v1014 = vshrl.u32 %v1013, 7
    %v1015 = vsub.s32 0, %v1014
    %v1016 = vrot.slane %v1007, %v1015
    %v1017 = vlaneseq
    %v1018 = vshrl.u32 %v1017, 7
    %v1019 = vsub.s32 0, %v1018
    %v1020 = vrot.slane %v1008, %v1019
    %v1021 = vmul.f32 %v751, %v1016
    %v1022 = vmul.f32 %v754, %v1016
    %v1023 = vmul.f32 %v759, %v1016
    %v1024 = vmul.f32 %v762, %v1016
    %v1025 = vmul.f32 %v767, %v1016
    %v1026 = vmul.f32 %v770, %v1016
    %v1027 = vmul.f32 %v775, %v1016
    %v1028 = vmul.f32 %v778, %v1016
    %v1029 = vmul.f32 %v783, %v1016
    %v1030 = vmul.f32 %v786, %v1016
    %v1031 = vmul.f32 %v791, %v1016
    %v1032 = vmul.f32 %v794, %v1016
    %v1033 = vmul.f32 %v799, %v1016
    %v1034 = vmul.f32 %v802, %v1016
    %v1035 = vmul.f32 %v807, %v1016
    %v1036 = vmul.f32 %v810, %v1016
    %v1037 = vmul.f32 %v815, %v1020
    %v1038 = vmul.f32 %v818, %v1020
    %v1039 = vmul.f32 %v823, %v1020
    %v1040 = vmul.f32 %v826, %v1020
    %v1041 = vmul.f32 %v831, %v1020
    %v1042 = vmul.f32 %v834, %v1020
    %v1043 = vmul.f32 %v839, %v1020
    %v1044 = vmul.f32 %v842, %v1020
    %v1045 = vmul.f32 %v847, %v1020
    %v1046 = vmul.f32 %v850, %v1020
    %v1047 = vmul.f32 %v855, %v1020
    %v1048 = vmul.f32 %v858, %v1020
    %v1049 = vmul.f32 %v863, %v1020
    %v1050 = vmul.f32 %v866, %v1020
    %v1051 = vmul.f32 %v871, %v1020
    %v1052 = vmul.f32 %v874, %v1020
    %v1053 = vlaneseq
    %v1054 = vshrl.u32 %v1053, 7
    %v1055 = vsub.s32 0, %v1054
    %v1056 = vrot.slane %v1011, %v1055
    %v1057 = vlaneseq
    %v1058 = vshrl.u32 %v1057, 7
    %v1059 = vsub.s32 0, %v1058
    %v1060 = vrot.slane %v1012, %v1059
    %v1061 = vadd.f32 %v1021, %v1056
    %v1062 = vadd.f32 %v1022, %v1056
    %v1063 = vadd.f32 %v1023, %v1056
    %v1064 = vadd.f32 %v1024, %v1056
    %v1065 = vadd.f32 %v1025, %v1056
    %v1066 = vadd.f32 %v1026, %v1056
    %v1067 = vadd.f32 %v1027, %v1056
    %v1068 = vadd.f32 %v1028, %v1056
    %v1069 = vadd.f32 %v1029, %v1056
    %v1070 = vadd.f32 %v1030, %v1056
    %v1071 = vadd.f32 %v1031, %v1056
    %v1072 = vadd.f32 %v1032, %v1056
    %v1073 = vadd.f32 %v1033, %v1056
    %v1074 = vadd.f32 %v1034, %v1056
    %v1075 = vadd.f32 %v1035, %v1056
    %v1076 = vadd.f32 %v1036, %v1056
    %v1077 = vadd.f32 %v1037, %v1060
    %v1078 = vadd.f32 %v1038, %v1060
    %v1079 = vadd.f32 %v1039, %v1060
    %v1080 = vadd.f32 %v1040, %v1060
    %v1081 = vadd.f32 %v1041, %v1060
    %v1082 = vadd.f32 %v1042, %v1060
    %v1083 = vadd.f32 %v1043, %v1060
    %v1084 = vadd.f32 %v1044, %v1060
    %v1085 = vadd.f32 %v1045, %v1060
    %v1086 = vadd.f32 %v1046, %v1060
    %v1087 = vadd.f32 %v1047, %v1060
    %v1088 = vadd.f32 %v1048, %v1060
    %v1089 = vadd.f32 %v1049, %v1060
    %v1090 = vadd.f32 %v1050, %v1060
    %v1091 = vadd.f32 %v1051, %v1060
    %v1092 = vadd.f32 %v1052, %v1060
    %v1093 = vmax.f32 %v1061, 0.0
    %v1094 = vmax.f32 %v1062, 0.0
    %v1095 = vmax.f32 %v1063, 0.0
    %v1096 = vmax.f32 %v1064, 0.0
    %v1097 = vmax.f32 %v1065, 0.0
    %v1098 = vmax.f32 %v1066, 0.0
    %v1099 = vmax.f32 %v1067, 0.0
    %v1100 = vmax.f32 %v1068, 0.0
    %v1101 = vmax.f32 %v1069, 0.0
    %v1102 = vmax.f32 %v1070, 0.0
    %v1103 = vmax.f32 %v1071, 0.0
    %v1104 = vmax.f32 %v1072, 0.0
    %v1105 = vmax.f32 %v1073, 0.0
    %v1106 = vmax.f32 %v1074, 0.0
    %v1107 = vmax.f32 %v1075, 0.0
    %v1108 = vmax.f32 %v1076, 0.0
    %v1109 = vmax.f32 %v1077, 0.0
    %v1110 = vmax.f32 %v1078, 0.0
    %v1111 = vmax.f32 %v1079, 0.0
    %v1112 = vmax.f32 %v1080, 0.0
    %v1113 = vmax.f32 %v1081, 0.0
    %v1114 = vmax.f32 %v1082, 0.0
    %v1115 = vmax.f32 %v1083, 0.0
    %v1116 = vmax.f32 %v1084, 0.0
    %v1117 = vmax.f32 %v1085, 0.0
    %v1118 = vmax.f32 %v1086, 0.0
    %v1119 = vmax.f32 %v1087, 0.0
    %v1120 = vmax.f32 %v1088, 0.0
    %v1121 = vmax.f32 %v1089, 0.0
    %v1122 = vmax.f32 %v1090, 0.0
    %v1123 = vmax.f32 %v1091, 0.0
    %v1124 = vmax.f32 %v1092, 0.0
    %v1125 = vpack.c.bf16 %v1094, %v1093
    %v1126 = vpack.c.bf16 %v1096, %v1095
    %v1127 = vpack.c.bf16 %v1098, %v1097
    %v1128 = vpack.c.bf16 %v1100, %v1099
    %v1129 = vpack.c.bf16 %v1102, %v1101
    %v1130 = vpack.c.bf16 %v1104, %v1103
    %v1131 = vpack.c.bf16 %v1106, %v1105
    %v1132 = vpack.c.bf16 %v1108, %v1107
    %v1133 = vpack.c.bf16 %v1110, %v1109
    %v1134 = vpack.c.bf16 %v1112, %v1111
    %v1135 = vpack.c.bf16 %v1114, %v1113
    %v1136 = vpack.c.bf16 %v1116, %v1115
    %v1137 = vpack.c.bf16 %v1118, %v1117
    %v1138 = vpack.c.bf16 %v1120, %v1119
    %v1139 = vpack.c.bf16 %v1122, %v1121
    %v1140 = vpack.c.bf16 %v1124, %v1123
    %s1141 = scalar_lea.vmem [#allocation2], 128
    %v1142 = vld [vmem:[%s1141] sm:$0xf]
    %v1143 = vld [vmem:[%s1141 + $0x4] sm:$0xf]
    %v1144 = vld [vmem:[%s1141 + $0x8] sm:$0xf]
    %v1145 = vld [vmem:[%s1141 + $0xc] sm:$0xf]
    %v1146 = vld [vmem:[%s1141 + $0x10] sm:$0xf]
    %v1147 = vld [vmem:[%s1141 + $0x14] sm:$0xf]
    %v1148 = vld [vmem:[%s1141 + $0x18] sm:$0xf]
    %v1149 = vld [vmem:[%s1141 + $0x1c] sm:$0xf]
    %v1150 = vld [vmem:[%s1141 + $0x20] sm:$0xf]
    %v1151 = vld [vmem:[%s1141 + $0x24] sm:$0xf]
    %v1152 = vld [vmem:[%s1141 + $0x28] sm:$0xf]
    %v1153 = vld [vmem:[%s1141 + $0x2c] sm:$0xf]
    %v1154 = vld [vmem:[%s1141 + $0x30] sm:$0xf]
    %v1155 = vld [vmem:[%s1141 + $0x34] sm:$0xf]
    %v1156 = vld [vmem:[%s1141 + $0x38] sm:$0xf]
    %v1157 = vld [vmem:[%s1141 + $0x3c] sm:$0xf]
    %v1174 = vunpack.c.l.b16 %v1142
    %v1175 = vunpack.c.l.b16 %v1143
    %v1176 = vunpack.c.l.b16 %v1144
    %v1177 = vunpack.c.l.b16 %v1145
    %v1178 = vunpack.c.l.b16 %v1146
    %v1179 = vunpack.c.l.b16 %v1147
    %v1180 = vunpack.c.l.b16 %v1148
    %v1181 = vunpack.c.l.b16 %v1149
    %v1182 = vunpack.c.l.b16 %v1150
    %v1183 = vunpack.c.l.b16 %v1151
    %v1184 = vunpack.c.l.b16 %v1152
    %v1185 = vunpack.c.l.b16 %v1153
    %v1186 = vunpack.c.l.b16 %v1154
    %v1187 = vunpack.c.l.b16 %v1155
    %v1188 = vunpack.c.l.b16 %v1156
    %v1189 = vunpack.c.l.b16 %v1157
    %v1190 = vpack.c.b16 %v1175, %v1174
    %v1191 = vpack.c.b16 %v1177, %v1176
    %v1192 = vpack.c.b16 %v1179, %v1178
    %v1193 = vpack.c.b16 %v1181, %v1180
    %v1194 = vpack.c.b16 %v1183, %v1182
    %v1195 = vpack.c.b16 %v1185, %v1184
    %v1196 = vpack.c.b16 %v1187, %v1186
    %v1197 = vpack.c.b16 %v1189, %v1188
    %1206 = vmatprep.subr.bf16.mxu0 0
    %1207 = vmatpush1.bf16.msra.mxu0 %v1197
    %1208 = vmatprep.subr.bf16.mxu0 0
    %1209 = vmatpush1.bf16.msra.mxu0 %v1196
    %1210 = vmatprep.subr.bf16.mxu0 0
    %1211 = vmatpush1.bf16.msra.mxu0 %v1195
    %1212 = vmatprep.subr.bf16.mxu0 0
    %1213 = vmatpush1.bf16.msra.mxu0 %v1194
    %1214 = vmatprep.subr.bf16.mxu0 0
    %1215 = vmatpush1.bf16.msra.mxu0 %v1193
    %1216 = vmatprep.subr.bf16.mxu0 0
    %1217 = vmatpush1.bf16.msra.mxu0 %v1192
    %1218 = vmatprep.subr.bf16.mxu0 0
    %1219 = vmatpush1.bf16.msra.mxu0 %v1191
    %1220 = vmatprep.subr.bf16.mxu0 0
    %1221 = vmatpush1.bf16.msra.mxu0 %v1190
    %1222 = vmatprep.subr.bf16.mxu0 0
    %1223 = vmatpush2.bf16.msra.mxu0 0
    %1224 = vmatprep.subr.bf16.mxu0 0
    %1225 = vmatpush2.bf16.msra.mxu0 0
    %1226 = vmatprep.subr.bf16.mxu0 0
    %1227 = vmatpush2.bf16.msra.mxu0 0
    %1228 = vmatprep.subr.bf16.mxu0 0
    %1229 = vmatpush2.bf16.msra.mxu0 0
    %1230 = vmatprep.subr.bf16.mxu0 0
    %1231 = vmatpush2.bf16.msra.mxu0 0
    %1232 = vmatprep.subr.bf16.mxu0 0
    %1233 = vmatpush2.bf16.msra.mxu0 0
    %1234 = vmatprep.subr.bf16.mxu0 0
    %1235 = vmatpush2.bf16.msra.mxu0 0
    %1236 = vmatprep.subr.bf16.mxu0 0
    %1237 = vmatpush2.bf16.msra.mxu0 0
    %1238 = vmatprep.mubr.bf16.mxu0 0
    %1239 = vmatmul.mubr.bf16.gmra.mxu0 %v1125
    %v1240 = vpop.f32.mrf.mxu0
    %v1241 = vadd.f32 0.0, %v1240
    %v1242 = vpop.f32.mrf.mxu0
    %v1243 = vpop.f32.mrf.mxu0
    %v1244 = vadd.f32 0.0, %v1243
    %v1245 = vpop.f32.mrf.mxu0
    %1246 = vmatprep.mubr.bf16.mxu0 0
    %1247 = vmatmul.mubr.bf16.gmra.mxu0 %v1126
    %v1248 = vpop.f32.mrf.mxu0
    %v1249 = vadd.f32 0.0, %v1248
    %v1250 = vpop.f32.mrf.mxu0
    %v1251 = vpop.f32.mrf.mxu0
    %v1252 = vadd.f32 0.0, %v1251
    %v1253 = vpop.f32.mrf.mxu0
    %1254 = vmatprep.mubr.bf16.mxu0 0
    %1255 = vmatmul.mubr.bf16.gmra.mxu0 %v1127
    %v1256 = vpop.f32.mrf.mxu0
    %v1257 = vadd.f32 0.0, %v1256
    %v1258 = vpop.f32.mrf.mxu0
    %v1259 = vpop.f32.mrf.mxu0
    %v1260 = vadd.f32 0.0, %v1259
    %v1261 = vpop.f32.mrf.mxu0
    %1262 = vmatprep.mubr.bf16.mxu0 0
    %1263 = vmatmul.mubr.bf16.gmra.mxu0 %v1128
    %v1264 = vpop.f32.mrf.mxu0
    %v1265 = vadd.f32 0.0, %v1264
    %v1266 = vpop.f32.mrf.mxu0
    %v1267 = vpop.f32.mrf.mxu0
    %v1268 = vadd.f32 0.0, %v1267
    %v1269 = vpop.f32.mrf.mxu0
    %1270 = vmatprep.mubr.bf16.mxu0 0
    %1271 = vmatmul.mubr.bf16.gmra.mxu0 %v1129
    %v1272 = vpop.f32.mrf.mxu0
    %v1273 = vadd.f32 0.0, %v1272
    %v1274 = vpop.f32.mrf.mxu0
    %v1275 = vpop.f32.mrf.mxu0
    %v1276 = vadd.f32 0.0, %v1275
    %v1277 = vpop.f32.mrf.mxu0
    %1278 = vmatprep.mubr.bf16.mxu0 0
    %1279 = vmatmul.mubr.bf16.gmra.mxu0 %v1130
    %v1280 = vpop.f32.mrf.mxu0
    %v1281 = vadd.f32 0.0, %v1280
    %v1282 = vpop.f32.mrf.mxu0
    %v1283 = vpop.f32.mrf.mxu0
    %v1284 = vadd.f32 0.0, %v1283
    %v1285 = vpop.f32.mrf.mxu0
    %1286 = vmatprep.mubr.bf16.mxu0 0
    %1287 = vmatmul.mubr.bf16.gmra.mxu0 %v1131
    %v1288 = vpop.f32.mrf.mxu0
    %v1289 = vadd.f32 0.0, %v1288
    %v1290 = vpop.f32.mrf.mxu0
    %v1291 = vpop.f32.mrf.mxu0
    %v1292 = vadd.f32 0.0, %v1291
    %v1293 = vpop.f32.mrf.mxu0
    %1294 = vmatprep.mubr.bf16.mxu0 0
    %1295 = vmatmul.mubr.bf16.gmra.mxu0 %v1132
    %v1296 = vpop.f32.mrf.mxu0
    %v1297 = vadd.f32 0.0, %v1296
    %v1298 = vpop.f32.mrf.mxu0
    %v1299 = vpop.f32.mrf.mxu0
    %v1300 = vadd.f32 0.0, %v1299
    %v1301 = vpop.f32.mrf.mxu0
    %1302 = vmatprep.mubr.bf16.mxu0 0
    %1303 = vmatmul.mubr.bf16.gmra.mxu0 %v1133
    %v1304 = vpop.f32.mrf.mxu0
    %v1305 = vadd.f32 0.0, %v1304
    %v1306 = vpop.f32.mrf.mxu0
    %v1307 = vpop.f32.mrf.mxu0
    %v1308 = vadd.f32 0.0, %v1307
    %v1309 = vpop.f32.mrf.mxu0
    %1310 = vmatprep.mubr.bf16.mxu0 0
    %1311 = vmatmul.mubr.bf16.gmra.mxu0 %v1134
    %v1312 = vpop.f32.mrf.mxu0
    %v1313 = vadd.f32 0.0, %v1312
    %v1314 = vpop.f32.mrf.mxu0
    %v1315 = vpop.f32.mrf.mxu0
    %v1316 = vadd.f32 0.0, %v1315
    %v1317 = vpop.f32.mrf.mxu0
    %1318 = vmatprep.mubr.bf16.mxu0 0
    %1319 = vmatmul.mubr.bf16.gmra.mxu0 %v1135
    %v1320 = vpop.f32.mrf.mxu0
    %v1321 = vadd.f32 0.0, %v1320
    %v1322 = vpop.f32.mrf.mxu0
    %v1323 = vpop.f32.mrf.mxu0
    %v1324 = vadd.f32 0.0, %v1323
    %v1325 = vpop.f32.mrf.mxu0
    %1326 = vmatprep.mubr.bf16.mxu0 0
    %1327 = vmatmul.mubr.bf16.gmra.mxu0 %v1136
    %v1328 = vpop.f32.mrf.mxu0
    %v1329 = vadd.f32 0.0, %v1328
    %v1330 = vpop.f32.mrf.mxu0
    %v1331 = vpop.f32.mrf.mxu0
    %v1332 = vadd.f32 0.0, %v1331
    %v1333 = vpop.f32.mrf.mxu0
    %1334 = vmatprep.mubr.bf16.mxu0 0
    %1335 = vmatmul.mubr.bf16.gmra.mxu0 %v1137
    %v1336 = vpop.f32.mrf.mxu0
    %v1337 = vadd.f32 0.0, %v1336
    %v1338 = vpop.f32.mrf.mxu0
    %v1339 = vpop.f32.mrf.mxu0
    %v1340 = vadd.f32 0.0, %v1339
    %v1341 = vpop.f32.mrf.mxu0
    %1342 = vmatprep.mubr.bf16.mxu0 0
    %1343 = vmatmul.mubr.bf16.gmra.mxu0 %v1138
    %v1344 = vpop.f32.mrf.mxu0
    %v1345 = vadd.f32 0.0, %v1344
    %v1346 = vpop.f32.mrf.mxu0
    %v1347 = vpop.f32.mrf.mxu0
    %v1348 = vadd.f32 0.0, %v1347
    %v1349 = vpop.f32.mrf.mxu0
    %1350 = vmatprep.mubr.bf16.mxu0 0
    %1351 = vmatmul.mubr.bf16.gmra.mxu0 %v1139
    %v1352 = vpop.f32.mrf.mxu0
    %v1353 = vadd.f32 0.0, %v1352
    %v1354 = vpop.f32.mrf.mxu0
    %v1355 = vpop.f32.mrf.mxu0
    %v1356 = vadd.f32 0.0, %v1355
    %v1357 = vpop.f32.mrf.mxu0
    %1358 = vmatprep.mubr.bf16.mxu0 0
    %1359 = vmatmul.mubr.bf16.gmra.mxu0 %v1140
    %v1360 = vpop.f32.mrf.mxu0
    %v1361 = vadd.f32 0.0, %v1360
    %v1362 = vpop.f32.mrf.mxu0
    %v1363 = vpop.f32.mrf.mxu0
    %v1364 = vadd.f32 0.0, %v1363
    %v1365 = vpop.f32.mrf.mxu0
    %1366 = vdwg.mxu0
    %v1367 = vadd.f32 %v1241, %v1244
    %v1368 = vadd.f32 %v1367, %v1249
    %v1369 = vadd.f32 %v1368, %v1252
    %v1370 = vadd.f32 %v1369, %v1257
    %v1371 = vadd.f32 %v1370, %v1260
    %v1372 = vadd.f32 %v1371, %v1265
    %v1373 = vadd.f32 %v1372, %v1268
    %v1374 = vadd.f32 %v1373, %v1273
    %v1375 = vadd.f32 %v1374, %v1276
    %v1376 = vadd.f32 %v1375, %v1281
    %v1377 = vadd.f32 %v1376, %v1284
    %v1378 = vadd.f32 %v1377, %v1289
    %v1379 = vadd.f32 %v1378, %v1292
    %v1380 = vadd.f32 %v1379, %v1297
    %v1381 = vadd.f32 %v1380, %v1300
    %v1382 = vrot.slane %v1381, 4
    %v1383 = vadd.f32 %v1381, %v1382
    %v1384 = vrot.slane %v1383, 2
    %v1385 = vadd.f32 %v1383, %v1384
    %v1386 = vrot.slane %v1385, 1
    %v1387 = vadd.f32 %v1385, %v1386
    %v1388 = vadd.f32 %v1305, %v1308
    %v1389 = vadd.f32 %v1388, %v1313
    %v1390 = vadd.f32 %v1389, %v1316
    %v1391 = vadd.f32 %v1390, %v1321
    %v1392 = vadd.f32 %v1391, %v1324
    %v1393 = vadd.f32 %v1392, %v1329
    %v1394 = vadd.f32 %v1393, %v1332
    %v1395 = vadd.f32 %v1394, %v1337
    %v1396 = vadd.f32 %v1395, %v1340
    %v1397 = vadd.f32 %v1396, %v1345
    %v1398 = vadd.f32 %v1397, %v1348
    %v1399 = vadd.f32 %v1398, %v1353
    %v1400 = vadd.f32 %v1399, %v1356
    %v1401 = vadd.f32 %v1400, %v1361
    %v1402 = vadd.f32 %v1401, %v1364
    %v1403 = vrot.slane %v1402, 4
    %v1404 = vadd.f32 %v1402, %v1403
    %v1405 = vrot.slane %v1404, 2
    %v1406 = vadd.f32 %v1404, %v1405
    %v1407 = vrot.slane %v1406, 1
    %v1408 = vadd.f32 %v1406, %v1407
    %v1409 = vmul.f32 %v1387, 0.0078125
    %v1410 = vmul.f32 %v1408, 0.0078125
    %v1411 = vmul.f32 %v1241, %v1241
    %v1412 = vmul.f32 %v1244, %v1244
    %v1413 = vmul.f32 %v1249, %v1249
    %v1414 = vmul.f32 %v1252, %v1252
    %v1415 = vmul.f32 %v1257, %v1257
    %v1416 = vmul.f32 %v1260, %v1260
    %v1417 = vmul.f32 %v1265, %v1265
    %v1418 = vmul.f32 %v1268, %v1268
    %v1419 = vmul.f32 %v1273, %v1273
    %v1420 = vmul.f32 %v1276, %v1276
    %v1421 = vmul.f32 %v1281, %v1281
    %v1422 = vmul.f32 %v1284, %v1284
    %v1423 = vmul.f32 %v1289, %v1289
    %v1424 = vmul.f32 %v1292, %v1292
    %v1425 = vmul.f32 %v1297, %v1297
    %v1426 = vmul.f32 %v1300, %v1300
    %v1427 = vmul.f32 %v1305, %v1305
    %v1428 = vmul.f32 %v1308, %v1308
    %v1429 = vmul.f32 %v1313, %v1313
    %v1430 = vmul.f32 %v1316, %v1316
    %v1431 = vmul.f32 %v1321, %v1321
    %v1432 = vmul.f32 %v1324, %v1324
    %v1433 = vmul.f32 %v1329, %v1329
    %v1434 = vmul.f32 %v1332, %v1332
    %v1435 = vmul.f32 %v1337, %v1337
    %v1436 = vmul.f32 %v1340, %v1340
    %v1437 = vmul.f32 %v1345, %v1345
    %v1438 = vmul.f32 %v1348, %v1348
    %v1439 = vmul.f32 %v1353, %v1353
    %v1440 = vmul.f32 %v1356, %v1356
    %v1441 = vmul.f32 %v1361, %v1361
    %v1442 = vmul.f32 %v1364, %v1364
    %v1443 = vadd.f32 %v1411, %v1412
    %v1444 = vadd.f32 %v1443, %v1413
    %v1445 = vadd.f32 %v1444, %v1414
    %v1446 = vadd.f32 %v1445, %v1415
    %v1447 = vadd.f32 %v1446, %v1416
    %v1448 = vadd.f32 %v1447, %v1417
    %v1449 = vadd.f32 %v1448, %v1418
    %v1450 = vadd.f32 %v1449, %v1419
    %v1451 = vadd.f32 %v1450, %v1420
    %v1452 = vadd.f32 %v1451, %v1421
    %v1453 = vadd.f32 %v1452, %v1422
    %v1454 = vadd.f32 %v1453, %v1423
    %v1455 = vadd.f32 %v1454, %v1424
    %v1456 = vadd.f32 %v1455, %v1425
    %v1457 = vadd.f32 %v1456, %v1426
    %v1458 = vrot.slane %v1457, 4
    %v1459 = vadd.f32 %v1457, %v1458
    %v1460 = vrot.slane %v1459, 2
    %v1461 = vadd.f32 %v1459, %v1460
    %v1462 = vrot.slane %v1461, 1
    %v1463 = vadd.f32 %v1461, %v1462
    %v1464 = vadd.f32 %v1427, %v1428
    %v1465 = vadd.f32 %v1464, %v1429
    %v1466 = vadd.f32 %v1465, %v1430
    %v1467 = vadd.f32 %v1466, %v1431
    %v1468 = vadd.f32 %v1467, %v1432
    %v1469 = vadd.f32 %v1468, %v1433
    %v1470 = vadd.f32 %v1469, %v1434
    %v1471 = vadd.f32 %v1470, %v1435
    %v1472 = vadd.f32 %v1471, %v1436
    %v1473 = vadd.f32 %v1472, %v1437
    %v1474 = vadd.f32 %v1473, %v1438
    %v1475 = vadd.f32 %v1474, %v1439
    %v1476 = vadd.f32 %v1475, %v1440
    %v1477 = vadd.f32 %v1476, %v1441
    %v1478 = vadd.f32 %v1477, %v1442
    %v1479 = vrot.slane %v1478, 4
    %v1480 = vadd.f32 %v1478, %v1479
    %v1481 = vrot.slane %v1480, 2
    %v1482 = vadd.f32 %v1480, %v1481
    %v1483 = vrot.slane %v1482, 1
    %v1484 = vadd.f32 %v1482, %v1483
    %v1485 = vmul.f32 %v1463, 0.0078125
    %v1486 = vmul.f32 %v1484, 0.0078125
    %v1487 = vmul.f32 %v1409, %v1409
    %v1488 = vmul.f32 %v1410, %v1410
    %v1489 = vsub.f32 %v1485, %v1487
    %v1490 = vsub.f32 %v1486, %v1488
    %v1491 = vmax.f32 %v1489, 0.0
    %v1492 = vmax.f32 %v1490, 0.0
    %v1493 = vadd.f32 %v1491, 1e-05
    %v1494 = vadd.f32 %v1492, 1e-05
    %v1495 = vrsqrt.pop %v1493
    %v1496 = vrsqrt.pop %v1494
    %v1497 = vmul.f32 %v29, %v1495
    %v1498 = vmul.f32 %v29, %v1496
    %v1499 = vmul.f32 %v1409, %v1497
    %v1500 = vmul.f32 %v1410, %v1498
    %v1501 = vsub.f32 %v30, %v1499
    %v1502 = vsub.f32 %v30, %v1500
    %v1503 = vlaneseq
    %v1504 = vshrl.u32 %v1503, 7
    %v1505 = vsub.s32 0, %v1504
    %v1506 = vrot.slane %v1497, %v1505
    %v1507 = vlaneseq
    %v1508 = vshrl.u32 %v1507, 7
    %v1509 = vsub.s32 0, %v1508
    %v1510 = vrot.slane %v1498, %v1509
    %v1511 = vmul.f32 %v1241, %v1506
    %v1512 = vmul.f32 %v1244, %v1506
    %v1513 = vmul.f32 %v1249, %v1506
    %v1514 = vmul.f32 %v1252, %v1506
    %v1515 = vmul.f32 %v1257, %v1506
    %v1516 = vmul.f32 %v1260, %v1506
    %v1517 = vmul.f32 %v1265, %v1506
    %v1518 = vmul.f32 %v1268, %v1506
    %v1519 = vmul.f32 %v1273, %v1506
    %v1520 = vmul.f32 %v1276, %v1506
    %v1521 = vmul.f32 %v1281, %v1506
    %v1522 = vmul.f32 %v1284, %v1506
    %v1523 = vmul.f32 %v1289, %v1506
    %v1524 = vmul.f32 %v1292, %v1506
    %v1525 = vmul.f32 %v1297, %v1506
    %v1526 = vmul.f32 %v1300, %v1506
    %v1527 = vmul.f32 %v1305, %v1510
    %v1528 = vmul.f32 %v1308, %v1510
    %v1529 = vmul.f32 %v1313, %v1510
    %v1530 = vmul.f32 %v1316, %v1510
    %v1531 = vmul.f32 %v1321, %v1510
    %v1532 = vmul.f32 %v1324, %v1510
    %v1533 = vmul.f32 %v1329, %v1510
    %v1534 = vmul.f32 %v1332, %v1510
    %v1535 = vmul.f32 %v1337, %v1510
    %v1536 = vmul.f32 %v1340, %v1510
    %v1537 = vmul.f32 %v1345, %v1510
    %v1538 = vmul.f32 %v1348, %v1510
    %v1539 = vmul.f32 %v1353, %v1510
    %v1540 = vmul.f32 %v1356, %v1510
    %v1541 = vmul.f32 %v1361, %v1510
    %v1542 = vmul.f32 %v1364, %v1510
    %v1543 = vlaneseq
    %v1544 = vshrl.u32 %v1543, 7
    %v1545 = vsub.s32 0, %v1544
    %v1546 = vrot.slane %v1501, %v1545
    %v1547 = vlaneseq
    %v1548 = vshrl.u32 %v1547, 7
    %v1549 = vsub.s32 0, %v1548
    %v1550 = vrot.slane %v1502, %v1549
    %v1551 = vadd.f32 %v1511, %v1546
    %v1552 = vadd.f32 %v1512, %v1546
    %v1553 = vadd.f32 %v1513, %v1546
    %v1554 = vadd.f32 %v1514, %v1546
    %v1555 = vadd.f32 %v1515, %v1546
    %v1556 = vadd.f32 %v1516, %v1546
    %v1557 = vadd.f32 %v1517, %v1546
    %v1558 = vadd.f32 %v1518, %v1546
    %v1559 = vadd.f32 %v1519, %v1546
    %v1560 = vadd.f32 %v1520, %v1546
    %v1561 = vadd.f32 %v1521, %v1546
    %v1562 = vadd.f32 %v1522, %v1546
    %v1563 = vadd.f32 %v1523, %v1546
    %v1564 = vadd.f32 %v1524, %v1546
    %v1565 = vadd.f32 %v1525, %v1546
    %v1566 = vadd.f32 %v1526, %v1546
    %v1567 = vadd.f32 %v1527, %v1550
    %v1568 = vadd.f32 %v1528, %v1550
    %v1569 = vadd.f32 %v1529, %v1550
    %v1570 = vadd.f32 %v1530, %v1550
    %v1571 = vadd.f32 %v1531, %v1550
    %v1572 = vadd.f32 %v1532, %v1550
    %v1573 = vadd.f32 %v1533, %v1550
    %v1574 = vadd.f32 %v1534, %v1550
    %v1575 = vadd.f32 %v1535, %v1550
    %v1576 = vadd.f32 %v1536, %v1550
    %v1577 = vadd.f32 %v1537, %v1550
    %v1578 = vadd.f32 %v1538, %v1550
    %v1579 = vadd.f32 %v1539, %v1550
    %v1580 = vadd.f32 %v1540, %v1550
    %v1581 = vadd.f32 %v1541, %v1550
    %v1582 = vadd.f32 %v1542, %v1550
    %v1583 = vmax.f32 %v1551, 0.0
    %v1584 = vmax.f32 %v1552, 0.0
    %v1585 = vmax.f32 %v1553, 0.0
    %v1586 = vmax.f32 %v1554, 0.0
    %v1587 = vmax.f32 %v1555, 0.0
    %v1588 = vmax.f32 %v1556, 0.0
    %v1589 = vmax.f32 %v1557, 0.0
    %v1590 = vmax.f32 %v1558, 0.0
    %v1591 = vmax.f32 %v1559, 0.0
    %v1592 = vmax.f32 %v1560, 0.0
    %v1593 = vmax.f32 %v1561, 0.0
    %v1594 = vmax.f32 %v1562, 0.0
    %v1595 = vmax.f32 %v1563, 0.0
    %v1596 = vmax.f32 %v1564, 0.0
    %v1597 = vmax.f32 %v1565, 0.0
    %v1598 = vmax.f32 %v1566, 0.0
    %v1599 = vmax.f32 %v1567, 0.0
    %v1600 = vmax.f32 %v1568, 0.0
    %v1601 = vmax.f32 %v1569, 0.0
    %v1602 = vmax.f32 %v1570, 0.0
    %v1603 = vmax.f32 %v1571, 0.0
    %v1604 = vmax.f32 %v1572, 0.0
    %v1605 = vmax.f32 %v1573, 0.0
    %v1606 = vmax.f32 %v1574, 0.0
    %v1607 = vmax.f32 %v1575, 0.0
    %v1608 = vmax.f32 %v1576, 0.0
    %v1609 = vmax.f32 %v1577, 0.0
    %v1610 = vmax.f32 %v1578, 0.0
    %v1611 = vmax.f32 %v1579, 0.0
    %v1612 = vmax.f32 %v1580, 0.0
    %v1613 = vmax.f32 %v1581, 0.0
    %v1614 = vmax.f32 %v1582, 0.0
    %v1615 = vpack.c.bf16 %v1584, %v1583
    %v1616 = vpack.c.bf16 %v1586, %v1585
    %v1617 = vpack.c.bf16 %v1588, %v1587
    %v1618 = vpack.c.bf16 %v1590, %v1589
    %v1619 = vpack.c.bf16 %v1592, %v1591
    %v1620 = vpack.c.bf16 %v1594, %v1593
    %v1621 = vpack.c.bf16 %v1596, %v1595
    %v1622 = vpack.c.bf16 %v1598, %v1597
    %v1623 = vpack.c.bf16 %v1600, %v1599
    %v1624 = vpack.c.bf16 %v1602, %v1601
    %v1625 = vpack.c.bf16 %v1604, %v1603
    %v1626 = vpack.c.bf16 %v1606, %v1605
    %v1627 = vpack.c.bf16 %v1608, %v1607
    %v1628 = vpack.c.bf16 %v1610, %v1609
    %v1629 = vpack.c.bf16 %v1612, %v1611
    %v1630 = vpack.c.bf16 %v1614, %v1613
    %s1631 = scalar_lea.vmem [#allocation2], 192
    %v1632 = vld [vmem:[%s1631] sm:$0xf]
    %v1633 = vld [vmem:[%s1631 + $0x4] sm:$0xf]
    %v1634 = vld [vmem:[%s1631 + $0x8] sm:$0xf]
    %v1635 = vld [vmem:[%s1631 + $0xc] sm:$0xf]
    %v1636 = vld [vmem:[%s1631 + $0x10] sm:$0xf]
    %v1637 = vld [vmem:[%s1631 + $0x14] sm:$0xf]
    %v1638 = vld [vmem:[%s1631 + $0x18] sm:$0xf]
    %v1639 = vld [vmem:[%s1631 + $0x1c] sm:$0xf]
    %v1640 = vld [vmem:[%s1631 + $0x20] sm:$0xf]
    %v1641 = vld [vmem:[%s1631 + $0x24] sm:$0xf]
    %v1642 = vld [vmem:[%s1631 + $0x28] sm:$0xf]
    %v1643 = vld [vmem:[%s1631 + $0x2c] sm:$0xf]
    %v1644 = vld [vmem:[%s1631 + $0x30] sm:$0xf]
    %v1645 = vld [vmem:[%s1631 + $0x34] sm:$0xf]
    %v1646 = vld [vmem:[%s1631 + $0x38] sm:$0xf]
    %v1647 = vld [vmem:[%s1631 + $0x3c] sm:$0xf]
    %v1664 = vunpack.c.l.b16 %v1632
    %v1665 = vunpack.c.l.b16 %v1633
    %v1666 = vunpack.c.l.b16 %v1634
    %v1667 = vunpack.c.l.b16 %v1635
    %v1668 = vunpack.c.l.b16 %v1636
    %v1669 = vunpack.c.l.b16 %v1637
    %v1670 = vunpack.c.l.b16 %v1638
    %v1671 = vunpack.c.l.b16 %v1639
    %v1672 = vunpack.c.l.b16 %v1640
    %v1673 = vunpack.c.l.b16 %v1641
    %v1674 = vunpack.c.l.b16 %v1642
    %v1675 = vunpack.c.l.b16 %v1643
    %v1676 = vunpack.c.l.b16 %v1644
    %v1677 = vunpack.c.l.b16 %v1645
    %v1678 = vunpack.c.l.b16 %v1646
    %v1679 = vunpack.c.l.b16 %v1647
    %v1680 = vpack.c.b16 %v1665, %v1664
    %v1681 = vpack.c.b16 %v1667, %v1666
    %v1682 = vpack.c.b16 %v1669, %v1668
    %v1683 = vpack.c.b16 %v1671, %v1670
    %v1684 = vpack.c.b16 %v1673, %v1672
    %v1685 = vpack.c.b16 %v1675, %v1674
    %v1686 = vpack.c.b16 %v1677, %v1676
    %v1687 = vpack.c.b16 %v1679, %v1678
    %1696 = vmatprep.subr.bf16.mxu0 0
    %1697 = vmatpush1.bf16.msra.mxu0 %v1687
    %1698 = vmatprep.subr.bf16.mxu0 0
    %1699 = vmatpush1.bf16.msra.mxu0 %v1686
    %1700 = vmatprep.subr.bf16.mxu0 0
    %1701 = vmatpush1.bf16.msra.mxu0 %v1685
    %1702 = vmatprep.subr.bf16.mxu0 0
    %1703 = vmatpush1.bf16.msra.mxu0 %v1684
    %1704 = vmatprep.subr.bf16.mxu0 0
    %1705 = vmatpush1.bf16.msra.mxu0 %v1683
    %1706 = vmatprep.subr.bf16.mxu0 0
    %1707 = vmatpush1.bf16.msra.mxu0 %v1682
    %1708 = vmatprep.subr.bf16.mxu0 0
    %1709 = vmatpush1.bf16.msra.mxu0 %v1681
    %1710 = vmatprep.subr.bf16.mxu0 0
    %1711 = vmatpush1.bf16.msra.mxu0 %v1680
    %1712 = vmatprep.subr.bf16.mxu0 0
    %1713 = vmatpush2.bf16.msra.mxu0 0
    %1714 = vmatprep.subr.bf16.mxu0 0
    %1715 = vmatpush2.bf16.msra.mxu0 0
    %1716 = vmatprep.subr.bf16.mxu0 0
    %1717 = vmatpush2.bf16.msra.mxu0 0
    %1718 = vmatprep.subr.bf16.mxu0 0
    %1719 = vmatpush2.bf16.msra.mxu0 0
    %1720 = vmatprep.subr.bf16.mxu0 0
    %1721 = vmatpush2.bf16.msra.mxu0 0
    %1722 = vmatprep.subr.bf16.mxu0 0
    %1723 = vmatpush2.bf16.msra.mxu0 0
    %1724 = vmatprep.subr.bf16.mxu0 0
    %1725 = vmatpush2.bf16.msra.mxu0 0
    %1726 = vmatprep.subr.bf16.mxu0 0
    %1727 = vmatpush2.bf16.msra.mxu0 0
    %1728 = vmatprep.mubr.bf16.mxu0 0
    %1729 = vmatmul.mubr.bf16.gmra.mxu0 %v1615
    %v1730 = vpop.f32.mrf.mxu0
    %v1731 = vadd.f32 0.0, %v1730
    %v1732 = vpop.f32.mrf.mxu0
    %v1733 = vpop.f32.mrf.mxu0
    %v1734 = vadd.f32 0.0, %v1733
    %v1735 = vpop.f32.mrf.mxu0
    %1736 = vmatprep.mubr.bf16.mxu0 0
    %1737 = vmatmul.mubr.bf16.gmra.mxu0 %v1616
    %v1738 = vpop.f32.mrf.mxu0
    %v1739 = vadd.f32 0.0, %v1738
    %v1740 = vpop.f32.mrf.mxu0
    %v1741 = vpop.f32.mrf.mxu0
    %v1742 = vadd.f32 0.0, %v1741
    %v1743 = vpop.f32.mrf.mxu0
    %1744 = vmatprep.mubr.bf16.mxu0 0
    %1745 = vmatmul.mubr.bf16.gmra.mxu0 %v1617
    %v1746 = vpop.f32.mrf.mxu0
    %v1747 = vadd.f32 0.0, %v1746
    %v1748 = vpop.f32.mrf.mxu0
    %v1749 = vpop.f32.mrf.mxu0
    %v1750 = vadd.f32 0.0, %v1749
    %v1751 = vpop.f32.mrf.mxu0
    %1752 = vmatprep.mubr.bf16.mxu0 0
    %1753 = vmatmul.mubr.bf16.gmra.mxu0 %v1618
    %v1754 = vpop.f32.mrf.mxu0
    %v1755 = vadd.f32 0.0, %v1754
    %v1756 = vpop.f32.mrf.mxu0
    %v1757 = vpop.f32.mrf.mxu0
    %v1758 = vadd.f32 0.0, %v1757
    %v1759 = vpop.f32.mrf.mxu0
    %1760 = vmatprep.mubr.bf16.mxu0 0
    %1761 = vmatmul.mubr.bf16.gmra.mxu0 %v1619
    %v1762 = vpop.f32.mrf.mxu0
    %v1763 = vadd.f32 0.0, %v1762
    %v1764 = vpop.f32.mrf.mxu0
    %v1765 = vpop.f32.mrf.mxu0
    %v1766 = vadd.f32 0.0, %v1765
    %v1767 = vpop.f32.mrf.mxu0
    %1768 = vmatprep.mubr.bf16.mxu0 0
    %1769 = vmatmul.mubr.bf16.gmra.mxu0 %v1620
    %v1770 = vpop.f32.mrf.mxu0
    %v1771 = vadd.f32 0.0, %v1770
    %v1772 = vpop.f32.mrf.mxu0
    %v1773 = vpop.f32.mrf.mxu0
    %v1774 = vadd.f32 0.0, %v1773
    %v1775 = vpop.f32.mrf.mxu0
    %1776 = vmatprep.mubr.bf16.mxu0 0
    %1777 = vmatmul.mubr.bf16.gmra.mxu0 %v1621
    %v1778 = vpop.f32.mrf.mxu0
    %v1779 = vadd.f32 0.0, %v1778
    %v1780 = vpop.f32.mrf.mxu0
    %v1781 = vpop.f32.mrf.mxu0
    %v1782 = vadd.f32 0.0, %v1781
    %v1783 = vpop.f32.mrf.mxu0
    %1784 = vmatprep.mubr.bf16.mxu0 0
    %1785 = vmatmul.mubr.bf16.gmra.mxu0 %v1622
    %v1786 = vpop.f32.mrf.mxu0
    %v1787 = vadd.f32 0.0, %v1786
    %v1788 = vpop.f32.mrf.mxu0
    %v1789 = vpop.f32.mrf.mxu0
    %v1790 = vadd.f32 0.0, %v1789
    %v1791 = vpop.f32.mrf.mxu0
    %1792 = vmatprep.mubr.bf16.mxu0 0
    %1793 = vmatmul.mubr.bf16.gmra.mxu0 %v1623
    %v1794 = vpop.f32.mrf.mxu0
    %v1795 = vadd.f32 0.0, %v1794
    %v1796 = vpop.f32.mrf.mxu0
    %v1797 = vpop.f32.mrf.mxu0
    %v1798 = vadd.f32 0.0, %v1797
    %v1799 = vpop.f32.mrf.mxu0
    %1800 = vmatprep.mubr.bf16.mxu0 0
    %1801 = vmatmul.mubr.bf16.gmra.mxu0 %v1624
    %v1802 = vpop.f32.mrf.mxu0
    %v1803 = vadd.f32 0.0, %v1802
    %v1804 = vpop.f32.mrf.mxu0
    %v1805 = vpop.f32.mrf.mxu0
    %v1806 = vadd.f32 0.0, %v1805
    %v1807 = vpop.f32.mrf.mxu0
    %1808 = vmatprep.mubr.bf16.mxu0 0
    %1809 = vmatmul.mubr.bf16.gmra.mxu0 %v1625
    %v1810 = vpop.f32.mrf.mxu0
    %v1811 = vadd.f32 0.0, %v1810
    %v1812 = vpop.f32.mrf.mxu0
    %v1813 = vpop.f32.mrf.mxu0
    %v1814 = vadd.f32 0.0, %v1813
    %v1815 = vpop.f32.mrf.mxu0
    %1816 = vmatprep.mubr.bf16.mxu0 0
    %1817 = vmatmul.mubr.bf16.gmra.mxu0 %v1626
    %v1818 = vpop.f32.mrf.mxu0
    %v1819 = vadd.f32 0.0, %v1818
    %v1820 = vpop.f32.mrf.mxu0
    %v1821 = vpop.f32.mrf.mxu0
    %v1822 = vadd.f32 0.0, %v1821
    %v1823 = vpop.f32.mrf.mxu0
    %1824 = vmatprep.mubr.bf16.mxu0 0
    %1825 = vmatmul.mubr.bf16.gmra.mxu0 %v1627
    %v1826 = vpop.f32.mrf.mxu0
    %v1827 = vadd.f32 0.0, %v1826
    %v1828 = vpop.f32.mrf.mxu0
    %v1829 = vpop.f32.mrf.mxu0
    %v1830 = vadd.f32 0.0, %v1829
    %v1831 = vpop.f32.mrf.mxu0
    %1832 = vmatprep.mubr.bf16.mxu0 0
    %1833 = vmatmul.mubr.bf16.gmra.mxu0 %v1628
    %v1834 = vpop.f32.mrf.mxu0
    %v1835 = vadd.f32 0.0, %v1834
    %v1836 = vpop.f32.mrf.mxu0
    %v1837 = vpop.f32.mrf.mxu0
    %v1838 = vadd.f32 0.0, %v1837
    %v1839 = vpop.f32.mrf.mxu0
    %1840 = vmatprep.mubr.bf16.mxu0 0
    %1841 = vmatmul.mubr.bf16.gmra.mxu0 %v1629
    %v1842 = vpop.f32.mrf.mxu0
    %v1843 = vadd.f32 0.0, %v1842
    %v1844 = vpop.f32.mrf.mxu0
    %v1845 = vpop.f32.mrf.mxu0
    %v1846 = vadd.f32 0.0, %v1845
    %v1847 = vpop.f32.mrf.mxu0
    %1848 = vmatprep.mubr.bf16.mxu0 0
    %1849 = vmatmul.mubr.bf16.gmra.mxu0 %v1630
    %v1850 = vpop.f32.mrf.mxu0
    %v1851 = vadd.f32 0.0, %v1850
    %v1852 = vpop.f32.mrf.mxu0
    %v1853 = vpop.f32.mrf.mxu0
    %v1854 = vadd.f32 0.0, %v1853
    %v1855 = vpop.f32.mrf.mxu0
    %1856 = vdwg.mxu0
    %v1857 = vadd.f32 %v1731, %v1734
    %v1858 = vadd.f32 %v1857, %v1739
    %v1859 = vadd.f32 %v1858, %v1742
    %v1860 = vadd.f32 %v1859, %v1747
    %v1861 = vadd.f32 %v1860, %v1750
    %v1862 = vadd.f32 %v1861, %v1755
    %v1863 = vadd.f32 %v1862, %v1758
    %v1864 = vadd.f32 %v1863, %v1763
    %v1865 = vadd.f32 %v1864, %v1766
    %v1866 = vadd.f32 %v1865, %v1771
    %v1867 = vadd.f32 %v1866, %v1774
    %v1868 = vadd.f32 %v1867, %v1779
    %v1869 = vadd.f32 %v1868, %v1782
    %v1870 = vadd.f32 %v1869, %v1787
    %v1871 = vadd.f32 %v1870, %v1790
    %v1872 = vrot.slane %v1871, 4
    %v1873 = vadd.f32 %v1871, %v1872
    %v1874 = vrot.slane %v1873, 2
    %v1875 = vadd.f32 %v1873, %v1874
    %v1876 = vrot.slane %v1875, 1
    %v1877 = vadd.f32 %v1875, %v1876
    %v1878 = vadd.f32 %v1795, %v1798
    %v1879 = vadd.f32 %v1878, %v1803
    %v1880 = vadd.f32 %v1879, %v1806
    %v1881 = vadd.f32 %v1880, %v1811
    %v1882 = vadd.f32 %v1881, %v1814
    %v1883 = vadd.f32 %v1882, %v1819
    %v1884 = vadd.f32 %v1883, %v1822
    %v1885 = vadd.f32 %v1884, %v1827
    %v1886 = vadd.f32 %v1885, %v1830
    %v1887 = vadd.f32 %v1886, %v1835
    %v1888 = vadd.f32 %v1887, %v1838
    %v1889 = vadd.f32 %v1888, %v1843
    %v1890 = vadd.f32 %v1889, %v1846
    %v1891 = vadd.f32 %v1890, %v1851
    %v1892 = vadd.f32 %v1891, %v1854
    %v1893 = vrot.slane %v1892, 4
    %v1894 = vadd.f32 %v1892, %v1893
    %v1895 = vrot.slane %v1894, 2
    %v1896 = vadd.f32 %v1894, %v1895
    %v1897 = vrot.slane %v1896, 1
    %v1898 = vadd.f32 %v1896, %v1897
    %v1899 = vmul.f32 %v1877, 0.0078125
    %v1900 = vmul.f32 %v1898, 0.0078125
    %v1901 = vmul.f32 %v1731, %v1731
    %v1902 = vmul.f32 %v1734, %v1734
    %v1903 = vmul.f32 %v1739, %v1739
    %v1904 = vmul.f32 %v1742, %v1742
    %v1905 = vmul.f32 %v1747, %v1747
    %v1906 = vmul.f32 %v1750, %v1750
    %v1907 = vmul.f32 %v1755, %v1755
    %v1908 = vmul.f32 %v1758, %v1758
    %v1909 = vmul.f32 %v1763, %v1763
    %v1910 = vmul.f32 %v1766, %v1766
    %v1911 = vmul.f32 %v1771, %v1771
    %v1912 = vmul.f32 %v1774, %v1774
    %v1913 = vmul.f32 %v1779, %v1779
    %v1914 = vmul.f32 %v1782, %v1782
    %v1915 = vmul.f32 %v1787, %v1787
    %v1916 = vmul.f32 %v1790, %v1790
    %v1917 = vmul.f32 %v1795, %v1795
    %v1918 = vmul.f32 %v1798, %v1798
    %v1919 = vmul.f32 %v1803, %v1803
    %v1920 = vmul.f32 %v1806, %v1806
    %v1921 = vmul.f32 %v1811, %v1811
    %v1922 = vmul.f32 %v1814, %v1814
    %v1923 = vmul.f32 %v1819, %v1819
    %v1924 = vmul.f32 %v1822, %v1822
    %v1925 = vmul.f32 %v1827, %v1827
    %v1926 = vmul.f32 %v1830, %v1830
    %v1927 = vmul.f32 %v1835, %v1835
    %v1928 = vmul.f32 %v1838, %v1838
    %v1929 = vmul.f32 %v1843, %v1843
    %v1930 = vmul.f32 %v1846, %v1846
    %v1931 = vmul.f32 %v1851, %v1851
    %v1932 = vmul.f32 %v1854, %v1854
    %v1933 = vadd.f32 %v1901, %v1902
    %v1934 = vadd.f32 %v1933, %v1903
    %v1935 = vadd.f32 %v1934, %v1904
    %v1936 = vadd.f32 %v1935, %v1905
    %v1937 = vadd.f32 %v1936, %v1906
    %v1938 = vadd.f32 %v1937, %v1907
    %v1939 = vadd.f32 %v1938, %v1908
    %v1940 = vadd.f32 %v1939, %v1909
    %v1941 = vadd.f32 %v1940, %v1910
    %v1942 = vadd.f32 %v1941, %v1911
    %v1943 = vadd.f32 %v1942, %v1912
    %v1944 = vadd.f32 %v1943, %v1913
    %v1945 = vadd.f32 %v1944, %v1914
    %v1946 = vadd.f32 %v1945, %v1915
    %v1947 = vadd.f32 %v1946, %v1916
    %v1948 = vrot.slane %v1947, 4
    %v1949 = vadd.f32 %v1947, %v1948
    %v1950 = vrot.slane %v1949, 2
    %v1951 = vadd.f32 %v1949, %v1950
    %v1952 = vrot.slane %v1951, 1
    %v1953 = vadd.f32 %v1951, %v1952
    %v1954 = vadd.f32 %v1917, %v1918
    %v1955 = vadd.f32 %v1954, %v1919
    %v1956 = vadd.f32 %v1955, %v1920
    %v1957 = vadd.f32 %v1956, %v1921
    %v1958 = vadd.f32 %v1957, %v1922
    %v1959 = vadd.f32 %v1958, %v1923
    %v1960 = vadd.f32 %v1959, %v1924
    %v1961 = vadd.f32 %v1960, %v1925
    %v1962 = vadd.f32 %v1961, %v1926
    %v1963 = vadd.f32 %v1962, %v1927
    %v1964 = vadd.f32 %v1963, %v1928
    %v1965 = vadd.f32 %v1964, %v1929
    %v1966 = vadd.f32 %v1965, %v1930
    %v1967 = vadd.f32 %v1966, %v1931
    %v1968 = vadd.f32 %v1967, %v1932
    %v1969 = vrot.slane %v1968, 4
    %v1970 = vadd.f32 %v1968, %v1969
    %v1971 = vrot.slane %v1970, 2
    %v1972 = vadd.f32 %v1970, %v1971
    %v1973 = vrot.slane %v1972, 1
    %v1974 = vadd.f32 %v1972, %v1973
    %v1975 = vmul.f32 %v1953, 0.0078125
    %v1976 = vmul.f32 %v1974, 0.0078125
    %v1977 = vmul.f32 %v1899, %v1899
    %v1978 = vmul.f32 %v1900, %v1900
    %v1979 = vsub.f32 %v1975, %v1977
    %v1980 = vsub.f32 %v1976, %v1978
    %v1981 = vmax.f32 %v1979, 0.0
    %v1982 = vmax.f32 %v1980, 0.0
    %v1983 = vadd.f32 %v1981, 1e-05
    %v1984 = vadd.f32 %v1982, 1e-05
    %v1985 = vrsqrt.pop %v1983
    %v1986 = vrsqrt.pop %v1984
    %v1987 = vmul.f32 %v29, %v1985
    %v1988 = vmul.f32 %v29, %v1986
    %v1989 = vmul.f32 %v1899, %v1987
    %v1990 = vmul.f32 %v1900, %v1988
    %v1991 = vsub.f32 %v30, %v1989
    %v1992 = vsub.f32 %v30, %v1990
    %v1993 = vlaneseq
    %v1994 = vshrl.u32 %v1993, 7
    %v1995 = vsub.s32 0, %v1994
    %v1996 = vrot.slane %v1987, %v1995
    %v1997 = vlaneseq
    %v1998 = vshrl.u32 %v1997, 7
    %v1999 = vsub.s32 0, %v1998
    %v2000 = vrot.slane %v1988, %v1999
    %v2001 = vmul.f32 %v1731, %v1996
    %v2002 = vmul.f32 %v1734, %v1996
    %v2003 = vmul.f32 %v1739, %v1996
    %v2004 = vmul.f32 %v1742, %v1996
    %v2005 = vmul.f32 %v1747, %v1996
    %v2006 = vmul.f32 %v1750, %v1996
    %v2007 = vmul.f32 %v1755, %v1996
    %v2008 = vmul.f32 %v1758, %v1996
    %v2009 = vmul.f32 %v1763, %v1996
    %v2010 = vmul.f32 %v1766, %v1996
    %v2011 = vmul.f32 %v1771, %v1996
    %v2012 = vmul.f32 %v1774, %v1996
    %v2013 = vmul.f32 %v1779, %v1996
    %v2014 = vmul.f32 %v1782, %v1996
    %v2015 = vmul.f32 %v1787, %v1996
    %v2016 = vmul.f32 %v1790, %v1996
    %v2017 = vmul.f32 %v1795, %v2000
    %v2018 = vmul.f32 %v1798, %v2000
    %v2019 = vmul.f32 %v1803, %v2000
    %v2020 = vmul.f32 %v1806, %v2000
    %v2021 = vmul.f32 %v1811, %v2000
    %v2022 = vmul.f32 %v1814, %v2000
    %v2023 = vmul.f32 %v1819, %v2000
    %v2024 = vmul.f32 %v1822, %v2000
    %v2025 = vmul.f32 %v1827, %v2000
    %v2026 = vmul.f32 %v1830, %v2000
    %v2027 = vmul.f32 %v1835, %v2000
    %v2028 = vmul.f32 %v1838, %v2000
    %v2029 = vmul.f32 %v1843, %v2000
    %v2030 = vmul.f32 %v1846, %v2000
    %v2031 = vmul.f32 %v1851, %v2000
    %v2032 = vmul.f32 %v1854, %v2000
    %v2033 = vlaneseq
    %v2034 = vshrl.u32 %v2033, 7
    %v2035 = vsub.s32 0, %v2034
    %v2036 = vrot.slane %v1991, %v2035
    %v2037 = vlaneseq
    %v2038 = vshrl.u32 %v2037, 7
    %v2039 = vsub.s32 0, %v2038
    %v2040 = vrot.slane %v1992, %v2039
    %v2041 = vadd.f32 %v2001, %v2036
    %v2042 = vadd.f32 %v2002, %v2036
    %v2043 = vadd.f32 %v2003, %v2036
    %v2044 = vadd.f32 %v2004, %v2036
    %v2045 = vadd.f32 %v2005, %v2036
    %v2046 = vadd.f32 %v2006, %v2036
    %v2047 = vadd.f32 %v2007, %v2036
    %v2048 = vadd.f32 %v2008, %v2036
    %v2049 = vadd.f32 %v2009, %v2036
    %v2050 = vadd.f32 %v2010, %v2036
    %v2051 = vadd.f32 %v2011, %v2036
    %v2052 = vadd.f32 %v2012, %v2036
    %v2053 = vadd.f32 %v2013, %v2036
    %v2054 = vadd.f32 %v2014, %v2036
    %v2055 = vadd.f32 %v2015, %v2036
    %v2056 = vadd.f32 %v2016, %v2036
    %v2057 = vadd.f32 %v2017, %v2040
    %v2058 = vadd.f32 %v2018, %v2040
    %v2059 = vadd.f32 %v2019, %v2040
    %v2060 = vadd.f32 %v2020, %v2040
    %v2061 = vadd.f32 %v2021, %v2040
    %v2062 = vadd.f32 %v2022, %v2040
    %v2063 = vadd.f32 %v2023, %v2040
    %v2064 = vadd.f32 %v2024, %v2040
    %v2065 = vadd.f32 %v2025, %v2040
    %v2066 = vadd.f32 %v2026, %v2040
    %v2067 = vadd.f32 %v2027, %v2040
    %v2068 = vadd.f32 %v2028, %v2040
    %v2069 = vadd.f32 %v2029, %v2040
    %v2070 = vadd.f32 %v2030, %v2040
    %v2071 = vadd.f32 %v2031, %v2040
    %v2072 = vadd.f32 %v2032, %v2040
    %v2073 = vmax.f32 %v2041, 0.0
    %v2074 = vmax.f32 %v2042, 0.0
    %v2075 = vmax.f32 %v2043, 0.0
    %v2076 = vmax.f32 %v2044, 0.0
    %v2077 = vmax.f32 %v2045, 0.0
    %v2078 = vmax.f32 %v2046, 0.0
    %v2079 = vmax.f32 %v2047, 0.0
    %v2080 = vmax.f32 %v2048, 0.0
    %v2081 = vmax.f32 %v2049, 0.0
    %v2082 = vmax.f32 %v2050, 0.0
    %v2083 = vmax.f32 %v2051, 0.0
    %v2084 = vmax.f32 %v2052, 0.0
    %v2085 = vmax.f32 %v2053, 0.0
    %v2086 = vmax.f32 %v2054, 0.0
    %v2087 = vmax.f32 %v2055, 0.0
    %v2088 = vmax.f32 %v2056, 0.0
    %v2089 = vmax.f32 %v2057, 0.0
    %v2090 = vmax.f32 %v2058, 0.0
    %v2091 = vmax.f32 %v2059, 0.0
    %v2092 = vmax.f32 %v2060, 0.0
    %v2093 = vmax.f32 %v2061, 0.0
    %v2094 = vmax.f32 %v2062, 0.0
    %v2095 = vmax.f32 %v2063, 0.0
    %v2096 = vmax.f32 %v2064, 0.0
    %v2097 = vmax.f32 %v2065, 0.0
    %v2098 = vmax.f32 %v2066, 0.0
    %v2099 = vmax.f32 %v2067, 0.0
    %v2100 = vmax.f32 %v2068, 0.0
    %v2101 = vmax.f32 %v2069, 0.0
    %v2102 = vmax.f32 %v2070, 0.0
    %v2103 = vmax.f32 %v2071, 0.0
    %v2104 = vmax.f32 %v2072, 0.0
    %v2105 = vpack.c.bf16 %v2074, %v2073
    %v2106 = vpack.c.bf16 %v2076, %v2075
    %v2107 = vpack.c.bf16 %v2078, %v2077
    %v2108 = vpack.c.bf16 %v2080, %v2079
    %v2109 = vpack.c.bf16 %v2082, %v2081
    %v2110 = vpack.c.bf16 %v2084, %v2083
    %v2111 = vpack.c.bf16 %v2086, %v2085
    %v2112 = vpack.c.bf16 %v2088, %v2087
    %v2113 = vpack.c.bf16 %v2090, %v2089
    %v2114 = vpack.c.bf16 %v2092, %v2091
    %v2115 = vpack.c.bf16 %v2094, %v2093
    %v2116 = vpack.c.bf16 %v2096, %v2095
    %v2117 = vpack.c.bf16 %v2098, %v2097
    %v2118 = vpack.c.bf16 %v2100, %v2099
    %v2119 = vpack.c.bf16 %v2102, %v2101
    %v2120 = vpack.c.bf16 %v2104, %v2103
    %s2121 = scalar_lea.vmem [#allocation2], 256
    %v2122 = vld [vmem:[%s2121] sm:$0xf]
    %v2123 = vld [vmem:[%s2121 + $0x4] sm:$0xf]
    %v2124 = vld [vmem:[%s2121 + $0x8] sm:$0xf]
    %v2125 = vld [vmem:[%s2121 + $0xc] sm:$0xf]
    %v2126 = vld [vmem:[%s2121 + $0x10] sm:$0xf]
    %v2127 = vld [vmem:[%s2121 + $0x14] sm:$0xf]
    %v2128 = vld [vmem:[%s2121 + $0x18] sm:$0xf]
    %v2129 = vld [vmem:[%s2121 + $0x1c] sm:$0xf]
    %v2130 = vld [vmem:[%s2121 + $0x20] sm:$0xf]
    %v2131 = vld [vmem:[%s2121 + $0x24] sm:$0xf]
    %v2132 = vld [vmem:[%s2121 + $0x28] sm:$0xf]
    %v2133 = vld [vmem:[%s2121 + $0x2c] sm:$0xf]
    %v2134 = vld [vmem:[%s2121 + $0x30] sm:$0xf]
    %v2135 = vld [vmem:[%s2121 + $0x34] sm:$0xf]
    %v2136 = vld [vmem:[%s2121 + $0x38] sm:$0xf]
    %v2137 = vld [vmem:[%s2121 + $0x3c] sm:$0xf]
    %v2138 = vlaneseq
    %v2139 = vshrl.u32 %v2138, 7
    %v2140 = vsub.s32 0, %v2139
    %v2141 = vrot.slane %v31, %v2140
    %v2158 = vunpack.c.l.b16 %v2122
    %v2159 = vunpack.c.l.b16 %v2123
    %v2160 = vunpack.c.l.b16 %v2124
    %v2161 = vunpack.c.l.b16 %v2125
    %v2162 = vunpack.c.l.b16 %v2126
    %v2163 = vunpack.c.l.b16 %v2127
    %v2164 = vunpack.c.l.b16 %v2128
    %v2165 = vunpack.c.l.b16 %v2129
    %v2166 = vunpack.c.l.b16 %v2130
    %v2167 = vunpack.c.l.b16 %v2131
    %v2168 = vunpack.c.l.b16 %v2132
    %v2169 = vunpack.c.l.b16 %v2133
    %v2170 = vunpack.c.l.b16 %v2134
    %v2171 = vunpack.c.l.b16 %v2135
    %v2172 = vunpack.c.l.b16 %v2136
    %v2173 = vunpack.c.l.b16 %v2137
    %v2174 = vpack.c.b16 %v2159, %v2158
    %v2175 = vpack.c.b16 %v2161, %v2160
    %v2176 = vpack.c.b16 %v2163, %v2162
    %v2177 = vpack.c.b16 %v2165, %v2164
    %v2178 = vpack.c.b16 %v2167, %v2166
    %v2179 = vpack.c.b16 %v2169, %v2168
    %v2180 = vpack.c.b16 %v2171, %v2170
    %v2181 = vpack.c.b16 %v2173, %v2172
    %2190 = vmatprep.subr.bf16.mxu0 0
    %2191 = vmatpush1.bf16.msra.mxu0 %v2181
    %2192 = vmatprep.subr.bf16.mxu0 0
    %2193 = vmatpush1.bf16.msra.mxu0 %v2180
    %2194 = vmatprep.subr.bf16.mxu0 0
    %2195 = vmatpush1.bf16.msra.mxu0 %v2179
    %2196 = vmatprep.subr.bf16.mxu0 0
    %2197 = vmatpush1.bf16.msra.mxu0 %v2178
    %2198 = vmatprep.subr.bf16.mxu0 0
    %2199 = vmatpush1.bf16.msra.mxu0 %v2177
    %2200 = vmatprep.subr.bf16.mxu0 0
    %2201 = vmatpush1.bf16.msra.mxu0 %v2176
    %2202 = vmatprep.subr.bf16.mxu0 0
    %2203 = vmatpush1.bf16.msra.mxu0 %v2175
    %2204 = vmatprep.subr.bf16.mxu0 0
    %2205 = vmatpush1.bf16.msra.mxu0 %v2174
    %2206 = vmatprep.subr.bf16.mxu0 0
    %2207 = vmatpush2.bf16.msra.mxu0 0
    %2208 = vmatprep.subr.bf16.mxu0 0
    %2209 = vmatpush2.bf16.msra.mxu0 0
    %2210 = vmatprep.subr.bf16.mxu0 0
    %2211 = vmatpush2.bf16.msra.mxu0 0
    %2212 = vmatprep.subr.bf16.mxu0 0
    %2213 = vmatpush2.bf16.msra.mxu0 0
    %2214 = vmatprep.subr.bf16.mxu0 0
    %2215 = vmatpush2.bf16.msra.mxu0 0
    %2216 = vmatprep.subr.bf16.mxu0 0
    %2217 = vmatpush2.bf16.msra.mxu0 0
    %2218 = vmatprep.subr.bf16.mxu0 0
    %2219 = vmatpush2.bf16.msra.mxu0 0
    %2220 = vmatprep.subr.bf16.mxu0 0
    %2221 = vmatpush2.bf16.msra.mxu0 0
    %2222 = vmatprep.mubr.bf16.mxu0 0
    %2223 = vmatmul.mubr.bf16.gmra.mxu0 %v2105
    %v2224 = vpop.f32.mrf.mxu0
    %v2225 = vadd.f32 %v2141, %v2224
    %v2226 = vpop.f32.mrf.mxu0
    %v2227 = vpop.f32.mrf.mxu0
    %v2228 = vadd.f32 %v2141, %v2227
    %v2229 = vpop.f32.mrf.mxu0
    %2230 = vmatprep.mubr.bf16.mxu0 0
    %2231 = vmatmul.mubr.bf16.gmra.mxu0 %v2106
    %v2232 = vpop.f32.mrf.mxu0
    %v2233 = vadd.f32 %v2141, %v2232
    %v2234 = vpop.f32.mrf.mxu0
    %v2235 = vpop.f32.mrf.mxu0
    %v2236 = vadd.f32 %v2141, %v2235
    %v2237 = vpop.f32.mrf.mxu0
    %2238 = vmatprep.mubr.bf16.mxu0 0
    %2239 = vmatmul.mubr.bf16.gmra.mxu0 %v2107
    %v2240 = vpop.f32.mrf.mxu0
    %v2241 = vadd.f32 %v2141, %v2240
    %v2242 = vpop.f32.mrf.mxu0
    %v2243 = vpop.f32.mrf.mxu0
    %v2244 = vadd.f32 %v2141, %v2243
    %v2245 = vpop.f32.mrf.mxu0
    %2246 = vmatprep.mubr.bf16.mxu0 0
    %2247 = vmatmul.mubr.bf16.gmra.mxu0 %v2108
    %v2248 = vpop.f32.mrf.mxu0
    %v2249 = vadd.f32 %v2141, %v2248
    %v2250 = vpop.f32.mrf.mxu0
    %v2251 = vpop.f32.mrf.mxu0
    %v2252 = vadd.f32 %v2141, %v2251
    %v2253 = vpop.f32.mrf.mxu0
    %2254 = vmatprep.mubr.bf16.mxu0 0
    %2255 = vmatmul.mubr.bf16.gmra.mxu0 %v2109
    %v2256 = vpop.f32.mrf.mxu0
    %v2257 = vadd.f32 %v2141, %v2256
    %v2258 = vpop.f32.mrf.mxu0
    %v2259 = vpop.f32.mrf.mxu0
    %v2260 = vadd.f32 %v2141, %v2259
    %v2261 = vpop.f32.mrf.mxu0
    %2262 = vmatprep.mubr.bf16.mxu0 0
    %2263 = vmatmul.mubr.bf16.gmra.mxu0 %v2110
    %v2264 = vpop.f32.mrf.mxu0
    %v2265 = vadd.f32 %v2141, %v2264
    %v2266 = vpop.f32.mrf.mxu0
    %v2267 = vpop.f32.mrf.mxu0
    %v2268 = vadd.f32 %v2141, %v2267
    %v2269 = vpop.f32.mrf.mxu0
    %2270 = vmatprep.mubr.bf16.mxu0 0
    %2271 = vmatmul.mubr.bf16.gmra.mxu0 %v2111
    %v2272 = vpop.f32.mrf.mxu0
    %v2273 = vadd.f32 %v2141, %v2272
    %v2274 = vpop.f32.mrf.mxu0
    %v2275 = vpop.f32.mrf.mxu0
    %v2276 = vadd.f32 %v2141, %v2275
    %v2277 = vpop.f32.mrf.mxu0
    %2278 = vmatprep.mubr.bf16.mxu0 0
    %2279 = vmatmul.mubr.bf16.gmra.mxu0 %v2112
    %v2280 = vpop.f32.mrf.mxu0
    %v2281 = vadd.f32 %v2141, %v2280
    %v2282 = vpop.f32.mrf.mxu0
    %v2283 = vpop.f32.mrf.mxu0
    %v2284 = vadd.f32 %v2141, %v2283
    %v2285 = vpop.f32.mrf.mxu0
    %2286 = vmatprep.mubr.bf16.mxu0 0
    %2287 = vmatmul.mubr.bf16.gmra.mxu0 %v2113
    %v2288 = vpop.f32.mrf.mxu0
    %v2289 = vadd.f32 %v2141, %v2288
    %v2290 = vpop.f32.mrf.mxu0
    %v2291 = vpop.f32.mrf.mxu0
    %v2292 = vadd.f32 %v2141, %v2291
    %v2293 = vpop.f32.mrf.mxu0
    %2294 = vmatprep.mubr.bf16.mxu0 0
    %2295 = vmatmul.mubr.bf16.gmra.mxu0 %v2114
    %v2296 = vpop.f32.mrf.mxu0
    %v2297 = vadd.f32 %v2141, %v2296
    %v2298 = vpop.f32.mrf.mxu0
    %v2299 = vpop.f32.mrf.mxu0
    %v2300 = vadd.f32 %v2141, %v2299
    %v2301 = vpop.f32.mrf.mxu0
    %2302 = vmatprep.mubr.bf16.mxu0 0
    %2303 = vmatmul.mubr.bf16.gmra.mxu0 %v2115
    %v2304 = vpop.f32.mrf.mxu0
    %v2305 = vadd.f32 %v2141, %v2304
    %v2306 = vpop.f32.mrf.mxu0
    %v2307 = vpop.f32.mrf.mxu0
    %v2308 = vadd.f32 %v2141, %v2307
    %v2309 = vpop.f32.mrf.mxu0
    %2310 = vmatprep.mubr.bf16.mxu0 0
    %2311 = vmatmul.mubr.bf16.gmra.mxu0 %v2116
    %v2312 = vpop.f32.mrf.mxu0
    %v2313 = vadd.f32 %v2141, %v2312
    %v2314 = vpop.f32.mrf.mxu0
    %v2315 = vpop.f32.mrf.mxu0
    %v2316 = vadd.f32 %v2141, %v2315
    %v2317 = vpop.f32.mrf.mxu0
    %2318 = vmatprep.mubr.bf16.mxu0 0
    %2319 = vmatmul.mubr.bf16.gmra.mxu0 %v2117
    %v2320 = vpop.f32.mrf.mxu0
    %v2321 = vadd.f32 %v2141, %v2320
    %v2322 = vpop.f32.mrf.mxu0
    %v2323 = vpop.f32.mrf.mxu0
    %v2324 = vadd.f32 %v2141, %v2323
    %v2325 = vpop.f32.mrf.mxu0
    %2326 = vmatprep.mubr.bf16.mxu0 0
    %2327 = vmatmul.mubr.bf16.gmra.mxu0 %v2118
    %v2328 = vpop.f32.mrf.mxu0
    %v2329 = vadd.f32 %v2141, %v2328
    %v2330 = vpop.f32.mrf.mxu0
    %v2331 = vpop.f32.mrf.mxu0
    %v2332 = vadd.f32 %v2141, %v2331
    %v2333 = vpop.f32.mrf.mxu0
    %2334 = vmatprep.mubr.bf16.mxu0 0
    %2335 = vmatmul.mubr.bf16.gmra.mxu0 %v2119
    %v2336 = vpop.f32.mrf.mxu0
    %v2337 = vadd.f32 %v2141, %v2336
    %v2338 = vpop.f32.mrf.mxu0
    %v2339 = vpop.f32.mrf.mxu0
    %v2340 = vadd.f32 %v2141, %v2339
    %v2341 = vpop.f32.mrf.mxu0
    %2342 = vmatprep.mubr.bf16.mxu0 0
    %2343 = vmatmul.mubr.bf16.gmra.mxu0 %v2120
    %v2344 = vpop.f32.mrf.mxu0
    %v2345 = vadd.f32 %v2141, %v2344
    %v2346 = vpop.f32.mrf.mxu0
    %v2347 = vpop.f32.mrf.mxu0
    %v2348 = vadd.f32 %v2141, %v2347
    %v2349 = vpop.f32.mrf.mxu0
    %2350 = vdwg.mxu0
    %v2351 = vmax.f32 %v2225, 0.0
    %v2352 = vmax.f32 %v2228, 0.0
    %v2353 = vmax.f32 %v2233, 0.0
    %v2354 = vmax.f32 %v2236, 0.0
    %v2355 = vmax.f32 %v2241, 0.0
    %v2356 = vmax.f32 %v2244, 0.0
    %v2357 = vmax.f32 %v2249, 0.0
    %v2358 = vmax.f32 %v2252, 0.0
    %v2359 = vmax.f32 %v2257, 0.0
    %v2360 = vmax.f32 %v2260, 0.0
    %v2361 = vmax.f32 %v2265, 0.0
    %v2362 = vmax.f32 %v2268, 0.0
    %v2363 = vmax.f32 %v2273, 0.0
    %v2364 = vmax.f32 %v2276, 0.0
    %v2365 = vmax.f32 %v2281, 0.0
    %v2366 = vmax.f32 %v2284, 0.0
    %v2367 = vmax.f32 %v2289, 0.0
    %v2368 = vmax.f32 %v2292, 0.0
    %v2369 = vmax.f32 %v2297, 0.0
    %v2370 = vmax.f32 %v2300, 0.0
    %v2371 = vmax.f32 %v2305, 0.0
    %v2372 = vmax.f32 %v2308, 0.0
    %v2373 = vmax.f32 %v2313, 0.0
    %v2374 = vmax.f32 %v2316, 0.0
    %v2375 = vmax.f32 %v2321, 0.0
    %v2376 = vmax.f32 %v2324, 0.0
    %v2377 = vmax.f32 %v2329, 0.0
    %v2378 = vmax.f32 %v2332, 0.0
    %v2379 = vmax.f32 %v2337, 0.0
    %v2380 = vmax.f32 %v2340, 0.0
    %v2381 = vmax.f32 %v2345, 0.0
    %v2382 = vmax.f32 %v2348, 0.0
    %v2383 = vpack.c.bf16 %v2352, %v2351
    %v2384 = vpack.c.bf16 %v2354, %v2353
    %v2385 = vpack.c.bf16 %v2356, %v2355
    %v2386 = vpack.c.bf16 %v2358, %v2357
    %v2387 = vpack.c.bf16 %v2360, %v2359
    %v2388 = vpack.c.bf16 %v2362, %v2361
    %v2389 = vpack.c.bf16 %v2364, %v2363
    %v2390 = vpack.c.bf16 %v2366, %v2365
    %v2391 = vpack.c.bf16 %v2368, %v2367
    %v2392 = vpack.c.bf16 %v2370, %v2369
    %v2393 = vpack.c.bf16 %v2372, %v2371
    %v2394 = vpack.c.bf16 %v2374, %v2373
    %v2395 = vpack.c.bf16 %v2376, %v2375
    %v2396 = vpack.c.bf16 %v2378, %v2377
    %v2397 = vpack.c.bf16 %v2380, %v2379
    %v2398 = vpack.c.bf16 %v2382, %v2381
    %s2399 = scalar_lea.vmem [#allocation2], 320
    %v2400 = vld [vmem:[%s2399] sm:$0xf]
    %v2401 = vld [vmem:[%s2399 + $0x4] sm:$0xf]
    %v2402 = vld [vmem:[%s2399 + $0x8] sm:$0xf]
    %v2403 = vld [vmem:[%s2399 + $0xc] sm:$0xf]
    %v2404 = vld [vmem:[%s2399 + $0x10] sm:$0xf]
    %v2405 = vld [vmem:[%s2399 + $0x14] sm:$0xf]
    %v2406 = vld [vmem:[%s2399 + $0x18] sm:$0xf]
    %v2407 = vld [vmem:[%s2399 + $0x1c] sm:$0xf]
    %v2408 = vld [vmem:[%s2399 + $0x20] sm:$0xf]
    %v2409 = vld [vmem:[%s2399 + $0x24] sm:$0xf]
    %v2410 = vld [vmem:[%s2399 + $0x28] sm:$0xf]
    %v2411 = vld [vmem:[%s2399 + $0x2c] sm:$0xf]
    %v2412 = vld [vmem:[%s2399 + $0x30] sm:$0xf]
    %v2413 = vld [vmem:[%s2399 + $0x34] sm:$0xf]
    %v2414 = vld [vmem:[%s2399 + $0x38] sm:$0xf]
    %v2415 = vld [vmem:[%s2399 + $0x3c] sm:$0xf]
    %v2432 = vunpack.c.l.b16 %v2400
    %v2433 = vunpack.c.l.b16 %v2401
    %v2434 = vunpack.c.l.b16 %v2402
    %v2435 = vunpack.c.l.b16 %v2403
    %v2436 = vunpack.c.l.b16 %v2404
    %v2437 = vunpack.c.l.b16 %v2405
    %v2438 = vunpack.c.l.b16 %v2406
    %v2439 = vunpack.c.l.b16 %v2407
    %v2440 = vunpack.c.l.b16 %v2408
    %v2441 = vunpack.c.l.b16 %v2409
    %v2442 = vunpack.c.l.b16 %v2410
    %v2443 = vunpack.c.l.b16 %v2411
    %v2444 = vunpack.c.l.b16 %v2412
    %v2445 = vunpack.c.l.b16 %v2413
    %v2446 = vunpack.c.l.b16 %v2414
    %v2447 = vunpack.c.l.b16 %v2415
    %v2448 = vpack.c.b16 %v2433, %v2432
    %v2449 = vpack.c.b16 %v2435, %v2434
    %v2450 = vpack.c.b16 %v2437, %v2436
    %v2451 = vpack.c.b16 %v2439, %v2438
    %v2452 = vpack.c.b16 %v2441, %v2440
    %v2453 = vpack.c.b16 %v2443, %v2442
    %v2454 = vpack.c.b16 %v2445, %v2444
    %v2455 = vpack.c.b16 %v2447, %v2446
    %2464 = vmatprep.subr.bf16.mxu0 0
    %2465 = vmatpush1.bf16.msra.mxu0 %v2455
    %2466 = vmatprep.subr.bf16.mxu0 0
    %2467 = vmatpush1.bf16.msra.mxu0 %v2454
    %2468 = vmatprep.subr.bf16.mxu0 0
    %2469 = vmatpush1.bf16.msra.mxu0 %v2453
    %2470 = vmatprep.subr.bf16.mxu0 0
    %2471 = vmatpush1.bf16.msra.mxu0 %v2452
    %2472 = vmatprep.subr.bf16.mxu0 0
    %2473 = vmatpush1.bf16.msra.mxu0 %v2451
    %2474 = vmatprep.subr.bf16.mxu0 0
    %2475 = vmatpush1.bf16.msra.mxu0 %v2450
    %2476 = vmatprep.subr.bf16.mxu0 0
    %2477 = vmatpush1.bf16.msra.mxu0 %v2449
    %2478 = vmatprep.subr.bf16.mxu0 0
    %2479 = vmatpush1.bf16.msra.mxu0 %v2448
    %2480 = vmatprep.subr.bf16.mxu0 0
    %2481 = vmatpush2.bf16.msra.mxu0 0
    %2482 = vmatprep.subr.bf16.mxu0 0
    %2483 = vmatpush2.bf16.msra.mxu0 0
    %2484 = vmatprep.subr.bf16.mxu0 0
    %2485 = vmatpush2.bf16.msra.mxu0 0
    %2486 = vmatprep.subr.bf16.mxu0 0
    %2487 = vmatpush2.bf16.msra.mxu0 0
    %2488 = vmatprep.subr.bf16.mxu0 0
    %2489 = vmatpush2.bf16.msra.mxu0 0
    %2490 = vmatprep.subr.bf16.mxu0 0
    %2491 = vmatpush2.bf16.msra.mxu0 0
    %2492 = vmatprep.subr.bf16.mxu0 0
    %2493 = vmatpush2.bf16.msra.mxu0 0
    %2494 = vmatprep.subr.bf16.mxu0 0
    %2495 = vmatpush2.bf16.msra.mxu0 0
    %2496 = vmatprep.mubr.bf16.mxu0 0
    %2497 = vmatmul.mubr.bf16.gmra.mxu0 %v2383
    %v2498 = vpop.f32.mrf.mxu0
    %v2499 = vadd.f32 0.0, %v2498
    %v2500 = vpop.f32.mrf.mxu0
    %v2501 = vpop.f32.mrf.mxu0
    %v2502 = vadd.f32 0.0, %v2501
    %v2503 = vpop.f32.mrf.mxu0
    %2504 = vmatprep.mubr.bf16.mxu0 0
    %2505 = vmatmul.mubr.bf16.gmra.mxu0 %v2384
    %v2506 = vpop.f32.mrf.mxu0
    %v2507 = vadd.f32 0.0, %v2506
    %v2508 = vpop.f32.mrf.mxu0
    %v2509 = vpop.f32.mrf.mxu0
    %v2510 = vadd.f32 0.0, %v2509
    %v2511 = vpop.f32.mrf.mxu0
    %2512 = vmatprep.mubr.bf16.mxu0 0
    %2513 = vmatmul.mubr.bf16.gmra.mxu0 %v2385
    %v2514 = vpop.f32.mrf.mxu0
    %v2515 = vadd.f32 0.0, %v2514
    %v2516 = vpop.f32.mrf.mxu0
    %v2517 = vpop.f32.mrf.mxu0
    %v2518 = vadd.f32 0.0, %v2517
    %v2519 = vpop.f32.mrf.mxu0
    %2520 = vmatprep.mubr.bf16.mxu0 0
    %2521 = vmatmul.mubr.bf16.gmra.mxu0 %v2386
    %v2522 = vpop.f32.mrf.mxu0
    %v2523 = vadd.f32 0.0, %v2522
    %v2524 = vpop.f32.mrf.mxu0
    %v2525 = vpop.f32.mrf.mxu0
    %v2526 = vadd.f32 0.0, %v2525
    %v2527 = vpop.f32.mrf.mxu0
    %2528 = vmatprep.mubr.bf16.mxu0 0
    %2529 = vmatmul.mubr.bf16.gmra.mxu0 %v2387
    %v2530 = vpop.f32.mrf.mxu0
    %v2531 = vadd.f32 0.0, %v2530
    %v2532 = vpop.f32.mrf.mxu0
    %v2533 = vpop.f32.mrf.mxu0
    %v2534 = vadd.f32 0.0, %v2533
    %v2535 = vpop.f32.mrf.mxu0
    %2536 = vmatprep.mubr.bf16.mxu0 0
    %2537 = vmatmul.mubr.bf16.gmra.mxu0 %v2388
    %v2538 = vpop.f32.mrf.mxu0
    %v2539 = vadd.f32 0.0, %v2538
    %v2540 = vpop.f32.mrf.mxu0
    %v2541 = vpop.f32.mrf.mxu0
    %v2542 = vadd.f32 0.0, %v2541
    %v2543 = vpop.f32.mrf.mxu0
    %2544 = vmatprep.mubr.bf16.mxu0 0
    %2545 = vmatmul.mubr.bf16.gmra.mxu0 %v2389
    %v2546 = vpop.f32.mrf.mxu0
    %v2547 = vadd.f32 0.0, %v2546
    %v2548 = vpop.f32.mrf.mxu0
    %v2549 = vpop.f32.mrf.mxu0
    %v2550 = vadd.f32 0.0, %v2549
    %v2551 = vpop.f32.mrf.mxu0
    %2552 = vmatprep.mubr.bf16.mxu0 0
    %2553 = vmatmul.mubr.bf16.gmra.mxu0 %v2390
    %v2554 = vpop.f32.mrf.mxu0
    %v2555 = vadd.f32 0.0, %v2554
    %v2556 = vpop.f32.mrf.mxu0
    %v2557 = vpop.f32.mrf.mxu0
    %v2558 = vadd.f32 0.0, %v2557
    %v2559 = vpop.f32.mrf.mxu0
    %2560 = vmatprep.mubr.bf16.mxu0 0
    %2561 = vmatmul.mubr.bf16.gmra.mxu0 %v2391
    %v2562 = vpop.f32.mrf.mxu0
    %v2563 = vadd.f32 0.0, %v2562
    %v2564 = vpop.f32.mrf.mxu0
    %v2565 = vpop.f32.mrf.mxu0
    %v2566 = vadd.f32 0.0, %v2565
    %v2567 = vpop.f32.mrf.mxu0
    %2568 = vmatprep.mubr.bf16.mxu0 0
    %2569 = vmatmul.mubr.bf16.gmra.mxu0 %v2392
    %v2570 = vpop.f32.mrf.mxu0
    %v2571 = vadd.f32 0.0, %v2570
    %v2572 = vpop.f32.mrf.mxu0
    %v2573 = vpop.f32.mrf.mxu0
    %v2574 = vadd.f32 0.0, %v2573
    %v2575 = vpop.f32.mrf.mxu0
    %2576 = vmatprep.mubr.bf16.mxu0 0
    %2577 = vmatmul.mubr.bf16.gmra.mxu0 %v2393
    %v2578 = vpop.f32.mrf.mxu0
    %v2579 = vadd.f32 0.0, %v2578
    %v2580 = vpop.f32.mrf.mxu0
    %v2581 = vpop.f32.mrf.mxu0
    %v2582 = vadd.f32 0.0, %v2581
    %v2583 = vpop.f32.mrf.mxu0
    %2584 = vmatprep.mubr.bf16.mxu0 0
    %2585 = vmatmul.mubr.bf16.gmra.mxu0 %v2394
    %v2586 = vpop.f32.mrf.mxu0
    %v2587 = vadd.f32 0.0, %v2586
    %v2588 = vpop.f32.mrf.mxu0
    %v2589 = vpop.f32.mrf.mxu0
    %v2590 = vadd.f32 0.0, %v2589
    %v2591 = vpop.f32.mrf.mxu0
    %2592 = vmatprep.mubr.bf16.mxu0 0
    %2593 = vmatmul.mubr.bf16.gmra.mxu0 %v2395
    %v2594 = vpop.f32.mrf.mxu0
    %v2595 = vadd.f32 0.0, %v2594
    %v2596 = vpop.f32.mrf.mxu0
    %v2597 = vpop.f32.mrf.mxu0
    %v2598 = vadd.f32 0.0, %v2597
    %v2599 = vpop.f32.mrf.mxu0
    %2600 = vmatprep.mubr.bf16.mxu0 0
    %2601 = vmatmul.mubr.bf16.gmra.mxu0 %v2396
    %v2602 = vpop.f32.mrf.mxu0
    %v2603 = vadd.f32 0.0, %v2602
    %v2604 = vpop.f32.mrf.mxu0
    %v2605 = vpop.f32.mrf.mxu0
    %v2606 = vadd.f32 0.0, %v2605
    %v2607 = vpop.f32.mrf.mxu0
    %2608 = vmatprep.mubr.bf16.mxu0 0
    %2609 = vmatmul.mubr.bf16.gmra.mxu0 %v2397
    %v2610 = vpop.f32.mrf.mxu0
    %v2611 = vadd.f32 0.0, %v2610
    %v2612 = vpop.f32.mrf.mxu0
    %v2613 = vpop.f32.mrf.mxu0
    %v2614 = vadd.f32 0.0, %v2613
    %v2615 = vpop.f32.mrf.mxu0
    %2616 = vmatprep.mubr.bf16.mxu0 0
    %2617 = vmatmul.mubr.bf16.gmra.mxu0 %v2398
    %v2618 = vpop.f32.mrf.mxu0
    %v2619 = vadd.f32 0.0, %v2618
    %v2620 = vpop.f32.mrf.mxu0
    %v2621 = vpop.f32.mrf.mxu0
    %v2622 = vadd.f32 0.0, %v2621
    %v2623 = vpop.f32.mrf.mxu0
    %2624 = vdwg.mxu0
    %v2625 = vadd.f32 %v2499, %v2502
    %v2626 = vadd.f32 %v2625, %v2507
    %v2627 = vadd.f32 %v2626, %v2510
    %v2628 = vadd.f32 %v2627, %v2515
    %v2629 = vadd.f32 %v2628, %v2518
    %v2630 = vadd.f32 %v2629, %v2523
    %v2631 = vadd.f32 %v2630, %v2526
    %v2632 = vadd.f32 %v2631, %v2531
    %v2633 = vadd.f32 %v2632, %v2534
    %v2634 = vadd.f32 %v2633, %v2539
    %v2635 = vadd.f32 %v2634, %v2542
    %v2636 = vadd.f32 %v2635, %v2547
    %v2637 = vadd.f32 %v2636, %v2550
    %v2638 = vadd.f32 %v2637, %v2555
    %v2639 = vadd.f32 %v2638, %v2558
    %v2640 = vrot.slane %v2639, 4
    %v2641 = vadd.f32 %v2639, %v2640
    %v2642 = vrot.slane %v2641, 2
    %v2643 = vadd.f32 %v2641, %v2642
    %v2644 = vrot.slane %v2643, 1
    %v2645 = vadd.f32 %v2643, %v2644
    %v2646 = vadd.f32 %v2563, %v2566
    %v2647 = vadd.f32 %v2646, %v2571
    %v2648 = vadd.f32 %v2647, %v2574
    %v2649 = vadd.f32 %v2648, %v2579
    %v2650 = vadd.f32 %v2649, %v2582
    %v2651 = vadd.f32 %v2650, %v2587
    %v2652 = vadd.f32 %v2651, %v2590
    %v2653 = vadd.f32 %v2652, %v2595
    %v2654 = vadd.f32 %v2653, %v2598
    %v2655 = vadd.f32 %v2654, %v2603
    %v2656 = vadd.f32 %v2655, %v2606
    %v2657 = vadd.f32 %v2656, %v2611
    %v2658 = vadd.f32 %v2657, %v2614
    %v2659 = vadd.f32 %v2658, %v2619
    %v2660 = vadd.f32 %v2659, %v2622
    %v2661 = vrot.slane %v2660, 4
    %v2662 = vadd.f32 %v2660, %v2661
    %v2663 = vrot.slane %v2662, 2
    %v2664 = vadd.f32 %v2662, %v2663
    %v2665 = vrot.slane %v2664, 1
    %v2666 = vadd.f32 %v2664, %v2665
    %v2667 = vmul.f32 %v2645, 0.0078125
    %v2668 = vmul.f32 %v2666, 0.0078125
    %v2669 = vmul.f32 %v2499, %v2499
    %v2670 = vmul.f32 %v2502, %v2502
    %v2671 = vmul.f32 %v2507, %v2507
    %v2672 = vmul.f32 %v2510, %v2510
    %v2673 = vmul.f32 %v2515, %v2515
    %v2674 = vmul.f32 %v2518, %v2518
    %v2675 = vmul.f32 %v2523, %v2523
    %v2676 = vmul.f32 %v2526, %v2526
    %v2677 = vmul.f32 %v2531, %v2531
    %v2678 = vmul.f32 %v2534, %v2534
    %v2679 = vmul.f32 %v2539, %v2539
    %v2680 = vmul.f32 %v2542, %v2542
    %v2681 = vmul.f32 %v2547, %v2547
    %v2682 = vmul.f32 %v2550, %v2550
    %v2683 = vmul.f32 %v2555, %v2555
    %v2684 = vmul.f32 %v2558, %v2558
    %v2685 = vmul.f32 %v2563, %v2563
    %v2686 = vmul.f32 %v2566, %v2566
    %v2687 = vmul.f32 %v2571, %v2571
    %v2688 = vmul.f32 %v2574, %v2574
    %v2689 = vmul.f32 %v2579, %v2579
    %v2690 = vmul.f32 %v2582, %v2582
    %v2691 = vmul.f32 %v2587, %v2587
    %v2692 = vmul.f32 %v2590, %v2590
    %v2693 = vmul.f32 %v2595, %v2595
    %v2694 = vmul.f32 %v2598, %v2598
    %v2695 = vmul.f32 %v2603, %v2603
    %v2696 = vmul.f32 %v2606, %v2606
    %v2697 = vmul.f32 %v2611, %v2611
    %v2698 = vmul.f32 %v2614, %v2614
    %v2699 = vmul.f32 %v2619, %v2619
    %v2700 = vmul.f32 %v2622, %v2622
    %v2701 = vadd.f32 %v2669, %v2670
    %v2702 = vadd.f32 %v2701, %v2671
    %v2703 = vadd.f32 %v2702, %v2672
    %v2704 = vadd.f32 %v2703, %v2673
    %v2705 = vadd.f32 %v2704, %v2674
    %v2706 = vadd.f32 %v2705, %v2675
    %v2707 = vadd.f32 %v2706, %v2676
    %v2708 = vadd.f32 %v2707, %v2677
    %v2709 = vadd.f32 %v2708, %v2678
    %v2710 = vadd.f32 %v2709, %v2679
    %v2711 = vadd.f32 %v2710, %v2680
    %v2712 = vadd.f32 %v2711, %v2681
    %v2713 = vadd.f32 %v2712, %v2682
    %v2714 = vadd.f32 %v2713, %v2683
    %v2715 = vadd.f32 %v2714, %v2684
    %v2716 = vrot.slane %v2715, 4
    %v2717 = vadd.f32 %v2715, %v2716
    %v2718 = vrot.slane %v2717, 2
    %v2719 = vadd.f32 %v2717, %v2718
    %v2720 = vrot.slane %v2719, 1
    %v2721 = vadd.f32 %v2719, %v2720
    %v2722 = vadd.f32 %v2685, %v2686
    %v2723 = vadd.f32 %v2722, %v2687
    %v2724 = vadd.f32 %v2723, %v2688
    %v2725 = vadd.f32 %v2724, %v2689
    %v2726 = vadd.f32 %v2725, %v2690
    %v2727 = vadd.f32 %v2726, %v2691
    %v2728 = vadd.f32 %v2727, %v2692
    %v2729 = vadd.f32 %v2728, %v2693
    %v2730 = vadd.f32 %v2729, %v2694
    %v2731 = vadd.f32 %v2730, %v2695
    %v2732 = vadd.f32 %v2731, %v2696
    %v2733 = vadd.f32 %v2732, %v2697
    %v2734 = vadd.f32 %v2733, %v2698
    %v2735 = vadd.f32 %v2734, %v2699
    %v2736 = vadd.f32 %v2735, %v2700
    %v2737 = vrot.slane %v2736, 4
    %v2738 = vadd.f32 %v2736, %v2737
    %v2739 = vrot.slane %v2738, 2
    %v2740 = vadd.f32 %v2738, %v2739
    %v2741 = vrot.slane %v2740, 1
    %v2742 = vadd.f32 %v2740, %v2741
    %v2743 = vmul.f32 %v2721, 0.0078125
    %v2744 = vmul.f32 %v2742, 0.0078125
    %v2745 = vmul.f32 %v2667, %v2667
    %v2746 = vmul.f32 %v2668, %v2668
    %v2747 = vsub.f32 %v2743, %v2745
    %v2748 = vsub.f32 %v2744, %v2746
    %v2749 = vmax.f32 %v2747, 0.0
    %v2750 = vmax.f32 %v2748, 0.0
    %v2751 = vadd.f32 %v2749, 1e-05
    %v2752 = vadd.f32 %v2750, 1e-05
    %v2753 = vrsqrt.pop %v2751
    %v2754 = vrsqrt.pop %v2752
    %v2755 = vmul.f32 %v29, %v2753
    %v2756 = vmul.f32 %v29, %v2754
    %v2757 = vmul.f32 %v2667, %v2755
    %v2758 = vmul.f32 %v2668, %v2756
    %v2759 = vsub.f32 %v30, %v2757
    %v2760 = vsub.f32 %v30, %v2758
    %v2761 = vlaneseq
    %v2762 = vshrl.u32 %v2761, 7
    %v2763 = vsub.s32 0, %v2762
    %v2764 = vrot.slane %v2755, %v2763
    %v2765 = vlaneseq
    %v2766 = vshrl.u32 %v2765, 7
    %v2767 = vsub.s32 0, %v2766
    %v2768 = vrot.slane %v2756, %v2767
    %v2769 = vmul.f32 %v2499, %v2764
    %v2770 = vmul.f32 %v2502, %v2764
    %v2771 = vmul.f32 %v2507, %v2764
    %v2772 = vmul.f32 %v2510, %v2764
    %v2773 = vmul.f32 %v2515, %v2764
    %v2774 = vmul.f32 %v2518, %v2764
    %v2775 = vmul.f32 %v2523, %v2764
    %v2776 = vmul.f32 %v2526, %v2764
    %v2777 = vmul.f32 %v2531, %v2764
    %v2778 = vmul.f32 %v2534, %v2764
    %v2779 = vmul.f32 %v2539, %v2764
    %v2780 = vmul.f32 %v2542, %v2764
    %v2781 = vmul.f32 %v2547, %v2764
    %v2782 = vmul.f32 %v2550, %v2764
    %v2783 = vmul.f32 %v2555, %v2764
    %v2784 = vmul.f32 %v2558, %v2764
    %v2785 = vmul.f32 %v2563, %v2768
    %v2786 = vmul.f32 %v2566, %v2768
    %v2787 = vmul.f32 %v2571, %v2768
    %v2788 = vmul.f32 %v2574, %v2768
    %v2789 = vmul.f32 %v2579, %v2768
    %v2790 = vmul.f32 %v2582, %v2768
    %v2791 = vmul.f32 %v2587, %v2768
    %v2792 = vmul.f32 %v2590, %v2768
    %v2793 = vmul.f32 %v2595, %v2768
    %v2794 = vmul.f32 %v2598, %v2768
    %v2795 = vmul.f32 %v2603, %v2768
    %v2796 = vmul.f32 %v2606, %v2768
    %v2797 = vmul.f32 %v2611, %v2768
    %v2798 = vmul.f32 %v2614, %v2768
    %v2799 = vmul.f32 %v2619, %v2768
    %v2800 = vmul.f32 %v2622, %v2768
    %v2801 = vlaneseq
    %v2802 = vshrl.u32 %v2801, 7
    %v2803 = vsub.s32 0, %v2802
    %v2804 = vrot.slane %v2759, %v2803
    %v2805 = vlaneseq
    %v2806 = vshrl.u32 %v2805, 7
    %v2807 = vsub.s32 0, %v2806
    %v2808 = vrot.slane %v2760, %v2807
    %v2809 = vadd.f32 %v2769, %v2804
    %v2810 = vadd.f32 %v2770, %v2804
    %v2811 = vadd.f32 %v2771, %v2804
    %v2812 = vadd.f32 %v2772, %v2804
    %v2813 = vadd.f32 %v2773, %v2804
    %v2814 = vadd.f32 %v2774, %v2804
    %v2815 = vadd.f32 %v2775, %v2804
    %v2816 = vadd.f32 %v2776, %v2804
    %v2817 = vadd.f32 %v2777, %v2804
    %v2818 = vadd.f32 %v2778, %v2804
    %v2819 = vadd.f32 %v2779, %v2804
    %v2820 = vadd.f32 %v2780, %v2804
    %v2821 = vadd.f32 %v2781, %v2804
    %v2822 = vadd.f32 %v2782, %v2804
    %v2823 = vadd.f32 %v2783, %v2804
    %v2824 = vadd.f32 %v2784, %v2804
    %v2825 = vadd.f32 %v2785, %v2808
    %v2826 = vadd.f32 %v2786, %v2808
    %v2827 = vadd.f32 %v2787, %v2808
    %v2828 = vadd.f32 %v2788, %v2808
    %v2829 = vadd.f32 %v2789, %v2808
    %v2830 = vadd.f32 %v2790, %v2808
    %v2831 = vadd.f32 %v2791, %v2808
    %v2832 = vadd.f32 %v2792, %v2808
    %v2833 = vadd.f32 %v2793, %v2808
    %v2834 = vadd.f32 %v2794, %v2808
    %v2835 = vadd.f32 %v2795, %v2808
    %v2836 = vadd.f32 %v2796, %v2808
    %v2837 = vadd.f32 %v2797, %v2808
    %v2838 = vadd.f32 %v2798, %v2808
    %v2839 = vadd.f32 %v2799, %v2808
    %v2840 = vadd.f32 %v2800, %v2808
    %v2841 = vmax.f32 %v2809, 0.0
    %v2842 = vmax.f32 %v2810, 0.0
    %v2843 = vmax.f32 %v2811, 0.0
    %v2844 = vmax.f32 %v2812, 0.0
    %v2845 = vmax.f32 %v2813, 0.0
    %v2846 = vmax.f32 %v2814, 0.0
    %v2847 = vmax.f32 %v2815, 0.0
    %v2848 = vmax.f32 %v2816, 0.0
    %v2849 = vmax.f32 %v2817, 0.0
    %v2850 = vmax.f32 %v2818, 0.0
    %v2851 = vmax.f32 %v2819, 0.0
    %v2852 = vmax.f32 %v2820, 0.0
    %v2853 = vmax.f32 %v2821, 0.0
    %v2854 = vmax.f32 %v2822, 0.0
    %v2855 = vmax.f32 %v2823, 0.0
    %v2856 = vmax.f32 %v2824, 0.0
    %v2857 = vmax.f32 %v2825, 0.0
    %v2858 = vmax.f32 %v2826, 0.0
    %v2859 = vmax.f32 %v2827, 0.0
    %v2860 = vmax.f32 %v2828, 0.0
    %v2861 = vmax.f32 %v2829, 0.0
    %v2862 = vmax.f32 %v2830, 0.0
    %v2863 = vmax.f32 %v2831, 0.0
    %v2864 = vmax.f32 %v2832, 0.0
    %v2865 = vmax.f32 %v2833, 0.0
    %v2866 = vmax.f32 %v2834, 0.0
    %v2867 = vmax.f32 %v2835, 0.0
    %v2868 = vmax.f32 %v2836, 0.0
    %v2869 = vmax.f32 %v2837, 0.0
    %v2870 = vmax.f32 %v2838, 0.0
    %v2871 = vmax.f32 %v2839, 0.0
    %v2872 = vmax.f32 %v2840, 0.0
    %v2873 = vpack.c.bf16 %v2842, %v2841
    %v2874 = vpack.c.bf16 %v2844, %v2843
    %v2875 = vpack.c.bf16 %v2846, %v2845
    %v2876 = vpack.c.bf16 %v2848, %v2847
    %v2877 = vpack.c.bf16 %v2850, %v2849
    %v2878 = vpack.c.bf16 %v2852, %v2851
    %v2879 = vpack.c.bf16 %v2854, %v2853
    %v2880 = vpack.c.bf16 %v2856, %v2855
    %v2881 = vpack.c.bf16 %v2858, %v2857
    %v2882 = vpack.c.bf16 %v2860, %v2859
    %v2883 = vpack.c.bf16 %v2862, %v2861
    %v2884 = vpack.c.bf16 %v2864, %v2863
    %v2885 = vpack.c.bf16 %v2866, %v2865
    %v2886 = vpack.c.bf16 %v2868, %v2867
    %v2887 = vpack.c.bf16 %v2870, %v2869
    %v2888 = vpack.c.bf16 %v2872, %v2871
    %s2889 = scalar_lea.vmem [#allocation2], 384
    %v2890 = vld [vmem:[%s2889] sm:$0xf]
    %v2891 = vld [vmem:[%s2889 + $0x4] sm:$0xf]
    %v2892 = vld [vmem:[%s2889 + $0x8] sm:$0xf]
    %v2893 = vld [vmem:[%s2889 + $0xc] sm:$0xf]
    %v2894 = vld [vmem:[%s2889 + $0x10] sm:$0xf]
    %v2895 = vld [vmem:[%s2889 + $0x14] sm:$0xf]
    %v2896 = vld [vmem:[%s2889 + $0x18] sm:$0xf]
    %v2897 = vld [vmem:[%s2889 + $0x1c] sm:$0xf]
    %v2898 = vld [vmem:[%s2889 + $0x20] sm:$0xf]
    %v2899 = vld [vmem:[%s2889 + $0x24] sm:$0xf]
    %v2900 = vld [vmem:[%s2889 + $0x28] sm:$0xf]
    %v2901 = vld [vmem:[%s2889 + $0x2c] sm:$0xf]
    %v2902 = vld [vmem:[%s2889 + $0x30] sm:$0xf]
    %v2903 = vld [vmem:[%s2889 + $0x34] sm:$0xf]
    %v2904 = vld [vmem:[%s2889 + $0x38] sm:$0xf]
    %v2905 = vld [vmem:[%s2889 + $0x3c] sm:$0xf]
    %v2922 = vunpack.c.l.b16 %v2890
    %v2923 = vunpack.c.l.b16 %v2891
    %v2924 = vunpack.c.l.b16 %v2892
    %v2925 = vunpack.c.l.b16 %v2893
    %v2926 = vunpack.c.l.b16 %v2894
    %v2927 = vunpack.c.l.b16 %v2895
    %v2928 = vunpack.c.l.b16 %v2896
    %v2929 = vunpack.c.l.b16 %v2897
    %v2930 = vunpack.c.l.b16 %v2898
    %v2931 = vunpack.c.l.b16 %v2899
    %v2932 = vunpack.c.l.b16 %v2900
    %v2933 = vunpack.c.l.b16 %v2901
    %v2934 = vunpack.c.l.b16 %v2902
    %v2935 = vunpack.c.l.b16 %v2903
    %v2936 = vunpack.c.l.b16 %v2904
    %v2937 = vunpack.c.l.b16 %v2905
    %v2938 = vpack.c.b16 %v2923, %v2922
    %v2939 = vpack.c.b16 %v2925, %v2924
    %v2940 = vpack.c.b16 %v2927, %v2926
    %v2941 = vpack.c.b16 %v2929, %v2928
    %v2942 = vpack.c.b16 %v2931, %v2930
    %v2943 = vpack.c.b16 %v2933, %v2932
    %v2944 = vpack.c.b16 %v2935, %v2934
    %v2945 = vpack.c.b16 %v2937, %v2936
    %2954 = vmatprep.subr.bf16.mxu0 0
    %2955 = vmatpush1.bf16.msra.mxu0 %v2945
    %2956 = vmatprep.subr.bf16.mxu0 0
    %2957 = vmatpush1.bf16.msra.mxu0 %v2944
    %2958 = vmatprep.subr.bf16.mxu0 0
    %2959 = vmatpush1.bf16.msra.mxu0 %v2943
    %2960 = vmatprep.subr.bf16.mxu0 0
    %2961 = vmatpush1.bf16.msra.mxu0 %v2942
    %2962 = vmatprep.subr.bf16.mxu0 0
    %2963 = vmatpush1.bf16.msra.mxu0 %v2941
    %2964 = vmatprep.subr.bf16.mxu0 0
    %2965 = vmatpush1.bf16.msra.mxu0 %v2940
    %2966 = vmatprep.subr.bf16.mxu0 0
    %2967 = vmatpush1.bf16.msra.mxu0 %v2939
    %2968 = vmatprep.subr.bf16.mxu0 0
    %2969 = vmatpush1.bf16.msra.mxu0 %v2938
    %2970 = vmatprep.subr.bf16.mxu0 0
    %2971 = vmatpush2.bf16.msra.mxu0 0
    %2972 = vmatprep.subr.bf16.mxu0 0
    %2973 = vmatpush2.bf16.msra.mxu0 0
    %2974 = vmatprep.subr.bf16.mxu0 0
    %2975 = vmatpush2.bf16.msra.mxu0 0
    %2976 = vmatprep.subr.bf16.mxu0 0
    %2977 = vmatpush2.bf16.msra.mxu0 0
    %2978 = vmatprep.subr.bf16.mxu0 0
    %2979 = vmatpush2.bf16.msra.mxu0 0
    %2980 = vmatprep.subr.bf16.mxu0 0
    %2981 = vmatpush2.bf16.msra.mxu0 0
    %2982 = vmatprep.subr.bf16.mxu0 0
    %2983 = vmatpush2.bf16.msra.mxu0 0
    %2984 = vmatprep.subr.bf16.mxu0 0
    %2985 = vmatpush2.bf16.msra.mxu0 0
    %2986 = vmatprep.mubr.bf16.mxu0 0
    %2987 = vmatmul.mubr.bf16.gmra.mxu0 %v2873
    %v2988 = vpop.f32.mrf.mxu0
    %v2989 = vadd.f32 0.0, %v2988
    %v2990 = vpop.f32.mrf.mxu0
    %v2991 = vpop.f32.mrf.mxu0
    %v2992 = vadd.f32 0.0, %v2991
    %v2993 = vpop.f32.mrf.mxu0
    %2994 = vmatprep.mubr.bf16.mxu0 0
    %2995 = vmatmul.mubr.bf16.gmra.mxu0 %v2874
    %v2996 = vpop.f32.mrf.mxu0
    %v2997 = vadd.f32 0.0, %v2996
    %v2998 = vpop.f32.mrf.mxu0
    %v2999 = vpop.f32.mrf.mxu0
    %v3000 = vadd.f32 0.0, %v2999
    %v3001 = vpop.f32.mrf.mxu0
    %3002 = vmatprep.mubr.bf16.mxu0 0
    %3003 = vmatmul.mubr.bf16.gmra.mxu0 %v2875
    %v3004 = vpop.f32.mrf.mxu0
    %v3005 = vadd.f32 0.0, %v3004
    %v3006 = vpop.f32.mrf.mxu0
    %v3007 = vpop.f32.mrf.mxu0
    %v3008 = vadd.f32 0.0, %v3007
    %v3009 = vpop.f32.mrf.mxu0
    %3010 = vmatprep.mubr.bf16.mxu0 0
    %3011 = vmatmul.mubr.bf16.gmra.mxu0 %v2876
    %v3012 = vpop.f32.mrf.mxu0
    %v3013 = vadd.f32 0.0, %v3012
    %v3014 = vpop.f32.mrf.mxu0
    %v3015 = vpop.f32.mrf.mxu0
    %v3016 = vadd.f32 0.0, %v3015
    %v3017 = vpop.f32.mrf.mxu0
    %3018 = vmatprep.mubr.bf16.mxu0 0
    %3019 = vmatmul.mubr.bf16.gmra.mxu0 %v2877
    %v3020 = vpop.f32.mrf.mxu0
    %v3021 = vadd.f32 0.0, %v3020
    %v3022 = vpop.f32.mrf.mxu0
    %v3023 = vpop.f32.mrf.mxu0
    %v3024 = vadd.f32 0.0, %v3023
    %v3025 = vpop.f32.mrf.mxu0
    %3026 = vmatprep.mubr.bf16.mxu0 0
    %3027 = vmatmul.mubr.bf16.gmra.mxu0 %v2878
    %v3028 = vpop.f32.mrf.mxu0
    %v3029 = vadd.f32 0.0, %v3028
    %v3030 = vpop.f32.mrf.mxu0
    %v3031 = vpop.f32.mrf.mxu0
    %v3032 = vadd.f32 0.0, %v3031
    %v3033 = vpop.f32.mrf.mxu0
    %3034 = vmatprep.mubr.bf16.mxu0 0
    %3035 = vmatmul.mubr.bf16.gmra.mxu0 %v2879
    %v3036 = vpop.f32.mrf.mxu0
    %v3037 = vadd.f32 0.0, %v3036
    %v3038 = vpop.f32.mrf.mxu0
    %v3039 = vpop.f32.mrf.mxu0
    %v3040 = vadd.f32 0.0, %v3039
    %v3041 = vpop.f32.mrf.mxu0
    %3042 = vmatprep.mubr.bf16.mxu0 0
    %3043 = vmatmul.mubr.bf16.gmra.mxu0 %v2880
    %v3044 = vpop.f32.mrf.mxu0
    %v3045 = vadd.f32 0.0, %v3044
    %v3046 = vpop.f32.mrf.mxu0
    %v3047 = vpop.f32.mrf.mxu0
    %v3048 = vadd.f32 0.0, %v3047
    %v3049 = vpop.f32.mrf.mxu0
    %3050 = vmatprep.mubr.bf16.mxu0 0
    %3051 = vmatmul.mubr.bf16.gmra.mxu0 %v2881
    %v3052 = vpop.f32.mrf.mxu0
    %v3053 = vadd.f32 0.0, %v3052
    %v3054 = vpop.f32.mrf.mxu0
    %v3055 = vpop.f32.mrf.mxu0
    %v3056 = vadd.f32 0.0, %v3055
    %v3057 = vpop.f32.mrf.mxu0
    %3058 = vmatprep.mubr.bf16.mxu0 0
    %3059 = vmatmul.mubr.bf16.gmra.mxu0 %v2882
    %v3060 = vpop.f32.mrf.mxu0
    %v3061 = vadd.f32 0.0, %v3060
    %v3062 = vpop.f32.mrf.mxu0
    %v3063 = vpop.f32.mrf.mxu0
    %v3064 = vadd.f32 0.0, %v3063
    %v3065 = vpop.f32.mrf.mxu0
    %3066 = vmatprep.mubr.bf16.mxu0 0
    %3067 = vmatmul.mubr.bf16.gmra.mxu0 %v2883
    %v3068 = vpop.f32.mrf.mxu0
    %v3069 = vadd.f32 0.0, %v3068
    %v3070 = vpop.f32.mrf.mxu0
    %v3071 = vpop.f32.mrf.mxu0
    %v3072 = vadd.f32 0.0, %v3071
    %v3073 = vpop.f32.mrf.mxu0
    %3074 = vmatprep.mubr.bf16.mxu0 0
    %3075 = vmatmul.mubr.bf16.gmra.mxu0 %v2884
    %v3076 = vpop.f32.mrf.mxu0
    %v3077 = vadd.f32 0.0, %v3076
    %v3078 = vpop.f32.mrf.mxu0
    %v3079 = vpop.f32.mrf.mxu0
    %v3080 = vadd.f32 0.0, %v3079
    %v3081 = vpop.f32.mrf.mxu0
    %3082 = vmatprep.mubr.bf16.mxu0 0
    %3083 = vmatmul.mubr.bf16.gmra.mxu0 %v2885
    %v3084 = vpop.f32.mrf.mxu0
    %v3085 = vadd.f32 0.0, %v3084
    %v3086 = vpop.f32.mrf.mxu0
    %v3087 = vpop.f32.mrf.mxu0
    %v3088 = vadd.f32 0.0, %v3087
    %v3089 = vpop.f32.mrf.mxu0
    %3090 = vmatprep.mubr.bf16.mxu0 0
    %3091 = vmatmul.mubr.bf16.gmra.mxu0 %v2886
    %v3092 = vpop.f32.mrf.mxu0
    %v3093 = vadd.f32 0.0, %v3092
    %v3094 = vpop.f32.mrf.mxu0
    %v3095 = vpop.f32.mrf.mxu0
    %v3096 = vadd.f32 0.0, %v3095
    %v3097 = vpop.f32.mrf.mxu0
    %3098 = vmatprep.mubr.bf16.mxu0 0
    %3099 = vmatmul.mubr.bf16.gmra.mxu0 %v2887
    %v3100 = vpop.f32.mrf.mxu0
    %v3101 = vadd.f32 0.0, %v3100
    %v3102 = vpop.f32.mrf.mxu0
    %v3103 = vpop.f32.mrf.mxu0
    %v3104 = vadd.f32 0.0, %v3103
    %v3105 = vpop.f32.mrf.mxu0
    %3106 = vmatprep.mubr.bf16.mxu0 0
    %3107 = vmatmul.mubr.bf16.gmra.mxu0 %v2888
    %v3108 = vpop.f32.mrf.mxu0
    %v3109 = vadd.f32 0.0, %v3108
    %v3110 = vpop.f32.mrf.mxu0
    %v3111 = vpop.f32.mrf.mxu0
    %v3112 = vadd.f32 0.0, %v3111
    %v3113 = vpop.f32.mrf.mxu0
    %3114 = vdwg.mxu0
    %v3115 = vadd.f32 %v2989, %v2992
    %v3116 = vadd.f32 %v3115, %v2997
    %v3117 = vadd.f32 %v3116, %v3000
    %v3118 = vadd.f32 %v3117, %v3005
    %v3119 = vadd.f32 %v3118, %v3008
    %v3120 = vadd.f32 %v3119, %v3013
    %v3121 = vadd.f32 %v3120, %v3016
    %v3122 = vadd.f32 %v3121, %v3021
    %v3123 = vadd.f32 %v3122, %v3024
    %v3124 = vadd.f32 %v3123, %v3029
    %v3125 = vadd.f32 %v3124, %v3032
    %v3126 = vadd.f32 %v3125, %v3037
    %v3127 = vadd.f32 %v3126, %v3040
    %v3128 = vadd.f32 %v3127, %v3045
    %v3129 = vadd.f32 %v3128, %v3048
    %v3130 = vrot.slane %v3129, 4
    %v3131 = vadd.f32 %v3129, %v3130
    %v3132 = vrot.slane %v3131, 2
    %v3133 = vadd.f32 %v3131, %v3132
    %v3134 = vrot.slane %v3133, 1
    %v3135 = vadd.f32 %v3133, %v3134
    %v3136 = vadd.f32 %v3053, %v3056
    %v3137 = vadd.f32 %v3136, %v3061
    %v3138 = vadd.f32 %v3137, %v3064
    %v3139 = vadd.f32 %v3138, %v3069
    %v3140 = vadd.f32 %v3139, %v3072
    %v3141 = vadd.f32 %v3140, %v3077
    %v3142 = vadd.f32 %v3141, %v3080
    %v3143 = vadd.f32 %v3142, %v3085
    %v3144 = vadd.f32 %v3143, %v3088
    %v3145 = vadd.f32 %v3144, %v3093
    %v3146 = vadd.f32 %v3145, %v3096
    %v3147 = vadd.f32 %v3146, %v3101
    %v3148 = vadd.f32 %v3147, %v3104
    %v3149 = vadd.f32 %v3148, %v3109
    %v3150 = vadd.f32 %v3149, %v3112
    %v3151 = vrot.slane %v3150, 4
    %v3152 = vadd.f32 %v3150, %v3151
    %v3153 = vrot.slane %v3152, 2
    %v3154 = vadd.f32 %v3152, %v3153
    %v3155 = vrot.slane %v3154, 1
    %v3156 = vadd.f32 %v3154, %v3155
    %v3157 = vmul.f32 %v3135, 0.0078125
    %v3158 = vmul.f32 %v3156, 0.0078125
    %v3159 = vmul.f32 %v2989, %v2989
    %v3160 = vmul.f32 %v2992, %v2992
    %v3161 = vmul.f32 %v2997, %v2997
    %v3162 = vmul.f32 %v3000, %v3000
    %v3163 = vmul.f32 %v3005, %v3005
    %v3164 = vmul.f32 %v3008, %v3008
    %v3165 = vmul.f32 %v3013, %v3013
    %v3166 = vmul.f32 %v3016, %v3016
    %v3167 = vmul.f32 %v3021, %v3021
    %v3168 = vmul.f32 %v3024, %v3024
    %v3169 = vmul.f32 %v3029, %v3029
    %v3170 = vmul.f32 %v3032, %v3032
    %v3171 = vmul.f32 %v3037, %v3037
    %v3172 = vmul.f32 %v3040, %v3040
    %v3173 = vmul.f32 %v3045, %v3045
    %v3174 = vmul.f32 %v3048, %v3048
    %v3175 = vmul.f32 %v3053, %v3053
    %v3176 = vmul.f32 %v3056, %v3056
    %v3177 = vmul.f32 %v3061, %v3061
    %v3178 = vmul.f32 %v3064, %v3064
    %v3179 = vmul.f32 %v3069, %v3069
    %v3180 = vmul.f32 %v3072, %v3072
    %v3181 = vmul.f32 %v3077, %v3077
    %v3182 = vmul.f32 %v3080, %v3080
    %v3183 = vmul.f32 %v3085, %v3085
    %v3184 = vmul.f32 %v3088, %v3088
    %v3185 = vmul.f32 %v3093, %v3093
    %v3186 = vmul.f32 %v3096, %v3096
    %v3187 = vmul.f32 %v3101, %v3101
    %v3188 = vmul.f32 %v3104, %v3104
    %v3189 = vmul.f32 %v3109, %v3109
    %v3190 = vmul.f32 %v3112, %v3112
    %v3191 = vadd.f32 %v3159, %v3160
    %v3192 = vadd.f32 %v3191, %v3161
    %v3193 = vadd.f32 %v3192, %v3162
    %v3194 = vadd.f32 %v3193, %v3163
    %v3195 = vadd.f32 %v3194, %v3164
    %v3196 = vadd.f32 %v3195, %v3165
    %v3197 = vadd.f32 %v3196, %v3166
    %v3198 = vadd.f32 %v3197, %v3167
    %v3199 = vadd.f32 %v3198, %v3168
    %v3200 = vadd.f32 %v3199, %v3169
    %v3201 = vadd.f32 %v3200, %v3170
    %v3202 = vadd.f32 %v3201, %v3171
    %v3203 = vadd.f32 %v3202, %v3172
    %v3204 = vadd.f32 %v3203, %v3173
    %v3205 = vadd.f32 %v3204, %v3174
    %v3206 = vrot.slane %v3205, 4
    %v3207 = vadd.f32 %v3205, %v3206
    %v3208 = vrot.slane %v3207, 2
    %v3209 = vadd.f32 %v3207, %v3208
    %v3210 = vrot.slane %v3209, 1
    %v3211 = vadd.f32 %v3209, %v3210
    %v3212 = vadd.f32 %v3175, %v3176
    %v3213 = vadd.f32 %v3212, %v3177
    %v3214 = vadd.f32 %v3213, %v3178
    %v3215 = vadd.f32 %v3214, %v3179
    %v3216 = vadd.f32 %v3215, %v3180
    %v3217 = vadd.f32 %v3216, %v3181
    %v3218 = vadd.f32 %v3217, %v3182
    %v3219 = vadd.f32 %v3218, %v3183
    %v3220 = vadd.f32 %v3219, %v3184
    %v3221 = vadd.f32 %v3220, %v3185
    %v3222 = vadd.f32 %v3221, %v3186
    %v3223 = vadd.f32 %v3222, %v3187
    %v3224 = vadd.f32 %v3223, %v3188
    %v3225 = vadd.f32 %v3224, %v3189
    %v3226 = vadd.f32 %v3225, %v3190
    %v3227 = vrot.slane %v3226, 4
    %v3228 = vadd.f32 %v3226, %v3227
    %v3229 = vrot.slane %v3228, 2
    %v3230 = vadd.f32 %v3228, %v3229
    %v3231 = vrot.slane %v3230, 1
    %v3232 = vadd.f32 %v3230, %v3231
    %v3233 = vmul.f32 %v3211, 0.0078125
    %v3234 = vmul.f32 %v3232, 0.0078125
    %v3235 = vmul.f32 %v3157, %v3157
    %v3236 = vmul.f32 %v3158, %v3158
    %v3237 = vsub.f32 %v3233, %v3235
    %v3238 = vsub.f32 %v3234, %v3236
    %v3239 = vmax.f32 %v3237, 0.0
    %v3240 = vmax.f32 %v3238, 0.0
    %v3241 = vadd.f32 %v3239, 1e-05
    %v3242 = vadd.f32 %v3240, 1e-05
    %v3243 = vrsqrt.pop %v3241
    %v3244 = vrsqrt.pop %v3242
    %v3245 = vmul.f32 %v29, %v3243
    %v3246 = vmul.f32 %v29, %v3244
    %v3247 = vmul.f32 %v3157, %v3245
    %v3248 = vmul.f32 %v3158, %v3246
    %v3249 = vsub.f32 %v30, %v3247
    %v3250 = vsub.f32 %v30, %v3248
    %v3251 = vlaneseq
    %v3252 = vshrl.u32 %v3251, 7
    %v3253 = vsub.s32 0, %v3252
    %v3254 = vrot.slane %v3245, %v3253
    %v3255 = vlaneseq
    %v3256 = vshrl.u32 %v3255, 7
    %v3257 = vsub.s32 0, %v3256
    %v3258 = vrot.slane %v3246, %v3257
    %v3259 = vmul.f32 %v2989, %v3254
    %v3260 = vmul.f32 %v2992, %v3254
    %v3261 = vmul.f32 %v2997, %v3254
    %v3262 = vmul.f32 %v3000, %v3254
    %v3263 = vmul.f32 %v3005, %v3254
    %v3264 = vmul.f32 %v3008, %v3254
    %v3265 = vmul.f32 %v3013, %v3254
    %v3266 = vmul.f32 %v3016, %v3254
    %v3267 = vmul.f32 %v3021, %v3254
    %v3268 = vmul.f32 %v3024, %v3254
    %v3269 = vmul.f32 %v3029, %v3254
    %v3270 = vmul.f32 %v3032, %v3254
    %v3271 = vmul.f32 %v3037, %v3254
    %v3272 = vmul.f32 %v3040, %v3254
    %v3273 = vmul.f32 %v3045, %v3254
    %v3274 = vmul.f32 %v3048, %v3254
    %v3275 = vmul.f32 %v3053, %v3258
    %v3276 = vmul.f32 %v3056, %v3258
    %v3277 = vmul.f32 %v3061, %v3258
    %v3278 = vmul.f32 %v3064, %v3258
    %v3279 = vmul.f32 %v3069, %v3258
    %v3280 = vmul.f32 %v3072, %v3258
    %v3281 = vmul.f32 %v3077, %v3258
    %v3282 = vmul.f32 %v3080, %v3258
    %v3283 = vmul.f32 %v3085, %v3258
    %v3284 = vmul.f32 %v3088, %v3258
    %v3285 = vmul.f32 %v3093, %v3258
    %v3286 = vmul.f32 %v3096, %v3258
    %v3287 = vmul.f32 %v3101, %v3258
    %v3288 = vmul.f32 %v3104, %v3258
    %v3289 = vmul.f32 %v3109, %v3258
    %v3290 = vmul.f32 %v3112, %v3258
    %v3291 = vlaneseq
    %v3292 = vshrl.u32 %v3291, 7
    %v3293 = vsub.s32 0, %v3292
    %v3294 = vrot.slane %v3249, %v3293
    %v3295 = vlaneseq
    %v3296 = vshrl.u32 %v3295, 7
    %v3297 = vsub.s32 0, %v3296
    %v3298 = vrot.slane %v3250, %v3297
    %v3299 = vadd.f32 %v3259, %v3294
    %v3300 = vadd.f32 %v3260, %v3294
    %v3301 = vadd.f32 %v3261, %v3294
    %v3302 = vadd.f32 %v3262, %v3294
    %v3303 = vadd.f32 %v3263, %v3294
    %v3304 = vadd.f32 %v3264, %v3294
    %v3305 = vadd.f32 %v3265, %v3294
    %v3306 = vadd.f32 %v3266, %v3294
    %v3307 = vadd.f32 %v3267, %v3294
    %v3308 = vadd.f32 %v3268, %v3294
    %v3309 = vadd.f32 %v3269, %v3294
    %v3310 = vadd.f32 %v3270, %v3294
    %v3311 = vadd.f32 %v3271, %v3294
    %v3312 = vadd.f32 %v3272, %v3294
    %v3313 = vadd.f32 %v3273, %v3294
    %v3314 = vadd.f32 %v3274, %v3294
    %v3315 = vadd.f32 %v3275, %v3298
    %v3316 = vadd.f32 %v3276, %v3298
    %v3317 = vadd.f32 %v3277, %v3298
    %v3318 = vadd.f32 %v3278, %v3298
    %v3319 = vadd.f32 %v3279, %v3298
    %v3320 = vadd.f32 %v3280, %v3298
    %v3321 = vadd.f32 %v3281, %v3298
    %v3322 = vadd.f32 %v3282, %v3298
    %v3323 = vadd.f32 %v3283, %v3298
    %v3324 = vadd.f32 %v3284, %v3298
    %v3325 = vadd.f32 %v3285, %v3298
    %v3326 = vadd.f32 %v3286, %v3298
    %v3327 = vadd.f32 %v3287, %v3298
    %v3328 = vadd.f32 %v3288, %v3298
    %v3329 = vadd.f32 %v3289, %v3298
    %v3330 = vadd.f32 %v3290, %v3298
    %v3331 = vmax.f32 %v3299, 0.0
    %v3332 = vmax.f32 %v3300, 0.0
    %v3333 = vmax.f32 %v3301, 0.0
    %v3334 = vmax.f32 %v3302, 0.0
    %v3335 = vmax.f32 %v3303, 0.0
    %v3336 = vmax.f32 %v3304, 0.0
    %v3337 = vmax.f32 %v3305, 0.0
    %v3338 = vmax.f32 %v3306, 0.0
    %v3339 = vmax.f32 %v3307, 0.0
    %v3340 = vmax.f32 %v3308, 0.0
    %v3341 = vmax.f32 %v3309, 0.0
    %v3342 = vmax.f32 %v3310, 0.0
    %v3343 = vmax.f32 %v3311, 0.0
    %v3344 = vmax.f32 %v3312, 0.0
    %v3345 = vmax.f32 %v3313, 0.0
    %v3346 = vmax.f32 %v3314, 0.0
    %v3347 = vmax.f32 %v3315, 0.0
    %v3348 = vmax.f32 %v3316, 0.0
    %v3349 = vmax.f32 %v3317, 0.0
    %v3350 = vmax.f32 %v3318, 0.0
    %v3351 = vmax.f32 %v3319, 0.0
    %v3352 = vmax.f32 %v3320, 0.0
    %v3353 = vmax.f32 %v3321, 0.0
    %v3354 = vmax.f32 %v3322, 0.0
    %v3355 = vmax.f32 %v3323, 0.0
    %v3356 = vmax.f32 %v3324, 0.0
    %v3357 = vmax.f32 %v3325, 0.0
    %v3358 = vmax.f32 %v3326, 0.0
    %v3359 = vmax.f32 %v3327, 0.0
    %v3360 = vmax.f32 %v3328, 0.0
    %v3361 = vmax.f32 %v3329, 0.0
    %v3362 = vmax.f32 %v3330, 0.0
    %v3363 = vpack.c.bf16 %v3332, %v3331
    %v3364 = vpack.c.bf16 %v3334, %v3333
    %v3365 = vpack.c.bf16 %v3336, %v3335
    %v3366 = vpack.c.bf16 %v3338, %v3337
    %v3367 = vpack.c.bf16 %v3340, %v3339
    %v3368 = vpack.c.bf16 %v3342, %v3341
    %v3369 = vpack.c.bf16 %v3344, %v3343
    %v3370 = vpack.c.bf16 %v3346, %v3345
    %v3371 = vpack.c.bf16 %v3348, %v3347
    %v3372 = vpack.c.bf16 %v3350, %v3349
    %v3373 = vpack.c.bf16 %v3352, %v3351
    %v3374 = vpack.c.bf16 %v3354, %v3353
    %v3375 = vpack.c.bf16 %v3356, %v3355
    %v3376 = vpack.c.bf16 %v3358, %v3357
    %v3377 = vpack.c.bf16 %v3360, %v3359
    %v3378 = vpack.c.bf16 %v3362, %v3361
    %s3379 = scalar_lea.vmem [#allocation2], 448
    %v3380 = vld [vmem:[%s3379] sm:$0xf]
    %v3381 = vld [vmem:[%s3379 + $0x4] sm:$0xf]
    %v3382 = vld [vmem:[%s3379 + $0x8] sm:$0xf]
    %v3383 = vld [vmem:[%s3379 + $0xc] sm:$0xf]
    %v3384 = vld [vmem:[%s3379 + $0x10] sm:$0xf]
    %v3385 = vld [vmem:[%s3379 + $0x14] sm:$0xf]
    %v3386 = vld [vmem:[%s3379 + $0x18] sm:$0xf]
    %v3387 = vld [vmem:[%s3379 + $0x1c] sm:$0xf]
    %v3388 = vld [vmem:[%s3379 + $0x20] sm:$0xf]
    %v3389 = vld [vmem:[%s3379 + $0x24] sm:$0xf]
    %v3390 = vld [vmem:[%s3379 + $0x28] sm:$0xf]
    %v3391 = vld [vmem:[%s3379 + $0x2c] sm:$0xf]
    %v3392 = vld [vmem:[%s3379 + $0x30] sm:$0xf]
    %v3393 = vld [vmem:[%s3379 + $0x34] sm:$0xf]
    %v3394 = vld [vmem:[%s3379 + $0x38] sm:$0xf]
    %v3395 = vld [vmem:[%s3379 + $0x3c] sm:$0xf]
    %v3412 = vunpack.c.l.b16 %v3380
    %v3413 = vunpack.c.l.b16 %v3381
    %v3414 = vunpack.c.l.b16 %v3382
    %v3415 = vunpack.c.l.b16 %v3383
    %v3416 = vunpack.c.l.b16 %v3384
    %v3417 = vunpack.c.l.b16 %v3385
    %v3418 = vunpack.c.l.b16 %v3386
    %v3419 = vunpack.c.l.b16 %v3387
    %v3420 = vunpack.c.l.b16 %v3388
    %v3421 = vunpack.c.l.b16 %v3389
    %v3422 = vunpack.c.l.b16 %v3390
    %v3423 = vunpack.c.l.b16 %v3391
    %v3424 = vunpack.c.l.b16 %v3392
    %v3425 = vunpack.c.l.b16 %v3393
    %v3426 = vunpack.c.l.b16 %v3394
    %v3427 = vunpack.c.l.b16 %v3395
    %v3428 = vpack.c.b16 %v3413, %v3412
    %v3429 = vpack.c.b16 %v3415, %v3414
    %v3430 = vpack.c.b16 %v3417, %v3416
    %v3431 = vpack.c.b16 %v3419, %v3418
    %v3432 = vpack.c.b16 %v3421, %v3420
    %v3433 = vpack.c.b16 %v3423, %v3422
    %v3434 = vpack.c.b16 %v3425, %v3424
    %v3435 = vpack.c.b16 %v3427, %v3426
    %3444 = vmatprep.subr.bf16.mxu0 0
    %3445 = vmatpush1.bf16.msra.mxu0 %v3435
    %3446 = vmatprep.subr.bf16.mxu0 0
    %3447 = vmatpush1.bf16.msra.mxu0 %v3434
    %3448 = vmatprep.subr.bf16.mxu0 0
    %3449 = vmatpush1.bf16.msra.mxu0 %v3433
    %3450 = vmatprep.subr.bf16.mxu0 0
    %3451 = vmatpush1.bf16.msra.mxu0 %v3432
    %3452 = vmatprep.subr.bf16.mxu0 0
    %3453 = vmatpush1.bf16.msra.mxu0 %v3431
    %3454 = vmatprep.subr.bf16.mxu0 0
    %3455 = vmatpush1.bf16.msra.mxu0 %v3430
    %3456 = vmatprep.subr.bf16.mxu0 0
    %3457 = vmatpush1.bf16.msra.mxu0 %v3429
    %3458 = vmatprep.subr.bf16.mxu0 0
    %3459 = vmatpush1.bf16.msra.mxu0 %v3428
    %3460 = vmatprep.subr.bf16.mxu0 0
    %3461 = vmatpush2.bf16.msra.mxu0 0
    %3462 = vmatprep.subr.bf16.mxu0 0
    %3463 = vmatpush2.bf16.msra.mxu0 0
    %3464 = vmatprep.subr.bf16.mxu0 0
    %3465 = vmatpush2.bf16.msra.mxu0 0
    %3466 = vmatprep.subr.bf16.mxu0 0
    %3467 = vmatpush2.bf16.msra.mxu0 0
    %3468 = vmatprep.subr.bf16.mxu0 0
    %3469 = vmatpush2.bf16.msra.mxu0 0
    %3470 = vmatprep.subr.bf16.mxu0 0
    %3471 = vmatpush2.bf16.msra.mxu0 0
    %3472 = vmatprep.subr.bf16.mxu0 0
    %3473 = vmatpush2.bf16.msra.mxu0 0
    %3474 = vmatprep.subr.bf16.mxu0 0
    %3475 = vmatpush2.bf16.msra.mxu0 0
    %3476 = vmatprep.mubr.bf16.mxu0 0
    %3477 = vmatmul.mubr.bf16.gmra.mxu0 %v3363
    %v3478 = vpop.f32.mrf.mxu0
    %v3479 = vadd.f32 0.0, %v3478
    %v3480 = vpop.f32.mrf.mxu0
    %v3481 = vpop.f32.mrf.mxu0
    %v3482 = vadd.f32 0.0, %v3481
    %v3483 = vpop.f32.mrf.mxu0
    %3484 = vmatprep.mubr.bf16.mxu0 0
    %3485 = vmatmul.mubr.bf16.gmra.mxu0 %v3364
    %v3486 = vpop.f32.mrf.mxu0
    %v3487 = vadd.f32 0.0, %v3486
    %v3488 = vpop.f32.mrf.mxu0
    %v3489 = vpop.f32.mrf.mxu0
    %v3490 = vadd.f32 0.0, %v3489
    %v3491 = vpop.f32.mrf.mxu0
    %3492 = vmatprep.mubr.bf16.mxu0 0
    %3493 = vmatmul.mubr.bf16.gmra.mxu0 %v3365
    %v3494 = vpop.f32.mrf.mxu0
    %v3495 = vadd.f32 0.0, %v3494
    %v3496 = vpop.f32.mrf.mxu0
    %v3497 = vpop.f32.mrf.mxu0
    %v3498 = vadd.f32 0.0, %v3497
    %v3499 = vpop.f32.mrf.mxu0
    %3500 = vmatprep.mubr.bf16.mxu0 0
    %3501 = vmatmul.mubr.bf16.gmra.mxu0 %v3366
    %v3502 = vpop.f32.mrf.mxu0
    %v3503 = vadd.f32 0.0, %v3502
    %v3504 = vpop.f32.mrf.mxu0
    %v3505 = vpop.f32.mrf.mxu0
    %v3506 = vadd.f32 0.0, %v3505
    %v3507 = vpop.f32.mrf.mxu0
    %3508 = vmatprep.mubr.bf16.mxu0 0
    %3509 = vmatmul.mubr.bf16.gmra.mxu0 %v3367
    %v3510 = vpop.f32.mrf.mxu0
    %v3511 = vadd.f32 0.0, %v3510
    %v3512 = vpop.f32.mrf.mxu0
    %v3513 = vpop.f32.mrf.mxu0
    %v3514 = vadd.f32 0.0, %v3513
    %v3515 = vpop.f32.mrf.mxu0
    %3516 = vmatprep.mubr.bf16.mxu0 0
    %3517 = vmatmul.mubr.bf16.gmra.mxu0 %v3368
    %v3518 = vpop.f32.mrf.mxu0
    %v3519 = vadd.f32 0.0, %v3518
    %v3520 = vpop.f32.mrf.mxu0
    %v3521 = vpop.f32.mrf.mxu0
    %v3522 = vadd.f32 0.0, %v3521
    %v3523 = vpop.f32.mrf.mxu0
    %3524 = vmatprep.mubr.bf16.mxu0 0
    %3525 = vmatmul.mubr.bf16.gmra.mxu0 %v3369
    %v3526 = vpop.f32.mrf.mxu0
    %v3527 = vadd.f32 0.0, %v3526
    %v3528 = vpop.f32.mrf.mxu0
    %v3529 = vpop.f32.mrf.mxu0
    %v3530 = vadd.f32 0.0, %v3529
    %v3531 = vpop.f32.mrf.mxu0
    %3532 = vmatprep.mubr.bf16.mxu0 0
    %3533 = vmatmul.mubr.bf16.gmra.mxu0 %v3370
    %v3534 = vpop.f32.mrf.mxu0
    %v3535 = vadd.f32 0.0, %v3534
    %v3536 = vpop.f32.mrf.mxu0
    %v3537 = vpop.f32.mrf.mxu0
    %v3538 = vadd.f32 0.0, %v3537
    %v3539 = vpop.f32.mrf.mxu0
    %3540 = vmatprep.mubr.bf16.mxu0 0
    %3541 = vmatmul.mubr.bf16.gmra.mxu0 %v3371
    %v3542 = vpop.f32.mrf.mxu0
    %v3543 = vadd.f32 0.0, %v3542
    %v3544 = vpop.f32.mrf.mxu0
    %v3545 = vpop.f32.mrf.mxu0
    %v3546 = vadd.f32 0.0, %v3545
    %v3547 = vpop.f32.mrf.mxu0
    %3548 = vmatprep.mubr.bf16.mxu0 0
    %3549 = vmatmul.mubr.bf16.gmra.mxu0 %v3372
    %v3550 = vpop.f32.mrf.mxu0
    %v3551 = vadd.f32 0.0, %v3550
    %v3552 = vpop.f32.mrf.mxu0
    %v3553 = vpop.f32.mrf.mxu0
    %v3554 = vadd.f32 0.0, %v3553
    %v3555 = vpop.f32.mrf.mxu0
    %3556 = vmatprep.mubr.bf16.mxu0 0
    %3557 = vmatmul.mubr.bf16.gmra.mxu0 %v3373
    %v3558 = vpop.f32.mrf.mxu0
    %v3559 = vadd.f32 0.0, %v3558
    %v3560 = vpop.f32.mrf.mxu0
    %v3561 = vpop.f32.mrf.mxu0
    %v3562 = vadd.f32 0.0, %v3561
    %v3563 = vpop.f32.mrf.mxu0
    %3564 = vmatprep.mubr.bf16.mxu0 0
    %3565 = vmatmul.mubr.bf16.gmra.mxu0 %v3374
    %v3566 = vpop.f32.mrf.mxu0
    %v3567 = vadd.f32 0.0, %v3566
    %v3568 = vpop.f32.mrf.mxu0
    %v3569 = vpop.f32.mrf.mxu0
    %v3570 = vadd.f32 0.0, %v3569
    %v3571 = vpop.f32.mrf.mxu0
    %3572 = vmatprep.mubr.bf16.mxu0 0
    %3573 = vmatmul.mubr.bf16.gmra.mxu0 %v3375
    %v3574 = vpop.f32.mrf.mxu0
    %v3575 = vadd.f32 0.0, %v3574
    %v3576 = vpop.f32.mrf.mxu0
    %v3577 = vpop.f32.mrf.mxu0
    %v3578 = vadd.f32 0.0, %v3577
    %v3579 = vpop.f32.mrf.mxu0
    %3580 = vmatprep.mubr.bf16.mxu0 0
    %3581 = vmatmul.mubr.bf16.gmra.mxu0 %v3376
    %v3582 = vpop.f32.mrf.mxu0
    %v3583 = vadd.f32 0.0, %v3582
    %v3584 = vpop.f32.mrf.mxu0
    %v3585 = vpop.f32.mrf.mxu0
    %v3586 = vadd.f32 0.0, %v3585
    %v3587 = vpop.f32.mrf.mxu0
    %3588 = vmatprep.mubr.bf16.mxu0 0
    %3589 = vmatmul.mubr.bf16.gmra.mxu0 %v3377
    %v3590 = vpop.f32.mrf.mxu0
    %v3591 = vadd.f32 0.0, %v3590
    %v3592 = vpop.f32.mrf.mxu0
    %v3593 = vpop.f32.mrf.mxu0
    %v3594 = vadd.f32 0.0, %v3593
    %v3595 = vpop.f32.mrf.mxu0
    %3596 = vmatprep.mubr.bf16.mxu0 0
    %3597 = vmatmul.mubr.bf16.gmra.mxu0 %v3378
    %v3598 = vpop.f32.mrf.mxu0
    %v3599 = vadd.f32 0.0, %v3598
    %v3600 = vpop.f32.mrf.mxu0
    %v3601 = vpop.f32.mrf.mxu0
    %v3602 = vadd.f32 0.0, %v3601
    %v3603 = vpop.f32.mrf.mxu0
    %3604 = vdwg.mxu0
    %v3605 = vadd.f32 %v3479, %v3482
    %v3606 = vadd.f32 %v3605, %v3487
    %v3607 = vadd.f32 %v3606, %v3490
    %v3608 = vadd.f32 %v3607, %v3495
    %v3609 = vadd.f32 %v3608, %v3498
    %v3610 = vadd.f32 %v3609, %v3503
    %v3611 = vadd.f32 %v3610, %v3506
    %v3612 = vadd.f32 %v3611, %v3511
    %v3613 = vadd.f32 %v3612, %v3514
    %v3614 = vadd.f32 %v3613, %v3519
    %v3615 = vadd.f32 %v3614, %v3522
    %v3616 = vadd.f32 %v3615, %v3527
    %v3617 = vadd.f32 %v3616, %v3530
    %v3618 = vadd.f32 %v3617, %v3535
    %v3619 = vadd.f32 %v3618, %v3538
    %v3620 = vrot.slane %v3619, 4
    %v3621 = vadd.f32 %v3619, %v3620
    %v3622 = vrot.slane %v3621, 2
    %v3623 = vadd.f32 %v3621, %v3622
    %v3624 = vrot.slane %v3623, 1
    %v3625 = vadd.f32 %v3623, %v3624
    %v3626 = vadd.f32 %v3543, %v3546
    %v3627 = vadd.f32 %v3626, %v3551
    %v3628 = vadd.f32 %v3627, %v3554
    %v3629 = vadd.f32 %v3628, %v3559
    %v3630 = vadd.f32 %v3629, %v3562
    %v3631 = vadd.f32 %v3630, %v3567
    %v3632 = vadd.f32 %v3631, %v3570
    %v3633 = vadd.f32 %v3632, %v3575
    %v3634 = vadd.f32 %v3633, %v3578
    %v3635 = vadd.f32 %v3634, %v3583
    %v3636 = vadd.f32 %v3635, %v3586
    %v3637 = vadd.f32 %v3636, %v3591
    %v3638 = vadd.f32 %v3637, %v3594
    %v3639 = vadd.f32 %v3638, %v3599
    %v3640 = vadd.f32 %v3639, %v3602
    %v3641 = vrot.slane %v3640, 4
    %v3642 = vadd.f32 %v3640, %v3641
    %v3643 = vrot.slane %v3642, 2
    %v3644 = vadd.f32 %v3642, %v3643
    %v3645 = vrot.slane %v3644, 1
    %v3646 = vadd.f32 %v3644, %v3645
    %v3647 = vmul.f32 %v3625, 0.0078125
    %v3648 = vmul.f32 %v3646, 0.0078125
    %v3649 = vmul.f32 %v3479, %v3479
    %v3650 = vmul.f32 %v3482, %v3482
    %v3651 = vmul.f32 %v3487, %v3487
    %v3652 = vmul.f32 %v3490, %v3490
    %v3653 = vmul.f32 %v3495, %v3495
    %v3654 = vmul.f32 %v3498, %v3498
    %v3655 = vmul.f32 %v3503, %v3503
    %v3656 = vmul.f32 %v3506, %v3506
    %v3657 = vmul.f32 %v3511, %v3511
    %v3658 = vmul.f32 %v3514, %v3514
    %v3659 = vmul.f32 %v3519, %v3519
    %v3660 = vmul.f32 %v3522, %v3522
    %v3661 = vmul.f32 %v3527, %v3527
    %v3662 = vmul.f32 %v3530, %v3530
    %v3663 = vmul.f32 %v3535, %v3535
    %v3664 = vmul.f32 %v3538, %v3538
    %v3665 = vmul.f32 %v3543, %v3543
    %v3666 = vmul.f32 %v3546, %v3546
    %v3667 = vmul.f32 %v3551, %v3551
    %v3668 = vmul.f32 %v3554, %v3554
    %v3669 = vmul.f32 %v3559, %v3559
    %v3670 = vmul.f32 %v3562, %v3562
    %v3671 = vmul.f32 %v3567, %v3567
    %v3672 = vmul.f32 %v3570, %v3570
    %v3673 = vmul.f32 %v3575, %v3575
    %v3674 = vmul.f32 %v3578, %v3578
    %v3675 = vmul.f32 %v3583, %v3583
    %v3676 = vmul.f32 %v3586, %v3586
    %v3677 = vmul.f32 %v3591, %v3591
    %v3678 = vmul.f32 %v3594, %v3594
    %v3679 = vmul.f32 %v3599, %v3599
    %v3680 = vmul.f32 %v3602, %v3602
    %v3681 = vadd.f32 %v3649, %v3650
    %v3682 = vadd.f32 %v3681, %v3651
    %v3683 = vadd.f32 %v3682, %v3652
    %v3684 = vadd.f32 %v3683, %v3653
    %v3685 = vadd.f32 %v3684, %v3654
    %v3686 = vadd.f32 %v3685, %v3655
    %v3687 = vadd.f32 %v3686, %v3656
    %v3688 = vadd.f32 %v3687, %v3657
    %v3689 = vadd.f32 %v3688, %v3658
    %v3690 = vadd.f32 %v3689, %v3659
    %v3691 = vadd.f32 %v3690, %v3660
    %v3692 = vadd.f32 %v3691, %v3661
    %v3693 = vadd.f32 %v3692, %v3662
    %v3694 = vadd.f32 %v3693, %v3663
    %v3695 = vadd.f32 %v3694, %v3664
    %v3696 = vrot.slane %v3695, 4
    %v3697 = vadd.f32 %v3695, %v3696
    %v3698 = vrot.slane %v3697, 2
    %v3699 = vadd.f32 %v3697, %v3698
    %v3700 = vrot.slane %v3699, 1
    %v3701 = vadd.f32 %v3699, %v3700
    %v3702 = vadd.f32 %v3665, %v3666
    %v3703 = vadd.f32 %v3702, %v3667
    %v3704 = vadd.f32 %v3703, %v3668
    %v3705 = vadd.f32 %v3704, %v3669
    %v3706 = vadd.f32 %v3705, %v3670
    %v3707 = vadd.f32 %v3706, %v3671
    %v3708 = vadd.f32 %v3707, %v3672
    %v3709 = vadd.f32 %v3708, %v3673
    %v3710 = vadd.f32 %v3709, %v3674
    %v3711 = vadd.f32 %v3710, %v3675
    %v3712 = vadd.f32 %v3711, %v3676
    %v3713 = vadd.f32 %v3712, %v3677
    %v3714 = vadd.f32 %v3713, %v3678
    %v3715 = vadd.f32 %v3714, %v3679
    %v3716 = vadd.f32 %v3715, %v3680
    %v3717 = vrot.slane %v3716, 4
    %v3718 = vadd.f32 %v3716, %v3717
    %v3719 = vrot.slane %v3718, 2
    %v3720 = vadd.f32 %v3718, %v3719
    %v3721 = vrot.slane %v3720, 1
    %v3722 = vadd.f32 %v3720, %v3721
    %v3723 = vmul.f32 %v3701, 0.0078125
    %v3724 = vmul.f32 %v3722, 0.0078125
    %v3725 = vmul.f32 %v3647, %v3647
    %v3726 = vmul.f32 %v3648, %v3648
    %v3727 = vsub.f32 %v3723, %v3725
    %v3728 = vsub.f32 %v3724, %v3726
    %v3729 = vmax.f32 %v3727, 0.0
    %v3730 = vmax.f32 %v3728, 0.0
    %v3731 = vadd.f32 %v3729, 1e-05
    %v3732 = vadd.f32 %v3730, 1e-05
    %v3733 = vrsqrt.pop %v3731
    %v3734 = vrsqrt.pop %v3732
    %v3735 = vmul.f32 %v29, %v3733
    %v3736 = vmul.f32 %v29, %v3734
    %v3737 = vmul.f32 %v3647, %v3735
    %v3738 = vmul.f32 %v3648, %v3736
    %v3739 = vsub.f32 %v30, %v3737
    %v3740 = vsub.f32 %v30, %v3738
    %v3741 = vlaneseq
    %v3742 = vshrl.u32 %v3741, 7
    %v3743 = vsub.s32 0, %v3742
    %v3744 = vrot.slane %v3735, %v3743
    %v3745 = vlaneseq
    %v3746 = vshrl.u32 %v3745, 7
    %v3747 = vsub.s32 0, %v3746
    %v3748 = vrot.slane %v3736, %v3747
    %v3749 = vmul.f32 %v3479, %v3744
    %v3750 = vmul.f32 %v3482, %v3744
    %v3751 = vmul.f32 %v3487, %v3744
    %v3752 = vmul.f32 %v3490, %v3744
    %v3753 = vmul.f32 %v3495, %v3744
    %v3754 = vmul.f32 %v3498, %v3744
    %v3755 = vmul.f32 %v3503, %v3744
    %v3756 = vmul.f32 %v3506, %v3744
    %v3757 = vmul.f32 %v3511, %v3744
    %v3758 = vmul.f32 %v3514, %v3744
    %v3759 = vmul.f32 %v3519, %v3744
    %v3760 = vmul.f32 %v3522, %v3744
    %v3761 = vmul.f32 %v3527, %v3744
    %v3762 = vmul.f32 %v3530, %v3744
    %v3763 = vmul.f32 %v3535, %v3744
    %v3764 = vmul.f32 %v3538, %v3744
    %v3765 = vmul.f32 %v3543, %v3748
    %v3766 = vmul.f32 %v3546, %v3748
    %v3767 = vmul.f32 %v3551, %v3748
    %v3768 = vmul.f32 %v3554, %v3748
    %v3769 = vmul.f32 %v3559, %v3748
    %v3770 = vmul.f32 %v3562, %v3748
    %v3771 = vmul.f32 %v3567, %v3748
    %v3772 = vmul.f32 %v3570, %v3748
    %v3773 = vmul.f32 %v3575, %v3748
    %v3774 = vmul.f32 %v3578, %v3748
    %v3775 = vmul.f32 %v3583, %v3748
    %v3776 = vmul.f32 %v3586, %v3748
    %v3777 = vmul.f32 %v3591, %v3748
    %v3778 = vmul.f32 %v3594, %v3748
    %v3779 = vmul.f32 %v3599, %v3748
    %v3780 = vmul.f32 %v3602, %v3748
    %v3781 = vlaneseq
    %v3782 = vshrl.u32 %v3781, 7
    %v3783 = vsub.s32 0, %v3782
    %v3784 = vrot.slane %v3739, %v3783
    %v3785 = vlaneseq
    %v3786 = vshrl.u32 %v3785, 7
    %v3787 = vsub.s32 0, %v3786
    %v3788 = vrot.slane %v3740, %v3787
    %v3789 = vadd.f32 %v3749, %v3784
    %v3790 = vadd.f32 %v3750, %v3784
    %v3791 = vadd.f32 %v3751, %v3784
    %v3792 = vadd.f32 %v3752, %v3784
    %v3793 = vadd.f32 %v3753, %v3784
    %v3794 = vadd.f32 %v3754, %v3784
    %v3795 = vadd.f32 %v3755, %v3784
    %v3796 = vadd.f32 %v3756, %v3784
    %v3797 = vadd.f32 %v3757, %v3784
    %v3798 = vadd.f32 %v3758, %v3784
    %v3799 = vadd.f32 %v3759, %v3784
    %v3800 = vadd.f32 %v3760, %v3784
    %v3801 = vadd.f32 %v3761, %v3784
    %v3802 = vadd.f32 %v3762, %v3784
    %v3803 = vadd.f32 %v3763, %v3784
    %v3804 = vadd.f32 %v3764, %v3784
    %v3805 = vadd.f32 %v3765, %v3788
    %v3806 = vadd.f32 %v3766, %v3788
    %v3807 = vadd.f32 %v3767, %v3788
    %v3808 = vadd.f32 %v3768, %v3788
    %v3809 = vadd.f32 %v3769, %v3788
    %v3810 = vadd.f32 %v3770, %v3788
    %v3811 = vadd.f32 %v3771, %v3788
    %v3812 = vadd.f32 %v3772, %v3788
    %v3813 = vadd.f32 %v3773, %v3788
    %v3814 = vadd.f32 %v3774, %v3788
    %v3815 = vadd.f32 %v3775, %v3788
    %v3816 = vadd.f32 %v3776, %v3788
    %v3817 = vadd.f32 %v3777, %v3788
    %v3818 = vadd.f32 %v3778, %v3788
    %v3819 = vadd.f32 %v3779, %v3788
    %v3820 = vadd.f32 %v3780, %v3788
    %v3821 = vmax.f32 %v3789, 0.0
    %v3822 = vmax.f32 %v3790, 0.0
    %v3823 = vmax.f32 %v3791, 0.0
    %v3824 = vmax.f32 %v3792, 0.0
    %v3825 = vmax.f32 %v3793, 0.0
    %v3826 = vmax.f32 %v3794, 0.0
    %v3827 = vmax.f32 %v3795, 0.0
    %v3828 = vmax.f32 %v3796, 0.0
    %v3829 = vmax.f32 %v3797, 0.0
    %v3830 = vmax.f32 %v3798, 0.0
    %v3831 = vmax.f32 %v3799, 0.0
    %v3832 = vmax.f32 %v3800, 0.0
    %v3833 = vmax.f32 %v3801, 0.0
    %v3834 = vmax.f32 %v3802, 0.0
    %v3835 = vmax.f32 %v3803, 0.0
    %v3836 = vmax.f32 %v3804, 0.0
    %v3837 = vmax.f32 %v3805, 0.0
    %v3838 = vmax.f32 %v3806, 0.0
    %v3839 = vmax.f32 %v3807, 0.0
    %v3840 = vmax.f32 %v3808, 0.0
    %v3841 = vmax.f32 %v3809, 0.0
    %v3842 = vmax.f32 %v3810, 0.0
    %v3843 = vmax.f32 %v3811, 0.0
    %v3844 = vmax.f32 %v3812, 0.0
    %v3845 = vmax.f32 %v3813, 0.0
    %v3846 = vmax.f32 %v3814, 0.0
    %v3847 = vmax.f32 %v3815, 0.0
    %v3848 = vmax.f32 %v3816, 0.0
    %v3849 = vmax.f32 %v3817, 0.0
    %v3850 = vmax.f32 %v3818, 0.0
    %v3851 = vmax.f32 %v3819, 0.0
    %v3852 = vmax.f32 %v3820, 0.0
    %v3853 = vpack.c.bf16 %v3822, %v3821
    %v3854 = vpack.c.bf16 %v3824, %v3823
    %v3855 = vpack.c.bf16 %v3826, %v3825
    %v3856 = vpack.c.bf16 %v3828, %v3827
    %v3857 = vpack.c.bf16 %v3830, %v3829
    %v3858 = vpack.c.bf16 %v3832, %v3831
    %v3859 = vpack.c.bf16 %v3834, %v3833
    %v3860 = vpack.c.bf16 %v3836, %v3835
    %v3861 = vpack.c.bf16 %v3838, %v3837
    %v3862 = vpack.c.bf16 %v3840, %v3839
    %v3863 = vpack.c.bf16 %v3842, %v3841
    %v3864 = vpack.c.bf16 %v3844, %v3843
    %v3865 = vpack.c.bf16 %v3846, %v3845
    %v3866 = vpack.c.bf16 %v3848, %v3847
    %v3867 = vpack.c.bf16 %v3850, %v3849
    %v3868 = vpack.c.bf16 %v3852, %v3851
    %s3869 = scalar_lea.vmem [#allocation2], 512
    %v3870 = vld [vmem:[%s3869] sm:$0xf]
    %v3871 = vld [vmem:[%s3869 + $0x4] sm:$0xf]
    %v3872 = vld [vmem:[%s3869 + $0x8] sm:$0xf]
    %v3873 = vld [vmem:[%s3869 + $0xc] sm:$0xf]
    %v3874 = vld [vmem:[%s3869 + $0x10] sm:$0xf]
    %v3875 = vld [vmem:[%s3869 + $0x14] sm:$0xf]
    %v3876 = vld [vmem:[%s3869 + $0x18] sm:$0xf]
    %v3877 = vld [vmem:[%s3869 + $0x1c] sm:$0xf]
    %v3878 = vld [vmem:[%s3869 + $0x20] sm:$0xf]
    %v3879 = vld [vmem:[%s3869 + $0x24] sm:$0xf]
    %v3880 = vld [vmem:[%s3869 + $0x28] sm:$0xf]
    %v3881 = vld [vmem:[%s3869 + $0x2c] sm:$0xf]
    %v3882 = vld [vmem:[%s3869 + $0x30] sm:$0xf]
    %v3883 = vld [vmem:[%s3869 + $0x34] sm:$0xf]
    %v3884 = vld [vmem:[%s3869 + $0x38] sm:$0xf]
    %v3885 = vld [vmem:[%s3869 + $0x3c] sm:$0xf]
    %v3902 = vunpack.c.l.b16 %v3870
    %v3903 = vunpack.c.l.b16 %v3871
    %v3904 = vunpack.c.l.b16 %v3872
    %v3905 = vunpack.c.l.b16 %v3873
    %v3906 = vunpack.c.l.b16 %v3874
    %v3907 = vunpack.c.l.b16 %v3875
    %v3908 = vunpack.c.l.b16 %v3876
    %v3909 = vunpack.c.l.b16 %v3877
    %v3910 = vunpack.c.l.b16 %v3878
    %v3911 = vunpack.c.l.b16 %v3879
    %v3912 = vunpack.c.l.b16 %v3880
    %v3913 = vunpack.c.l.b16 %v3881
    %v3914 = vunpack.c.l.b16 %v3882
    %v3915 = vunpack.c.l.b16 %v3883
    %v3916 = vunpack.c.l.b16 %v3884
    %v3917 = vunpack.c.l.b16 %v3885
    %v3918 = vpack.c.b16 %v3903, %v3902
    %v3919 = vpack.c.b16 %v3905, %v3904
    %v3920 = vpack.c.b16 %v3907, %v3906
    %v3921 = vpack.c.b16 %v3909, %v3908
    %v3922 = vpack.c.b16 %v3911, %v3910
    %v3923 = vpack.c.b16 %v3913, %v3912
    %v3924 = vpack.c.b16 %v3915, %v3914
    %v3925 = vpack.c.b16 %v3917, %v3916
    %3934 = vmatprep.subr.bf16.mxu0 0
    %3935 = vmatpush1.bf16.msra.mxu0 %v3925
    %3936 = vmatprep.subr.bf16.mxu0 0
    %3937 = vmatpush1.bf16.msra.mxu0 %v3924
    %3938 = vmatprep.subr.bf16.mxu0 0
    %3939 = vmatpush1.bf16.msra.mxu0 %v3923
    %3940 = vmatprep.subr.bf16.mxu0 0
    %3941 = vmatpush1.bf16.msra.mxu0 %v3922
    %3942 = vmatprep.subr.bf16.mxu0 0
    %3943 = vmatpush1.bf16.msra.mxu0 %v3921
    %3944 = vmatprep.subr.bf16.mxu0 0
    %3945 = vmatpush1.bf16.msra.mxu0 %v3920
    %3946 = vmatprep.subr.bf16.mxu0 0
    %3947 = vmatpush1.bf16.msra.mxu0 %v3919
    %3948 = vmatprep.subr.bf16.mxu0 0
    %3949 = vmatpush1.bf16.msra.mxu0 %v3918
    %3950 = vmatprep.subr.bf16.mxu0 0
    %3951 = vmatpush2.bf16.msra.mxu0 0
    %3952 = vmatprep.subr.bf16.mxu0 0
    %3953 = vmatpush2.bf16.msra.mxu0 0
    %3954 = vmatprep.subr.bf16.mxu0 0
    %3955 = vmatpush2.bf16.msra.mxu0 0
    %3956 = vmatprep.subr.bf16.mxu0 0
    %3957 = vmatpush2.bf16.msra.mxu0 0
    %3958 = vmatprep.subr.bf16.mxu0 0
    %3959 = vmatpush2.bf16.msra.mxu0 0
    %3960 = vmatprep.subr.bf16.mxu0 0
    %3961 = vmatpush2.bf16.msra.mxu0 0
    %3962 = vmatprep.subr.bf16.mxu0 0
    %3963 = vmatpush2.bf16.msra.mxu0 0
    %3964 = vmatprep.subr.bf16.mxu0 0
    %3965 = vmatpush2.bf16.msra.mxu0 0
    %3966 = vmatprep.mubr.bf16.mxu0 0
    %3967 = vmatmul.mubr.bf16.gmra.mxu0 %v3853
    %v3968 = vpop.f32.mrf.mxu0
    %v3969 = vadd.f32 0.0, %v3968
    %v3970 = vpop.f32.mrf.mxu0
    %v3971 = vpop.f32.mrf.mxu0
    %v3972 = vadd.f32 0.0, %v3971
    %v3973 = vpop.f32.mrf.mxu0
    %3974 = vmatprep.mubr.bf16.mxu0 0
    %3975 = vmatmul.mubr.bf16.gmra.mxu0 %v3854
    %v3976 = vpop.f32.mrf.mxu0
    %v3977 = vadd.f32 0.0, %v3976
    %v3978 = vpop.f32.mrf.mxu0
    %v3979 = vpop.f32.mrf.mxu0
    %v3980 = vadd.f32 0.0, %v3979
    %v3981 = vpop.f32.mrf.mxu0
    %3982 = vmatprep.mubr.bf16.mxu0 0
    %3983 = vmatmul.mubr.bf16.gmra.mxu0 %v3855
    %v3984 = vpop.f32.mrf.mxu0
    %v3985 = vadd.f32 0.0, %v3984
    %v3986 = vpop.f32.mrf.mxu0
    %v3987 = vpop.f32.mrf.mxu0
    %v3988 = vadd.f32 0.0, %v3987
    %v3989 = vpop.f32.mrf.mxu0
    %3990 = vmatprep.mubr.bf16.mxu0 0
    %3991 = vmatmul.mubr.bf16.gmra.mxu0 %v3856
    %v3992 = vpop.f32.mrf.mxu0
    %v3993 = vadd.f32 0.0, %v3992
    %v3994 = vpop.f32.mrf.mxu0
    %v3995 = vpop.f32.mrf.mxu0
    %v3996 = vadd.f32 0.0, %v3995
    %v3997 = vpop.f32.mrf.mxu0
    %3998 = vmatprep.mubr.bf16.mxu0 0
    %3999 = vmatmul.mubr.bf16.gmra.mxu0 %v3857
    %v4000 = vpop.f32.mrf.mxu0
    %v4001 = vadd.f32 0.0, %v4000
    %v4002 = vpop.f32.mrf.mxu0
    %v4003 = vpop.f32.mrf.mxu0
    %v4004 = vadd.f32 0.0, %v4003
    %v4005 = vpop.f32.mrf.mxu0
    %4006 = vmatprep.mubr.bf16.mxu0 0
    %4007 = vmatmul.mubr.bf16.gmra.mxu0 %v3858
    %v4008 = vpop.f32.mrf.mxu0
    %v4009 = vadd.f32 0.0, %v4008
    %v4010 = vpop.f32.mrf.mxu0
    %v4011 = vpop.f32.mrf.mxu0
    %v4012 = vadd.f32 0.0, %v4011
    %v4013 = vpop.f32.mrf.mxu0
    %4014 = vmatprep.mubr.bf16.mxu0 0
    %4015 = vmatmul.mubr.bf16.gmra.mxu0 %v3859
    %v4016 = vpop.f32.mrf.mxu0
    %v4017 = vadd.f32 0.0, %v4016
    %v4018 = vpop.f32.mrf.mxu0
    %v4019 = vpop.f32.mrf.mxu0
    %v4020 = vadd.f32 0.0, %v4019
    %v4021 = vpop.f32.mrf.mxu0
    %4022 = vmatprep.mubr.bf16.mxu0 0
    %4023 = vmatmul.mubr.bf16.gmra.mxu0 %v3860
    %v4024 = vpop.f32.mrf.mxu0
    %v4025 = vadd.f32 0.0, %v4024
    %v4026 = vpop.f32.mrf.mxu0
    %v4027 = vpop.f32.mrf.mxu0
    %v4028 = vadd.f32 0.0, %v4027
    %v4029 = vpop.f32.mrf.mxu0
    %4030 = vmatprep.mubr.bf16.mxu0 0
    %4031 = vmatmul.mubr.bf16.gmra.mxu0 %v3861
    %v4032 = vpop.f32.mrf.mxu0
    %v4033 = vadd.f32 0.0, %v4032
    %v4034 = vpop.f32.mrf.mxu0
    %v4035 = vpop.f32.mrf.mxu0
    %v4036 = vadd.f32 0.0, %v4035
    %v4037 = vpop.f32.mrf.mxu0
    %4038 = vmatprep.mubr.bf16.mxu0 0
    %4039 = vmatmul.mubr.bf16.gmra.mxu0 %v3862
    %v4040 = vpop.f32.mrf.mxu0
    %v4041 = vadd.f32 0.0, %v4040
    %v4042 = vpop.f32.mrf.mxu0
    %v4043 = vpop.f32.mrf.mxu0
    %v4044 = vadd.f32 0.0, %v4043
    %v4045 = vpop.f32.mrf.mxu0
    %4046 = vmatprep.mubr.bf16.mxu0 0
    %4047 = vmatmul.mubr.bf16.gmra.mxu0 %v3863
    %v4048 = vpop.f32.mrf.mxu0
    %v4049 = vadd.f32 0.0, %v4048
    %v4050 = vpop.f32.mrf.mxu0
    %v4051 = vpop.f32.mrf.mxu0
    %v4052 = vadd.f32 0.0, %v4051
    %v4053 = vpop.f32.mrf.mxu0
    %4054 = vmatprep.mubr.bf16.mxu0 0
    %4055 = vmatmul.mubr.bf16.gmra.mxu0 %v3864
    %v4056 = vpop.f32.mrf.mxu0
    %v4057 = vadd.f32 0.0, %v4056
    %v4058 = vpop.f32.mrf.mxu0
    %v4059 = vpop.f32.mrf.mxu0
    %v4060 = vadd.f32 0.0, %v4059
    %v4061 = vpop.f32.mrf.mxu0
    %4062 = vmatprep.mubr.bf16.mxu0 0
    %4063 = vmatmul.mubr.bf16.gmra.mxu0 %v3865
    %v4064 = vpop.f32.mrf.mxu0
    %v4065 = vadd.f32 0.0, %v4064
    %v4066 = vpop.f32.mrf.mxu0
    %v4067 = vpop.f32.mrf.mxu0
    %v4068 = vadd.f32 0.0, %v4067
    %v4069 = vpop.f32.mrf.mxu0
    %4070 = vmatprep.mubr.bf16.mxu0 0
    %4071 = vmatmul.mubr.bf16.gmra.mxu0 %v3866
    %v4072 = vpop.f32.mrf.mxu0
    %v4073 = vadd.f32 0.0, %v4072
    %v4074 = vpop.f32.mrf.mxu0
    %v4075 = vpop.f32.mrf.mxu0
    %v4076 = vadd.f32 0.0, %v4075
    %v4077 = vpop.f32.mrf.mxu0
    %4078 = vmatprep.mubr.bf16.mxu0 0
    %4079 = vmatmul.mubr.bf16.gmra.mxu0 %v3867
    %v4080 = vpop.f32.mrf.mxu0
    %v4081 = vadd.f32 0.0, %v4080
    %v4082 = vpop.f32.mrf.mxu0
    %v4083 = vpop.f32.mrf.mxu0
    %v4084 = vadd.f32 0.0, %v4083
    %v4085 = vpop.f32.mrf.mxu0
    %4086 = vmatprep.mubr.bf16.mxu0 0
    %4087 = vmatmul.mubr.bf16.gmra.mxu0 %v3868
    %v4088 = vpop.f32.mrf.mxu0
    %v4089 = vadd.f32 0.0, %v4088
    %v4090 = vpop.f32.mrf.mxu0
    %v4091 = vpop.f32.mrf.mxu0
    %v4092 = vadd.f32 0.0, %v4091
    %v4093 = vpop.f32.mrf.mxu0
    %4094 = vdwg.mxu0
    %v4095 = vadd.f32 %v3969, %v3972
    %v4096 = vadd.f32 %v4095, %v3977
    %v4097 = vadd.f32 %v4096, %v3980
    %v4098 = vadd.f32 %v4097, %v3985
    %v4099 = vadd.f32 %v4098, %v3988
    %v4100 = vadd.f32 %v4099, %v3993
    %v4101 = vadd.f32 %v4100, %v3996
    %v4102 = vadd.f32 %v4101, %v4001
    %v4103 = vadd.f32 %v4102, %v4004
    %v4104 = vadd.f32 %v4103, %v4009
    %v4105 = vadd.f32 %v4104, %v4012
    %v4106 = vadd.f32 %v4105, %v4017
    %v4107 = vadd.f32 %v4106, %v4020
    %v4108 = vadd.f32 %v4107, %v4025
    %v4109 = vadd.f32 %v4108, %v4028
    %v4110 = vrot.slane %v4109, 4
    %v4111 = vadd.f32 %v4109, %v4110
    %v4112 = vrot.slane %v4111, 2
    %v4113 = vadd.f32 %v4111, %v4112
    %v4114 = vrot.slane %v4113, 1
    %v4115 = vadd.f32 %v4113, %v4114
    %v4116 = vadd.f32 %v4033, %v4036
    %v4117 = vadd.f32 %v4116, %v4041
    %v4118 = vadd.f32 %v4117, %v4044
    %v4119 = vadd.f32 %v4118, %v4049
    %v4120 = vadd.f32 %v4119, %v4052
    %v4121 = vadd.f32 %v4120, %v4057
    %v4122 = vadd.f32 %v4121, %v4060
    %v4123 = vadd.f32 %v4122, %v4065
    %v4124 = vadd.f32 %v4123, %v4068
    %v4125 = vadd.f32 %v4124, %v4073
    %v4126 = vadd.f32 %v4125, %v4076
    %v4127 = vadd.f32 %v4126, %v4081
    %v4128 = vadd.f32 %v4127, %v4084
    %v4129 = vadd.f32 %v4128, %v4089
    %v4130 = vadd.f32 %v4129, %v4092
    %v4131 = vrot.slane %v4130, 4
    %v4132 = vadd.f32 %v4130, %v4131
    %v4133 = vrot.slane %v4132, 2
    %v4134 = vadd.f32 %v4132, %v4133
    %v4135 = vrot.slane %v4134, 1
    %v4136 = vadd.f32 %v4134, %v4135
    %v4137 = vmul.f32 %v4115, 0.0078125
    %v4138 = vmul.f32 %v4136, 0.0078125
    %v4139 = vmul.f32 %v3969, %v3969
    %v4140 = vmul.f32 %v3972, %v3972
    %v4141 = vmul.f32 %v3977, %v3977
    %v4142 = vmul.f32 %v3980, %v3980
    %v4143 = vmul.f32 %v3985, %v3985
    %v4144 = vmul.f32 %v3988, %v3988
    %v4145 = vmul.f32 %v3993, %v3993
    %v4146 = vmul.f32 %v3996, %v3996
    %v4147 = vmul.f32 %v4001, %v4001
    %v4148 = vmul.f32 %v4004, %v4004
    %v4149 = vmul.f32 %v4009, %v4009
    %v4150 = vmul.f32 %v4012, %v4012
    %v4151 = vmul.f32 %v4017, %v4017
    %v4152 = vmul.f32 %v4020, %v4020
    %v4153 = vmul.f32 %v4025, %v4025
    %v4154 = vmul.f32 %v4028, %v4028
    %v4155 = vmul.f32 %v4033, %v4033
    %v4156 = vmul.f32 %v4036, %v4036
    %v4157 = vmul.f32 %v4041, %v4041
    %v4158 = vmul.f32 %v4044, %v4044
    %v4159 = vmul.f32 %v4049, %v4049
    %v4160 = vmul.f32 %v4052, %v4052
    %v4161 = vmul.f32 %v4057, %v4057
    %v4162 = vmul.f32 %v4060, %v4060
    %v4163 = vmul.f32 %v4065, %v4065
    %v4164 = vmul.f32 %v4068, %v4068
    %v4165 = vmul.f32 %v4073, %v4073
    %v4166 = vmul.f32 %v4076, %v4076
    %v4167 = vmul.f32 %v4081, %v4081
    %v4168 = vmul.f32 %v4084, %v4084
    %v4169 = vmul.f32 %v4089, %v4089
    %v4170 = vmul.f32 %v4092, %v4092
    %v4171 = vadd.f32 %v4139, %v4140
    %v4172 = vadd.f32 %v4171, %v4141
    %v4173 = vadd.f32 %v4172, %v4142
    %v4174 = vadd.f32 %v4173, %v4143
    %v4175 = vadd.f32 %v4174, %v4144
    %v4176 = vadd.f32 %v4175, %v4145
    %v4177 = vadd.f32 %v4176, %v4146
    %v4178 = vadd.f32 %v4177, %v4147
    %v4179 = vadd.f32 %v4178, %v4148
    %v4180 = vadd.f32 %v4179, %v4149
    %v4181 = vadd.f32 %v4180, %v4150
    %v4182 = vadd.f32 %v4181, %v4151
    %v4183 = vadd.f32 %v4182, %v4152
    %v4184 = vadd.f32 %v4183, %v4153
    %v4185 = vadd.f32 %v4184, %v4154
    %v4186 = vrot.slane %v4185, 4
    %v4187 = vadd.f32 %v4185, %v4186
    %v4188 = vrot.slane %v4187, 2
    %v4189 = vadd.f32 %v4187, %v4188
    %v4190 = vrot.slane %v4189, 1
    %v4191 = vadd.f32 %v4189, %v4190
    %v4192 = vadd.f32 %v4155, %v4156
    %v4193 = vadd.f32 %v4192, %v4157
    %v4194 = vadd.f32 %v4193, %v4158
    %v4195 = vadd.f32 %v4194, %v4159
    %v4196 = vadd.f32 %v4195, %v4160
    %v4197 = vadd.f32 %v4196, %v4161
    %v4198 = vadd.f32 %v4197, %v4162
    %v4199 = vadd.f32 %v4198, %v4163
    %v4200 = vadd.f32 %v4199, %v4164
    %v4201 = vadd.f32 %v4200, %v4165
    %v4202 = vadd.f32 %v4201, %v4166
    %v4203 = vadd.f32 %v4202, %v4167
    %v4204 = vadd.f32 %v4203, %v4168
    %v4205 = vadd.f32 %v4204, %v4169
    %v4206 = vadd.f32 %v4205, %v4170
    %v4207 = vrot.slane %v4206, 4
    %v4208 = vadd.f32 %v4206, %v4207
    %v4209 = vrot.slane %v4208, 2
    %v4210 = vadd.f32 %v4208, %v4209
    %v4211 = vrot.slane %v4210, 1
    %v4212 = vadd.f32 %v4210, %v4211
    %v4213 = vmul.f32 %v4191, 0.0078125
    %v4214 = vmul.f32 %v4212, 0.0078125
    %v4215 = vmul.f32 %v4137, %v4137
    %v4216 = vmul.f32 %v4138, %v4138
    %v4217 = vsub.f32 %v4213, %v4215
    %v4218 = vsub.f32 %v4214, %v4216
    %v4219 = vmax.f32 %v4217, 0.0
    %v4220 = vmax.f32 %v4218, 0.0
    %v4221 = vadd.f32 %v4219, 1e-05
    %v4222 = vadd.f32 %v4220, 1e-05
    %v4223 = vrsqrt.pop %v4221
    %v4224 = vrsqrt.pop %v4222
    %v4225 = vmul.f32 %v29, %v4223
    %v4226 = vmul.f32 %v29, %v4224
    %v4227 = vmul.f32 %v4137, %v4225
    %v4228 = vmul.f32 %v4138, %v4226
    %v4229 = vsub.f32 %v30, %v4227
    %v4230 = vsub.f32 %v30, %v4228
    %v4231 = vlaneseq
    %v4232 = vshrl.u32 %v4231, 7
    %v4233 = vsub.s32 0, %v4232
    %v4234 = vrot.slane %v4225, %v4233
    %v4235 = vlaneseq
    %v4236 = vshrl.u32 %v4235, 7
    %v4237 = vsub.s32 0, %v4236
    %v4238 = vrot.slane %v4226, %v4237
    %v4239 = vmul.f32 %v3969, %v4234
    %v4240 = vmul.f32 %v3972, %v4234
    %v4241 = vmul.f32 %v3977, %v4234
    %v4242 = vmul.f32 %v3980, %v4234
    %v4243 = vmul.f32 %v3985, %v4234
    %v4244 = vmul.f32 %v3988, %v4234
    %v4245 = vmul.f32 %v3993, %v4234
    %v4246 = vmul.f32 %v3996, %v4234
    %v4247 = vmul.f32 %v4001, %v4234
    %v4248 = vmul.f32 %v4004, %v4234
    %v4249 = vmul.f32 %v4009, %v4234
    %v4250 = vmul.f32 %v4012, %v4234
    %v4251 = vmul.f32 %v4017, %v4234
    %v4252 = vmul.f32 %v4020, %v4234
    %v4253 = vmul.f32 %v4025, %v4234
    %v4254 = vmul.f32 %v4028, %v4234
    %v4255 = vmul.f32 %v4033, %v4238
    %v4256 = vmul.f32 %v4036, %v4238
    %v4257 = vmul.f32 %v4041, %v4238
    %v4258 = vmul.f32 %v4044, %v4238
    %v4259 = vmul.f32 %v4049, %v4238
    %v4260 = vmul.f32 %v4052, %v4238
    %v4261 = vmul.f32 %v4057, %v4238
    %v4262 = vmul.f32 %v4060, %v4238
    %v4263 = vmul.f32 %v4065, %v4238
    %v4264 = vmul.f32 %v4068, %v4238
    %v4265 = vmul.f32 %v4073, %v4238
    %v4266 = vmul.f32 %v4076, %v4238
    %v4267 = vmul.f32 %v4081, %v4238
    %v4268 = vmul.f32 %v4084, %v4238
    %v4269 = vmul.f32 %v4089, %v4238
    %v4270 = vmul.f32 %v4092, %v4238
    %v4271 = vlaneseq
    %v4272 = vshrl.u32 %v4271, 7
    %v4273 = vsub.s32 0, %v4272
    %v4274 = vrot.slane %v4229, %v4273
    %v4275 = vlaneseq
    %v4276 = vshrl.u32 %v4275, 7
    %v4277 = vsub.s32 0, %v4276
    %v4278 = vrot.slane %v4230, %v4277
    %v4279 = vadd.f32 %v4239, %v4274
    %v4280 = vadd.f32 %v4240, %v4274
    %v4281 = vadd.f32 %v4241, %v4274
    %v4282 = vadd.f32 %v4242, %v4274
    %v4283 = vadd.f32 %v4243, %v4274
    %v4284 = vadd.f32 %v4244, %v4274
    %v4285 = vadd.f32 %v4245, %v4274
    %v4286 = vadd.f32 %v4246, %v4274
    %v4287 = vadd.f32 %v4247, %v4274
    %v4288 = vadd.f32 %v4248, %v4274
    %v4289 = vadd.f32 %v4249, %v4274
    %v4290 = vadd.f32 %v4250, %v4274
    %v4291 = vadd.f32 %v4251, %v4274
    %v4292 = vadd.f32 %v4252, %v4274
    %v4293 = vadd.f32 %v4253, %v4274
    %v4294 = vadd.f32 %v4254, %v4274
    %v4295 = vadd.f32 %v4255, %v4278
    %v4296 = vadd.f32 %v4256, %v4278
    %v4297 = vadd.f32 %v4257, %v4278
    %v4298 = vadd.f32 %v4258, %v4278
    %v4299 = vadd.f32 %v4259, %v4278
    %v4300 = vadd.f32 %v4260, %v4278
    %v4301 = vadd.f32 %v4261, %v4278
    %v4302 = vadd.f32 %v4262, %v4278
    %v4303 = vadd.f32 %v4263, %v4278
    %v4304 = vadd.f32 %v4264, %v4278
    %v4305 = vadd.f32 %v4265, %v4278
    %v4306 = vadd.f32 %v4266, %v4278
    %v4307 = vadd.f32 %v4267, %v4278
    %v4308 = vadd.f32 %v4268, %v4278
    %v4309 = vadd.f32 %v4269, %v4278
    %v4310 = vadd.f32 %v4270, %v4278
    %v4311 = vmax.f32 %v4279, 0.0
    %v4312 = vmax.f32 %v4280, 0.0
    %v4313 = vmax.f32 %v4281, 0.0
    %v4314 = vmax.f32 %v4282, 0.0
    %v4315 = vmax.f32 %v4283, 0.0
    %v4316 = vmax.f32 %v4284, 0.0
    %v4317 = vmax.f32 %v4285, 0.0
    %v4318 = vmax.f32 %v4286, 0.0
    %v4319 = vmax.f32 %v4287, 0.0
    %v4320 = vmax.f32 %v4288, 0.0
    %v4321 = vmax.f32 %v4289, 0.0
    %v4322 = vmax.f32 %v4290, 0.0
    %v4323 = vmax.f32 %v4291, 0.0
    %v4324 = vmax.f32 %v4292, 0.0
    %v4325 = vmax.f32 %v4293, 0.0
    %v4326 = vmax.f32 %v4294, 0.0
    %v4327 = vmax.f32 %v4295, 0.0
    %v4328 = vmax.f32 %v4296, 0.0
    %v4329 = vmax.f32 %v4297, 0.0
    %v4330 = vmax.f32 %v4298, 0.0
    %v4331 = vmax.f32 %v4299, 0.0
    %v4332 = vmax.f32 %v4300, 0.0
    %v4333 = vmax.f32 %v4301, 0.0
    %v4334 = vmax.f32 %v4302, 0.0
    %v4335 = vmax.f32 %v4303, 0.0
    %v4336 = vmax.f32 %v4304, 0.0
    %v4337 = vmax.f32 %v4305, 0.0
    %v4338 = vmax.f32 %v4306, 0.0
    %v4339 = vmax.f32 %v4307, 0.0
    %v4340 = vmax.f32 %v4308, 0.0
    %v4341 = vmax.f32 %v4309, 0.0
    %v4342 = vmax.f32 %v4310, 0.0
    %v4343 = vpack.c.bf16 %v4312, %v4311
    %v4344 = vpack.c.bf16 %v4314, %v4313
    %v4345 = vpack.c.bf16 %v4316, %v4315
    %v4346 = vpack.c.bf16 %v4318, %v4317
    %v4347 = vpack.c.bf16 %v4320, %v4319
    %v4348 = vpack.c.bf16 %v4322, %v4321
    %v4349 = vpack.c.bf16 %v4324, %v4323
    %v4350 = vpack.c.bf16 %v4326, %v4325
    %v4351 = vpack.c.bf16 %v4328, %v4327
    %v4352 = vpack.c.bf16 %v4330, %v4329
    %v4353 = vpack.c.bf16 %v4332, %v4331
    %v4354 = vpack.c.bf16 %v4334, %v4333
    %v4355 = vpack.c.bf16 %v4336, %v4335
    %v4356 = vpack.c.bf16 %v4338, %v4337
    %v4357 = vpack.c.bf16 %v4340, %v4339
    %v4358 = vpack.c.bf16 %v4342, %v4341
    %s4359 = scalar_lea.vmem [#allocation2], 576
    %v4360 = vld [vmem:[%s4359] sm:$0xf]
    %v4361 = vld [vmem:[%s4359 + $0x4] sm:$0xf]
    %v4362 = vld [vmem:[%s4359 + $0x8] sm:$0xf]
    %v4363 = vld [vmem:[%s4359 + $0xc] sm:$0xf]
    %v4364 = vld [vmem:[%s4359 + $0x10] sm:$0xf]
    %v4365 = vld [vmem:[%s4359 + $0x14] sm:$0xf]
    %v4366 = vld [vmem:[%s4359 + $0x18] sm:$0xf]
    %v4367 = vld [vmem:[%s4359 + $0x1c] sm:$0xf]
    %v4368 = vld [vmem:[%s4359 + $0x20] sm:$0xf]
    %v4369 = vld [vmem:[%s4359 + $0x24] sm:$0xf]
    %v4370 = vld [vmem:[%s4359 + $0x28] sm:$0xf]
    %v4371 = vld [vmem:[%s4359 + $0x2c] sm:$0xf]
    %v4372 = vld [vmem:[%s4359 + $0x30] sm:$0xf]
    %v4373 = vld [vmem:[%s4359 + $0x34] sm:$0xf]
    %v4374 = vld [vmem:[%s4359 + $0x38] sm:$0xf]
    %v4375 = vld [vmem:[%s4359 + $0x3c] sm:$0xf]
    %v4376 = vlaneseq
    %v4377 = vshrl.u32 %v4376, 7
    %v4378 = vsub.s32 0, %v4377
    %v4379 = vrot.slane %v32, %v4378
    %v4396 = vunpack.c.l.b16 %v4360
    %v4397 = vunpack.c.l.b16 %v4361
    %v4398 = vunpack.c.l.b16 %v4362
    %v4399 = vunpack.c.l.b16 %v4363
    %v4400 = vunpack.c.l.b16 %v4364
    %v4401 = vunpack.c.l.b16 %v4365
    %v4402 = vunpack.c.l.b16 %v4366
    %v4403 = vunpack.c.l.b16 %v4367
    %v4404 = vunpack.c.l.b16 %v4368
    %v4405 = vunpack.c.l.b16 %v4369
    %v4406 = vunpack.c.l.b16 %v4370
    %v4407 = vunpack.c.l.b16 %v4371
    %v4408 = vunpack.c.l.b16 %v4372
    %v4409 = vunpack.c.l.b16 %v4373
    %v4410 = vunpack.c.l.b16 %v4374
    %v4411 = vunpack.c.l.b16 %v4375
    %v4412 = vpack.c.b16 %v4397, %v4396
    %v4413 = vpack.c.b16 %v4399, %v4398
    %v4414 = vpack.c.b16 %v4401, %v4400
    %v4415 = vpack.c.b16 %v4403, %v4402
    %v4416 = vpack.c.b16 %v4405, %v4404
    %v4417 = vpack.c.b16 %v4407, %v4406
    %v4418 = vpack.c.b16 %v4409, %v4408
    %v4419 = vpack.c.b16 %v4411, %v4410
    %4428 = vmatprep.subr.bf16.mxu0 0
    %4429 = vmatpush1.bf16.msra.mxu0 %v4419
    %4430 = vmatprep.subr.bf16.mxu0 0
    %4431 = vmatpush1.bf16.msra.mxu0 %v4418
    %4432 = vmatprep.subr.bf16.mxu0 0
    %4433 = vmatpush1.bf16.msra.mxu0 %v4417
    %4434 = vmatprep.subr.bf16.mxu0 0
    %4435 = vmatpush1.bf16.msra.mxu0 %v4416
    %4436 = vmatprep.subr.bf16.mxu0 0
    %4437 = vmatpush1.bf16.msra.mxu0 %v4415
    %4438 = vmatprep.subr.bf16.mxu0 0
    %4439 = vmatpush1.bf16.msra.mxu0 %v4414
    %4440 = vmatprep.subr.bf16.mxu0 0
    %4441 = vmatpush1.bf16.msra.mxu0 %v4413
    %4442 = vmatprep.subr.bf16.mxu0 0
    %4443 = vmatpush1.bf16.msra.mxu0 %v4412
    %4444 = vmatprep.subr.bf16.mxu0 0
    %4445 = vmatpush2.bf16.msra.mxu0 0
    %4446 = vmatprep.subr.bf16.mxu0 0
    %4447 = vmatpush2.bf16.msra.mxu0 0
    %4448 = vmatprep.subr.bf16.mxu0 0
    %4449 = vmatpush2.bf16.msra.mxu0 0
    %4450 = vmatprep.subr.bf16.mxu0 0
    %4451 = vmatpush2.bf16.msra.mxu0 0
    %4452 = vmatprep.subr.bf16.mxu0 0
    %4453 = vmatpush2.bf16.msra.mxu0 0
    %4454 = vmatprep.subr.bf16.mxu0 0
    %4455 = vmatpush2.bf16.msra.mxu0 0
    %4456 = vmatprep.subr.bf16.mxu0 0
    %4457 = vmatpush2.bf16.msra.mxu0 0
    %4458 = vmatprep.subr.bf16.mxu0 0
    %4459 = vmatpush2.bf16.msra.mxu0 0
    %4460 = vmatprep.mubr.bf16.mxu0 0
    %4461 = vmatmul.mubr.bf16.gmra.mxu0 %v4343
    %v4462 = vpop.f32.mrf.mxu0
    %v4463 = vadd.f32 %v4379, %v4462
    %v4464 = vpop.f32.mrf.mxu0
    %v4465 = vpop.f32.mrf.mxu0
    %v4466 = vadd.f32 %v4379, %v4465
    %v4467 = vpop.f32.mrf.mxu0
    %4468 = vmatprep.mubr.bf16.mxu0 0
    %4469 = vmatmul.mubr.bf16.gmra.mxu0 %v4344
    %v4470 = vpop.f32.mrf.mxu0
    %v4471 = vadd.f32 %v4379, %v4470
    %v4472 = vpop.f32.mrf.mxu0
    %v4473 = vpop.f32.mrf.mxu0
    %v4474 = vadd.f32 %v4379, %v4473
    %v4475 = vpop.f32.mrf.mxu0
    %4476 = vmatprep.mubr.bf16.mxu0 0
    %4477 = vmatmul.mubr.bf16.gmra.mxu0 %v4345
    %v4478 = vpop.f32.mrf.mxu0
    %v4479 = vadd.f32 %v4379, %v4478
    %v4480 = vpop.f32.mrf.mxu0
    %v4481 = vpop.f32.mrf.mxu0
    %v4482 = vadd.f32 %v4379, %v4481
    %v4483 = vpop.f32.mrf.mxu0
    %4484 = vmatprep.mubr.bf16.mxu0 0
    %4485 = vmatmul.mubr.bf16.gmra.mxu0 %v4346
    %v4486 = vpop.f32.mrf.mxu0
    %v4487 = vadd.f32 %v4379, %v4486
    %v4488 = vpop.f32.mrf.mxu0
    %v4489 = vpop.f32.mrf.mxu0
    %v4490 = vadd.f32 %v4379, %v4489
    %v4491 = vpop.f32.mrf.mxu0
    %4492 = vmatprep.mubr.bf16.mxu0 0
    %4493 = vmatmul.mubr.bf16.gmra.mxu0 %v4347
    %v4494 = vpop.f32.mrf.mxu0
    %v4495 = vadd.f32 %v4379, %v4494
    %v4496 = vpop.f32.mrf.mxu0
    %v4497 = vpop.f32.mrf.mxu0
    %v4498 = vadd.f32 %v4379, %v4497
    %v4499 = vpop.f32.mrf.mxu0
    %4500 = vmatprep.mubr.bf16.mxu0 0
    %4501 = vmatmul.mubr.bf16.gmra.mxu0 %v4348
    %v4502 = vpop.f32.mrf.mxu0
    %v4503 = vadd.f32 %v4379, %v4502
    %v4504 = vpop.f32.mrf.mxu0
    %v4505 = vpop.f32.mrf.mxu0
    %v4506 = vadd.f32 %v4379, %v4505
    %v4507 = vpop.f32.mrf.mxu0
    %4508 = vmatprep.mubr.bf16.mxu0 0
    %4509 = vmatmul.mubr.bf16.gmra.mxu0 %v4349
    %v4510 = vpop.f32.mrf.mxu0
    %v4511 = vadd.f32 %v4379, %v4510
    %v4512 = vpop.f32.mrf.mxu0
    %v4513 = vpop.f32.mrf.mxu0
    %v4514 = vadd.f32 %v4379, %v4513
    %v4515 = vpop.f32.mrf.mxu0
    %4516 = vmatprep.mubr.bf16.mxu0 0
    %4517 = vmatmul.mubr.bf16.gmra.mxu0 %v4350
    %v4518 = vpop.f32.mrf.mxu0
    %v4519 = vadd.f32 %v4379, %v4518
    %v4520 = vpop.f32.mrf.mxu0
    %v4521 = vpop.f32.mrf.mxu0
    %v4522 = vadd.f32 %v4379, %v4521
    %v4523 = vpop.f32.mrf.mxu0
    %4524 = vmatprep.mubr.bf16.mxu0 0
    %4525 = vmatmul.mubr.bf16.gmra.mxu0 %v4351
    %v4526 = vpop.f32.mrf.mxu0
    %v4527 = vadd.f32 %v4379, %v4526
    %v4528 = vpop.f32.mrf.mxu0
    %v4529 = vpop.f32.mrf.mxu0
    %v4530 = vadd.f32 %v4379, %v4529
    %v4531 = vpop.f32.mrf.mxu0
    %4532 = vmatprep.mubr.bf16.mxu0 0
    %4533 = vmatmul.mubr.bf16.gmra.mxu0 %v4352
    %v4534 = vpop.f32.mrf.mxu0
    %v4535 = vadd.f32 %v4379, %v4534
    %v4536 = vpop.f32.mrf.mxu0
    %v4537 = vpop.f32.mrf.mxu0
    %v4538 = vadd.f32 %v4379, %v4537
    %v4539 = vpop.f32.mrf.mxu0
    %4540 = vmatprep.mubr.bf16.mxu0 0
    %4541 = vmatmul.mubr.bf16.gmra.mxu0 %v4353
    %v4542 = vpop.f32.mrf.mxu0
    %v4543 = vadd.f32 %v4379, %v4542
    %v4544 = vpop.f32.mrf.mxu0
    %v4545 = vpop.f32.mrf.mxu0
    %v4546 = vadd.f32 %v4379, %v4545
    %v4547 = vpop.f32.mrf.mxu0
    %4548 = vmatprep.mubr.bf16.mxu0 0
    %4549 = vmatmul.mubr.bf16.gmra.mxu0 %v4354
    %v4550 = vpop.f32.mrf.mxu0
    %v4551 = vadd.f32 %v4379, %v4550
    %v4552 = vpop.f32.mrf.mxu0
    %v4553 = vpop.f32.mrf.mxu0
    %v4554 = vadd.f32 %v4379, %v4553
    %v4555 = vpop.f32.mrf.mxu0
    %4556 = vmatprep.mubr.bf16.mxu0 0
    %4557 = vmatmul.mubr.bf16.gmra.mxu0 %v4355
    %v4558 = vpop.f32.mrf.mxu0
    %v4559 = vadd.f32 %v4379, %v4558
    %v4560 = vpop.f32.mrf.mxu0
    %v4561 = vpop.f32.mrf.mxu0
    %v4562 = vadd.f32 %v4379, %v4561
    %v4563 = vpop.f32.mrf.mxu0
    %4564 = vmatprep.mubr.bf16.mxu0 0
    %4565 = vmatmul.mubr.bf16.gmra.mxu0 %v4356
    %v4566 = vpop.f32.mrf.mxu0
    %v4567 = vadd.f32 %v4379, %v4566
    %v4568 = vpop.f32.mrf.mxu0
    %v4569 = vpop.f32.mrf.mxu0
    %v4570 = vadd.f32 %v4379, %v4569
    %v4571 = vpop.f32.mrf.mxu0
    %4572 = vmatprep.mubr.bf16.mxu0 0
    %4573 = vmatmul.mubr.bf16.gmra.mxu0 %v4357
    %v4574 = vpop.f32.mrf.mxu0
    %v4575 = vadd.f32 %v4379, %v4574
    %v4576 = vpop.f32.mrf.mxu0
    %v4577 = vpop.f32.mrf.mxu0
    %v4578 = vadd.f32 %v4379, %v4577
    %v4579 = vpop.f32.mrf.mxu0
    %4580 = vmatprep.mubr.bf16.mxu0 0
    %4581 = vmatmul.mubr.bf16.gmra.mxu0 %v4358
    %v4582 = vpop.f32.mrf.mxu0
    %v4583 = vadd.f32 %v4379, %v4582
    %v4584 = vpop.f32.mrf.mxu0
    %v4585 = vpop.f32.mrf.mxu0
    %v4586 = vadd.f32 %v4379, %v4585
    %v4587 = vpop.f32.mrf.mxu0
    %4588 = vdwg.mxu0
    %v4589 = vmax.f32 %v4463, 0.0
    %v4590 = vmax.f32 %v4466, 0.0
    %v4591 = vmax.f32 %v4471, 0.0
    %v4592 = vmax.f32 %v4474, 0.0
    %v4593 = vmax.f32 %v4479, 0.0
    %v4594 = vmax.f32 %v4482, 0.0
    %v4595 = vmax.f32 %v4487, 0.0
    %v4596 = vmax.f32 %v4490, 0.0
    %v4597 = vmax.f32 %v4495, 0.0
    %v4598 = vmax.f32 %v4498, 0.0
    %v4599 = vmax.f32 %v4503, 0.0
    %v4600 = vmax.f32 %v4506, 0.0
    %v4601 = vmax.f32 %v4511, 0.0
    %v4602 = vmax.f32 %v4514, 0.0
    %v4603 = vmax.f32 %v4519, 0.0
    %v4604 = vmax.f32 %v4522, 0.0
    %v4605 = vmax.f32 %v4527, 0.0
    %v4606 = vmax.f32 %v4530, 0.0
    %v4607 = vmax.f32 %v4535, 0.0
    %v4608 = vmax.f32 %v4538, 0.0
    %v4609 = vmax.f32 %v4543, 0.0
    %v4610 = vmax.f32 %v4546, 0.0
    %v4611 = vmax.f32 %v4551, 0.0
    %v4612 = vmax.f32 %v4554, 0.0
    %v4613 = vmax.f32 %v4559, 0.0
    %v4614 = vmax.f32 %v4562, 0.0
    %v4615 = vmax.f32 %v4567, 0.0
    %v4616 = vmax.f32 %v4570, 0.0
    %v4617 = vmax.f32 %v4575, 0.0
    %v4618 = vmax.f32 %v4578, 0.0
    %v4619 = vmax.f32 %v4583, 0.0
    %v4620 = vmax.f32 %v4586, 0.0
    %4621 = vst [vmem:[%s3] sm:$0xff] %v4589
    %4622 = vst [vmem:[%s3 + $0x8] sm:$0xff] %v4590
    %4623 = vst [vmem:[%s3 + $0x10] sm:$0xff] %v4591
    %4624 = vst [vmem:[%s3 + $0x18] sm:$0xff] %v4592
    %4625 = vst [vmem:[%s3 + $0x20] sm:$0xff] %v4593
    %4626 = vst [vmem:[%s3 + $0x28] sm:$0xff] %v4594
    %4627 = vst [vmem:[%s3 + $0x30] sm:$0xff] %v4595
    %4628 = vst [vmem:[%s3 + $0x38] sm:$0xff] %v4596
    %4629 = vst [vmem:[%s3 + $0x40] sm:$0xff] %v4597
    %4630 = vst [vmem:[%s3 + $0x48] sm:$0xff] %v4598
    %4631 = vst [vmem:[%s3 + $0x50] sm:$0xff] %v4599
    %4632 = vst [vmem:[%s3 + $0x58] sm:$0xff] %v4600
    %4633 = vst [vmem:[%s3 + $0x60] sm:$0xff] %v4601
    %4634 = vst [vmem:[%s3 + $0x68] sm:$0xff] %v4602
    %4635 = vst [vmem:[%s3 + $0x70] sm:$0xff] %v4603
    %4636 = vst [vmem:[%s3 + $0x78] sm:$0xff] %v4604
    %4637 = vst [vmem:[%s3 + $0x80] sm:$0xff] %v4605
    %4638 = vst [vmem:[%s3 + $0x88] sm:$0xff] %v4606
    %4639 = vst [vmem:[%s3 + $0x90] sm:$0xff] %v4607
    %4640 = vst [vmem:[%s3 + $0x98] sm:$0xff] %v4608
    %4641 = vst [vmem:[%s3 + $0xa0] sm:$0xff] %v4609
    %4642 = vst [vmem:[%s3 + $0xa8] sm:$0xff] %v4610
    %4643 = vst [vmem:[%s3 + $0xb0] sm:$0xff] %v4611
    %4644 = vst [vmem:[%s3 + $0xb8] sm:$0xff] %v4612
    %4645 = vst [vmem:[%s3 + $0xc0] sm:$0xff] %v4613
    %4646 = vst [vmem:[%s3 + $0xc8] sm:$0xff] %v4614
    %4647 = vst [vmem:[%s3 + $0xd0] sm:$0xff] %v4615
    %4648 = vst [vmem:[%s3 + $0xd8] sm:$0xff] %v4616
    %4649 = vst [vmem:[%s3 + $0xe0] sm:$0xff] %v4617
    %4650 = vst [vmem:[%s3 + $0xe8] sm:$0xff] %v4618
    %4651 = vst [vmem:[%s3 + $0xf0] sm:$0xff] %v4619
    %4652 = vst [vmem:[%s3 + $0xf8] sm:$0xff] %v4620
    // Predicated region
    $region18: #{autoencoder_forward.1} parent=1 // pred_check
      _
    $region19: #{autoencoder_forward.1} parent=1 // pred_check_branch
      %4654 = sbr.rel (0) target = $region21
    $region20: #{autoencoder_forward.1} parent=1 // pred_region
      _
    $region21: #{autoencoder_forward.1} parent=1 // pred_fallthru
      _
    // Predicated region
    $region22: #{autoencoder_forward.1} parent=1 // pred_check
      _
    $region23: #{autoencoder_forward.1} parent=1 // pred_check_branch
      %4656 = sbr.rel (0) target = $region25
    $region24: #{autoencoder_forward.1} parent=1 // pred_region
      _
    $region25: #{autoencoder_forward.1} parent=1 // pred_fallthru
      _
    %4657 = vsyncpa [#allocation3], 1

</llo_original>
